<compile_context>
chip_gen: v7x
topology: tpu7x:2x2x1
jax: 0.10.0
libtpu: 0.0.40
codegen_flags: <defaults>
</compile_context>

<pallas_src>
import numpy as np
import jax
import jax.numpy as jnp
from jax.experimental import pallas as pl
from jax.experimental.pallas import tpu as pltpu

L_IN = 78          # implied by Linear(2304, ...) = 128 channels * 18 timesteps
Y_DIM = 8          # y_dimension (number of classes) - synthetic deterministic choice
BATCH = 8          # samples per call (amortizes weight DMA / launch overhead)
BPB = 4            # samples per grid program (one slab per TensorCore program)
SEG0 = 80          # per-sample row stride in the stacked layout
T_OUT = 18         # timesteps surviving the backbone

# Seam safety: samples are stacked along the sublane axis with a fixed SEG0-row stride.
# Rows at the batch seams (e.g. y2 rows b*80+76..79) compute garbage from the zero pad /
# next sample, but they only ever feed other garbage rows and never reach the pooled
# rows used by the flatten.  This relies on SEG0 being a multiple of 4 (so both
# stride-2 pools keep every sample aligned to its own b*SEG0/2 and b*SEG0/4 offsets)
# and on L_IN = 78 producing exactly T_OUT = 18 surviving timesteps.
assert ((L_IN - 2) // 2 - 2) // 2 == T_OUT
assert SEG0 % 4 == 0 and SEG0 >= L_IN, "SEG0 must be pool-aligned and cover L_IN"
assert BATCH % BPB == 0


# ------------------------------ fused CNN kernel -----------------------------------
def cnn_kernel(x_ref, w1_ref, b1_ref, w2_ref, b2_ref, w3_ref, b3_ref,
               w4_ref, b4_ref, wf1_hbm, bf1_ref, wf2_ref, bf2_ref,
               wf3_ref, bf3_ref, out_ref,
               s2_ref, s4_ref, flat_ref, wf1_vmem, wf1_sem):
    f32, bf16 = jnp.float32, jnp.bfloat16

    # Kick off the dominant weight transfer (fc1, ~290 KB bf16) immediately so it
    # overlaps the entire conv backbone instead of serializing in front of it.
    wf1_cp = pltpu.make_async_copy(wf1_hbm, wf1_vmem, wf1_sem)
    wf1_cp.start()

    H0 = x_ref.shape[0]                       # BPB * SEG0 rows in this slab
    B = H0 // SEG0                            # samples in this slab (= BPB)
    HSEG = SEG0 // 2                          # per-sample row stride after pool #1

    # ---- Conv1d(1, 32, k=2): cin = 1 -> full-lane VPU FMAs (x pre-broadcast to 32) --
    xa = x_ref[0:H0 - 1, :]
    xb = x_ref[1:H0, :]
    y1 = xa * w1_ref[0:1, :] + xb * w1_ref[1:2, :] + b1_ref[...]       # (H0-1, 32) f32

    # ---- Conv1d(32, 64, k=2): taps packed along K -> one K=64 bf16 MXU matmul ----
    lhs2 = jnp.concatenate([y1[0:H0 - 2, :], y1[1:H0 - 1, :]], axis=1)  # (H0-2, 64)
    y2 = jnp.dot(lhs2.astype(bf16), w2_ref[...],
                 preferred_element_type=f32) + b2_ref[...]              # f32 accumulate

    # ---- MaxPool1d(2, 2) #1 on the whole batch-stacked slab ----
    s2_ref[...] = y2
    n1 = B * HSEG - 2
    p1 = jnp.maximum(s2_ref[pl.ds(0, n1, stride=2), :],
                     s2_ref[pl.ds(1, n1, stride=2), :])                 # (n1, 64) f32

    # ---- Conv1d(64, 64, k=2): one K=128 bf16 matmul ----
    lhs3 = jnp.concatenate([p1[0:n1 - 1, :], p1[1:n1, :]], axis=1)      # (n1-1, 128)
    y3 = jnp.dot(lhs3.astype(bf16), w3_ref[...],
                 preferred_element_type=f32) + b3_ref[...]              # (n1-1, 64)

    # ---- Conv1d(64, 128, k=2): one K=128 bf16 matmul ----
    n3 = n1 - 1
    lhs4 = jnp.concatenate([y3[0:n3 - 1, :], y3[1:n3, :]], axis=1)      # (n3-1, 128)
    y4 = jnp.dot(lhs4.astype(bf16), w4_ref[...],
                 preferred_element_type=f32) + b4_ref[...]              # (n3-1, 128)

    # ---- MaxPool1d(2, 2) #2 fused with the channel-major->time-major flatten ----
    # For each surviving timestep t, pool y4 rows {b*HSEG+2t, b*HSEG+2t+1} of every
    # sample at once and store the (B, 128) result lane-aligned at offset t*128 of the
    # flat fc1-LHS scratch.  (wf1 is pre-permuted to the matching time-major order.)
    s4_ref[...] = y4
    for t in range(T_OUT):
        a = s4_ref[pl.ds(2 * t, B, stride=HSEG), :]
        b = s4_ref[pl.ds(2 * t + 1, B, stride=HSEG), :]
        flat_ref[:, t * 128:(t + 1) * 128] = jnp.maximum(a, b)

    # ---- FC head: Linear(2304,64) -> ReLU -> Linear(64,64) -> ReLU -> Linear(64,Y) --
    wf1_cp.wait()                                     # fc1 weights now in VMEM scratch
    h1 = jnp.dot(flat_ref[...].astype(bf16), wf1_vmem[...],
                 preferred_element_type=f32) + bf1_ref[...]
    h1 = jnp.maximum(h1, 0.0)
    h2 = jnp.dot(h1.astype(bf16), wf2_ref[...],
                 preferred_element_type=f32) + bf2_ref[...]
    h2 = jnp.maximum(h2, 0.0)
    out_ref[0] = jnp.dot(h2.astype(bf16), wf3_ref[...],
                         preferred_element_type=f32) + bf3_ref[...]


# --------------------------------- full forward -----------------------------------
@jax.jit
def cnn_forward(x, kp):
    # x: (B, 1, L_IN) float32  (PyTorch NCW layout)
    B = x.shape[0]
    nblk = B // BPB
    rows = BPB * SEG0

    # Stack samples along the sublane axis (SEG0-row stride, zero-padded tail) and
    # pre-broadcast to 32 lanes so conv1 runs as plain full-lane VPU FMAs.
    xs = jnp.pad(x[:, 0, :], ((0, 0), (0, SEG0 - L_IN)))                 # (B, SEG0)
    xs = jnp.broadcast_to(xs[:, :, None], (B, SEG0, 32)).reshape(B * SEG0, 32)

    def full(shape):
        return pl.BlockSpec(shape, lambda i, _s=shape: (0,) * len(_s))

    out = pl.pallas_call(
        cnn_kernel,
        grid=(nblk,),
        out_shape=jax.ShapeDtypeStruct((nblk, BPB, Y_DIM), jnp.float32),
        in_specs=[
            pl.BlockSpec((rows, 32), lambda i: (i, 0)),       # x slab (per program)
            full((2, 32)), full((1, 32)),                     # conv1 w, b
            full((64, 64)), full((1, 64)),                    # conv2 (packed taps)
            full((128, 64)), full((1, 64)),                   # conv3
            full((128, 128)), full((1, 128)),                 # conv4
            pl.BlockSpec(memory_space=pl.ANY),                # fc1 W stays in HBM
            full((1, 64)),                                    # fc1 b
            full((64, 64)), full((1, 64)),                    # fc2
            full((64, Y_DIM)), full((1, Y_DIM)),              # fc3
        ],
        out_specs=pl.BlockSpec((1, BPB, Y_DIM), lambda i: (i, 0, 0)),
        scratch_shapes=[
            pltpu.VMEM((BPB * SEG0 - 2, 64), jnp.float32),          # y2 (pool #1 input)
            pltpu.VMEM((BPB * (SEG0 // 2) - 4, 128), jnp.float32),  # y4 (pool #2 input)
            pltpu.VMEM((BPB, T_OUT * 128), jnp.float32),            # flat fc1 LHS
            pltpu.VMEM((T_OUT * 128, 64), jnp.bfloat16),            # fc1 W landing pad
            pltpu.SemaphoreType.DMA(()),                            # fc1 DMA completion
        ],
        compiler_params=pltpu.CompilerParams(
            dimension_semantics=("parallel",)),
    )(xs, kp['w1'], kp['b1'], kp['w2p'], kp['b2'], kp['w3p'], kp['b3'],
      kp['w4p'], kp['b4'], kp['wf1'], kp['bf1'], kp['wf2'], kp['bf2'],
      kp['wf3'], kp['bf3'])
    return out.reshape(B, Y_DIM)


# --------------------------- deterministic parameters ------------------------------
def _bf16_exact(w):
    # Round through bf16 so the bf16 weights handed to the kernel are exact copies
    # of the f32 weights used by the references.
    return w.astype(jnp.bfloat16).astype(jnp.float32)


def init_params(key):
    ks = jax.random.split(key, 14)

    def nrm(k, shape, fan_in):
        return (jax.random.normal(k, shape, jnp.float32) / jnp.sqrt(fan_in)).astype(jnp.float32)

    return {
        # conv weights stored as [k, cin, cout] (conv1 has cin=1 -> [k, cout])
        'w1': nrm(ks[0], (2, 32), 2.0),                     'b1': nrm(ks[1], (1, 32), 2.0),
        'w2': _bf16_exact(nrm(ks[2], (2, 32, 64), 64.0)),   'b2': nrm(ks[3], (1, 64), 64.0),
        'w3': _bf16_exact(nrm(ks[4], (2, 64, 64), 128.0)),  'b3': nrm(ks[5], (1, 64), 128.0),
        'w4': _bf16_exact(nrm(ks[6], (2, 64, 128), 128.0)), 'b4': nrm(ks[7], (1, 128), 128.0),
        # fc weights stored as [in, out]; wf1 input index is channel-major (c*18 + t)
        'wf1': _bf16_exact(nrm(ks[8], (2304, 64), 2304.0)), 'bf1': nrm(ks[9], (1, 64), 2304.0),
        'wf2': _bf16_exact(nrm(ks[10], (64, 64), 64.0)),    'bf2': nrm(ks[11], (1, 64), 64.0),
        'wf3': _bf16_exact(nrm(ks[12], (64, Y_DIM), 64.0)), 'bf3': nrm(ks[13], (1, Y_DIM), 64.0),
    }


def prepare_kernel_params(p):
    """Host-side repacking: tap-concat conv weights (K=2*Cin), time-major wf1, bf16 storage."""
    bf16 = jnp.bfloat16
    return {
        'w1': p['w1'], 'b1': p['b1'],
        'w2p': jnp.concatenate([p['w2'][0], p['w2'][1]], axis=0).astype(bf16),   # (64, 64)
        'b2': p['b2'],
        'w3p': jnp.concatenate([p['w3'][0], p['w3'][1]], axis=0).astype(bf16),   # (128, 64)
        'b3': p['b3'],
        'w4p': jnp.concatenate([p['w4'][0], p['w4'][1]], axis=0).astype(bf16),   # (128, 128)
        'b4': p['b4'],
        # channel-major flatten order (c*18+t) -> time-major (t*128+c)
        'wf1': p['wf1'].reshape(128, T_OUT, 64).transpose(1, 0, 2)
                        .reshape(T_OUT * 128, 64).astype(bf16),
        'bf1': p['bf1'],
        'wf2': p['wf2'].astype(bf16), 'bf2': p['bf2'],
        'wf3': p['wf3'].astype(bf16), 'bf3': p['bf3'],
    }


# ------------------------------ plain-JAX references --------------------------------
def _conv_taps_f32(h, w_kc, bias):            # h: (B, L, Cin), w_kc: (2, Cin, Cout)
    hi = jax.lax.Precision.HIGHEST
    return (jnp.einsum('blc,cd->bld', h[:, :-1, :], w_kc[0], precision=hi)
            + jnp.einsum('blc,cd->bld', h[:, 1:, :], w_kc[1], precision=hi) + bias)


def _conv_taps_bf16(h, w_kc, bias):           # bf16 operands, f32 accumulation (MXU)
    hb = h.astype(jnp.bfloat16)
    wb = w_kc.astype(jnp.bfloat16)
    return (jnp.einsum('blc,cd->bld', hb[:, :-1, :], wb[0], preferred_element_type=jnp.float32)
            + jnp.einsum('blc,cd->bld', hb[:, 1:, :], wb[1], preferred_element_type=jnp.float32)
            + bias)


def _pool2(h):                                # MaxPool1d(2, 2), even length
    return jnp.maximum(h[:, 0::2, :], h[:, 1::2, :])


def ref_forward(x, p, mxu_dtype=jnp.float32):
    """Reference.  mxu_dtype=bfloat16 mirrors the kernel's bf16-in/f32-acc MXU math."""
    exact = (mxu_dtype == jnp.float32)
    conv = _conv_taps_f32 if exact else _conv_taps_bf16

    def fc(a, w, b):
        if exact:
            return jnp.dot(a, w, precision=jax.lax.Precision.HIGHEST) + b
        return jnp.dot(a.astype(jnp.bfloat16), w.astype(jnp.bfloat16),
                       preferred_element_type=jnp.float32) + b

    B = x.shape[0]
    h = jnp.transpose(x, (0, 2, 1))                          # (B, 78, 1)
    h = _conv_taps_f32(h, p['w1'][:, None, :], p['b1'])      # conv1 is f32 VPU in kernel
    h = conv(h, p['w2'], p['b2'])                            # (B, 76, 64)
    h = _pool2(h)                                            # (B, 38, 64)
    h = conv(h, p['w3'], p['b3'])                            # (B, 37, 64)
    h = conv(h, p['w4'], p['b4'])                            # (B, 36, 128)
    h = _pool2(h)                                            # (B, 18, 128)
    flat = jnp.transpose(h, (0, 2, 1)).reshape(B, 2304)      # PyTorch channel-major flatten
    h1 = jnp.maximum(fc(flat, p['wf1'], p['bf1']), 0.0)
    h2 = jnp.maximum(fc(h1, p['wf2'], p['bf2']), 0.0)
    return fc(h2, p['wf3'], p['bf3'])


if __name__ == "__main__":
    key = jax.random.PRNGKey(0)
    kx, kp_key = jax.random.split(key)
    x = jax.random.normal(kx, (BATCH, 1, L_IN), dtype=jnp.float32)   # PyTorch NCW input
    params = init_params(kp_key)
    kparams = prepare_kernel_params(params)

    logits = jax.block_until_ready(cnn_forward(x, kparams))
    assert logits.shape == (BATCH, Y_DIM)

    # Tight check vs a reference that mirrors the kernel's mixed precision exactly.
    ref_mixed = ref_forward(x, params, mxu_dtype=jnp.bfloat16)
    np.testing.assert_allclose(np.asarray(logits), np.asarray(ref_mixed),
                               rtol=1e-2, atol=1e-2)
    # Looser sanity check vs the pure-f32 PyTorch-equivalent math.
    ref_f32 = ref_forward(x, params, mxu_dtype=jnp.float32)
    np.testing.assert_allclose(np.asarray(logits), np.asarray(ref_f32),
                               rtol=5e-2, atol=5e-2)

    print("KERNEL_OK")
</pallas_src>

<mosaic_0001>
module attributes {stable_mosaic.version = 11 : i64} {
  func.func @cnn_kernel(%arg0: i32, %arg1: memref<320x32xf32, #tpu.memory_space<vmem>>, %arg2: memref<2x32xf32, #tpu.memory_space<vmem>>, %arg3: memref<1x32xf32, #tpu.memory_space<vmem>>, %arg4: memref<64x64xbf16, #tpu.memory_space<vmem>>, %arg5: memref<1x64xf32, #tpu.memory_space<vmem>>, %arg6: memref<128x64xbf16, #tpu.memory_space<vmem>>, %arg7: memref<1x64xf32, #tpu.memory_space<vmem>>, %arg8: memref<128x128xbf16, #tpu.memory_space<vmem>>, %arg9: memref<1x128xf32, #tpu.memory_space<vmem>>, %arg10: memref<2304x64xbf16, #tpu.memory_space<any>>, %arg11: memref<1x64xf32, #tpu.memory_space<vmem>>, %arg12: memref<64x64xbf16, #tpu.memory_space<vmem>>, %arg13: memref<1x64xf32, #tpu.memory_space<vmem>>, %arg14: memref<64x8xbf16, #tpu.memory_space<vmem>>, %arg15: memref<1x8xf32, #tpu.memory_space<vmem>>, %arg16: memref<1x4x8xf32, #tpu.memory_space<vmem>>, %arg17: memref<318x64xf32, #tpu.memory_space<vmem>>, %arg18: memref<156x128xf32, #tpu.memory_space<vmem>>, %arg19: memref<4x2304xf32, #tpu.memory_space<vmem>>, %arg20: memref<2304x64xbf16, #tpu.memory_space<vmem>>, %arg21: memref<!tpu.dma_semaphore, #tpu.memory_space<semaphore_mem>>) attributes {dimension_semantics = [#tpu.dimension_semantics<parallel>], iteration_bounds = array<i64: 2>, scalar_prefetch = 0 : i64, scratch_operands = 5 : i64, tpu.core_type = #tpu.core_type<tc>, window_params = [{transform_indices = @transform_0, window_bounds = array<i64: 320, 32>}, {pipeline_mode = #tpu.pipeline_mode<synchronous>, transform_indices = @transform_1, window_bounds = array<i64: 2, 32>}, {pipeline_mode = #tpu.pipeline_mode<synchronous>, transform_indices = @transform_2, window_bounds = array<i64: 1, 32>}, {pipeline_mode = #tpu.pipeline_mode<synchronous>, transform_indices = @transform_3, window_bounds = array<i64: 64, 64>}, {pipeline_mode = #tpu.pipeline_mode<synchronous>, transform_indices = @transform_4, window_bounds = array<i64: 1, 64>}, {pipeline_mode = #tpu.pipeline_mode<synchronous>, transform_indices = @transform_5, window_bounds = array<i64: 128, 64>}, {pipeline_mode = #tpu.pipeline_mode<synchronous>, transform_indices = @transform_6, window_bounds = array<i64: 1, 64>}, {pipeline_mode = #tpu.pipeline_mode<synchronous>, transform_indices = @transform_7, window_bounds = array<i64: 128, 128>}, {pipeline_mode = #tpu.pipeline_mode<synchronous>, transform_indices = @transform_8, window_bounds = array<i64: 1, 128>}, {}, {pipeline_mode = #tpu.pipeline_mode<synchronous>, transform_indices = @transform_10, window_bounds = array<i64: 1, 64>}, {pipeline_mode = #tpu.pipeline_mode<synchronous>, transform_indices = @transform_11, window_bounds = array<i64: 64, 64>}, {pipeline_mode = #tpu.pipeline_mode<synchronous>, transform_indices = @transform_12, window_bounds = array<i64: 1, 64>}, {pipeline_mode = #tpu.pipeline_mode<synchronous>, transform_indices = @transform_13, window_bounds = array<i64: 64, 8>}, {pipeline_mode = #tpu.pipeline_mode<synchronous>, transform_indices = @transform_14, window_bounds = array<i64: 1, 8>}, {transform_indices = @transform_15, window_bounds = array<i64: 1, 4, 8>}]} {
    tpu.enqueue_dma source(%arg10 : memref<2304x64xbf16, #tpu.memory_space<any>>) target(%arg20 : memref<2304x64xbf16, #tpu.memory_space<vmem>>) target_semaphore(%arg21 : memref<!tpu.dma_semaphore, #tpu.memory_space<semaphore_mem>>)
    %c0 = arith.constant 0 : index
    %c0_0 = arith.constant 0 : index
    %0 = vector.load %arg1[%c0, %c0_0] : memref<320x32xf32, #tpu.memory_space<vmem>>, vector<319x32xf32>
    %c1 = arith.constant 1 : index
    %c0_1 = arith.constant 0 : index
    %1 = vector.load %arg1[%c1, %c0_1] : memref<320x32xf32, #tpu.memory_space<vmem>>, vector<319x32xf32>
    %c0_2 = arith.constant 0 : index
    %c0_3 = arith.constant 0 : index
    %2 = vector.load %arg2[%c0_2, %c0_3] : memref<2x32xf32, #tpu.memory_space<vmem>>, vector<1x32xf32>
    %3 = vector.broadcast %2 : vector<1x32xf32> to vector<319x32xf32>
    %4 = arith.mulf %0, %3 : vector<319x32xf32>
    %c1_4 = arith.constant 1 : index
    %c0_5 = arith.constant 0 : index
    %5 = vector.load %arg2[%c1_4, %c0_5] : memref<2x32xf32, #tpu.memory_space<vmem>>, vector<1x32xf32>
    %6 = vector.broadcast %5 : vector<1x32xf32> to vector<319x32xf32>
    %7 = arith.mulf %1, %6 : vector<319x32xf32>
    %8 = arith.addf %4, %7 : vector<319x32xf32>
    %c0_6 = arith.constant 0 : index
    %c0_7 = arith.constant 0 : index
    %9 = vector.load %arg3[%c0_6, %c0_7] : memref<1x32xf32, #tpu.memory_space<vmem>>, vector<1x32xf32>
    %10 = vector.broadcast %9 : vector<1x32xf32> to vector<319x32xf32>
    %11 = arith.addf %8, %10 : vector<319x32xf32>
    %12 = vector.extract_strided_slice %11 {offsets = [0, 0], sizes = [318, 32], strides = [1, 1]} : vector<319x32xf32> to vector<318x32xf32>
    %13 = vector.extract_strided_slice %11 {offsets = [1, 0], sizes = [318, 32], strides = [1, 1]} : vector<319x32xf32> to vector<318x32xf32>
    %14 = tpu.concatenate %12, %13 in 1 : vector<318x32xf32>, vector<318x32xf32> -> vector<318x64xf32>
    %15 = arith.truncf %14 : vector<318x64xf32> to vector<318x64xbf16>
    %c0_8 = arith.constant 0 : index
    %c0_9 = arith.constant 0 : index
    %16 = vector.load %arg4[%c0_8, %c0_9] : memref<64x64xbf16, #tpu.memory_space<vmem>>, vector<64x64xbf16>
    %cst = arith.constant dense<0.000000e+00> : vector<318x64xf32>
    %17 = tpu.matmul %15, %16, %cst {dimension_numbers = #tpu.dot_dimension_numbers<[1], [0], [0], [1], [0, 0, 1, 1], [], []>} : vector<318x64xbf16>, vector<64x64xbf16>, vector<318x64xf32> -> vector<318x64xf32>
    %c0_10 = arith.constant 0 : index
    %c0_11 = arith.constant 0 : index
    %18 = vector.load %arg5[%c0_10, %c0_11] : memref<1x64xf32, #tpu.memory_space<vmem>>, vector<1x64xf32>
    %19 = vector.broadcast %18 : vector<1x64xf32> to vector<318x64xf32>
    %20 = arith.addf %17, %19 : vector<318x64xf32>
    %c0_12 = arith.constant 0 : index
    %c0_13 = arith.constant 0 : index
    %21 = vector.load %arg17[%c0_12, %c0_13] : memref<318x64xf32, #tpu.memory_space<vmem>>, vector<318x64xf32>
    tpu.vector_store %arg17[%c0_12, %c0_13], %20 {strides = array<i32>} : memref<318x64xf32, #tpu.memory_space<vmem>>, vector<318x64xf32>,
    %c0_14 = arith.constant 0 : index
    %c0_15 = arith.constant 0 : index
    %22 = tpu.strided_load %arg17[%c0_14, %c0_15] {strides = array<i32: 2, 1>} : memref<318x64xf32, #tpu.memory_space<vmem>>, vector<158x64xf32>
    %c1_16 = arith.constant 1 : index
    %c0_17 = arith.constant 0 : index
    %23 = tpu.strided_load %arg17[%c1_16, %c0_17] {strides = array<i32: 2, 1>} : memref<318x64xf32, #tpu.memory_space<vmem>>, vector<158x64xf32>
    %24 = arith.maximumf %22, %23 : vector<158x64xf32>
    %25 = vector.extract_strided_slice %24 {offsets = [0, 0], sizes = [157, 64], strides = [1, 1]} : vector<158x64xf32> to vector<157x64xf32>
    %26 = vector.extract_strided_slice %24 {offsets = [1, 0], sizes = [157, 64], strides = [1, 1]} : vector<158x64xf32> to vector<157x64xf32>
    %27 = tpu.concatenate %25, %26 in 1 : vector<157x64xf32>, vector<157x64xf32> -> vector<157x128xf32>
    %28 = arith.truncf %27 : vector<157x128xf32> to vector<157x128xbf16>
    %c0_18 = arith.constant 0 : index
    %c0_19 = arith.constant 0 : index
    %29 = vector.load %arg6[%c0_18, %c0_19] : memref<128x64xbf16, #tpu.memory_space<vmem>>, vector<128x64xbf16>
    %cst_20 = arith.constant dense<0.000000e+00> : vector<157x64xf32>
    %30 = tpu.matmul %28, %29, %cst_20 {dimension_numbers = #tpu.dot_dimension_numbers<[1], [0], [0], [1], [0, 0, 1, 1], [], []>} : vector<157x128xbf16>, vector<128x64xbf16>, vector<157x64xf32> -> vector<157x64xf32>
    %c0_21 = arith.constant 0 : index
    %c0_22 = arith.constant 0 : index
    %31 = vector.load %arg7[%c0_21, %c0_22] : memref<1x64xf32, #tpu.memory_space<vmem>>, vector<1x64xf32>
    %32 = vector.broadcast %31 : vector<1x64xf32> to vector<157x64xf32>
    %33 = arith.addf %30, %32 : vector<157x64xf32>
    %34 = vector.extract_strided_slice %33 {offsets = [0, 0], sizes = [156, 64], strides = [1, 1]} : vector<157x64xf32> to vector<156x64xf32>
    %35 = vector.extract_strided_slice %33 {offsets = [1, 0], sizes = [156, 64], strides = [1, 1]} : vector<157x64xf32> to vector<156x64xf32>
    %36 = tpu.concatenate %34, %35 in 1 : vector<156x64xf32>, vector<156x64xf32> -> vector<156x128xf32>
    %37 = arith.truncf %36 : vector<156x128xf32> to vector<156x128xbf16>
    %c0_23 = arith.constant 0 : index
    %c0_24 = arith.constant 0 : index
    %38 = vector.load %arg8[%c0_23, %c0_24] : memref<128x128xbf16, #tpu.memory_space<vmem>>, vector<128x128xbf16>
    %cst_25 = arith.constant dense<0.000000e+00> : vector<156x128xf32>
    %39 = tpu.matmul %37, %38, %cst_25 {dimension_numbers = #tpu.dot_dimension_numbers<[1], [0], [0], [1], [0, 0, 1, 1], [], []>} : vector<156x128xbf16>, vector<128x128xbf16>, vector<156x128xf32> -> vector<156x128xf32>
    %c0_26 = arith.constant 0 : index
    %c0_27 = arith.constant 0 : index
    %40 = vector.load %arg9[%c0_26, %c0_27] : memref<1x128xf32, #tpu.memory_space<vmem>>, vector<1x128xf32>
    %41 = vector.broadcast %40 : vector<1x128xf32> to vector<156x128xf32>
    %42 = arith.addf %39, %41 : vector<156x128xf32>
    %c0_28 = arith.constant 0 : index
    %c0_29 = arith.constant 0 : index
    %43 = vector.load %arg18[%c0_28, %c0_29] : memref<156x128xf32, #tpu.memory_space<vmem>>, vector<156x128xf32>
    tpu.vector_store %arg18[%c0_28, %c0_29], %42 {strides = array<i32>} : memref<156x128xf32, #tpu.memory_space<vmem>>, vector<156x128xf32>,
    %c0_30 = arith.constant 0 : index
    %c0_31 = arith.constant 0 : index
    %44 = tpu.strided_load %arg18[%c0_30, %c0_31] {strides = array<i32: 40, 1>} : memref<156x128xf32, #tpu.memory_space<vmem>>, vector<4x128xf32>
    %c1_32 = arith.constant 1 : index
    %c0_33 = arith.constant 0 : index
    %45 = tpu.strided_load %arg18[%c1_32, %c0_33] {strides = array<i32: 40, 1>} : memref<156x128xf32, #tpu.memory_space<vmem>>, vector<4x128xf32>
    %46 = arith.maximumf %44, %45 : vector<4x128xf32>
    %c0_34 = arith.constant 0 : index
    %c0_35 = arith.constant 0 : index
    %47 = vector.load %arg19[%c0_34, %c0_35] : memref<4x2304xf32, #tpu.memory_space<vmem>>, vector<4x128xf32>
    tpu.vector_store %arg19[%c0_34, %c0_35], %46 {strides = array<i32>} : memref<4x2304xf32, #tpu.memory_space<vmem>>, vector<4x128xf32>,
    %c2 = arith.constant 2 : index
    %c0_36 = arith.constant 0 : index
    %48 = tpu.strided_load %arg18[%c2, %c0_36] {strides = array<i32: 40, 1>} : memref<156x128xf32, #tpu.memory_space<vmem>>, vector<4x128xf32>
    %c3 = arith.constant 3 : index
    %c0_37 = arith.constant 0 : index
    %49 = tpu.strided_load %arg18[%c3, %c0_37] {strides = array<i32: 40, 1>} : memref<156x128xf32, #tpu.memory_space<vmem>>, vector<4x128xf32>
    %50 = arith.maximumf %48, %49 : vector<4x128xf32>
    %c0_38 = arith.constant 0 : index
    %c128 = arith.constant 128 : index
    %51 = vector.load %arg19[%c0_38, %c128] : memref<4x2304xf32, #tpu.memory_space<vmem>>, vector<4x128xf32>
    tpu.vector_store %arg19[%c0_38, %c128], %50 {strides = array<i32>} : memref<4x2304xf32, #tpu.memory_space<vmem>>, vector<4x128xf32>,
    %c4 = arith.constant 4 : index
    %c0_39 = arith.constant 0 : index
    %52 = tpu.strided_load %arg18[%c4, %c0_39] {strides = array<i32: 40, 1>} : memref<156x128xf32, #tpu.memory_space<vmem>>, vector<4x128xf32>
    %c5 = arith.constant 5 : index
    %c0_40 = arith.constant 0 : index
    %53 = tpu.strided_load %arg18[%c5, %c0_40] {strides = array<i32: 40, 1>} : memref<156x128xf32, #tpu.memory_space<vmem>>, vector<4x128xf32>
    %54 = arith.maximumf %52, %53 : vector<4x128xf32>
    %c0_41 = arith.constant 0 : index
    %c256 = arith.constant 256 : index
    %55 = vector.load %arg19[%c0_41, %c256] : memref<4x2304xf32, #tpu.memory_space<vmem>>, vector<4x128xf32>
    tpu.vector_store %arg19[%c0_41, %c256], %54 {strides = array<i32>} : memref<4x2304xf32, #tpu.memory_space<vmem>>, vector<4x128xf32>,
    %c6 = arith.constant 6 : index
    %c0_42 = arith.constant 0 : index
    %56 = tpu.strided_load %arg18[%c6, %c0_42] {strides = array<i32: 40, 1>} : memref<156x128xf32, #tpu.memory_space<vmem>>, vector<4x128xf32>
    %c7 = arith.constant 7 : index
    %c0_43 = arith.constant 0 : index
    %57 = tpu.strided_load %arg18[%c7, %c0_43] {strides = array<i32: 40, 1>} : memref<156x128xf32, #tpu.memory_space<vmem>>, vector<4x128xf32>
    %58 = arith.maximumf %56, %57 : vector<4x128xf32>
    %c0_44 = arith.constant 0 : index
    %c384 = arith.constant 384 : index
    %59 = vector.load %arg19[%c0_44, %c384] : memref<4x2304xf32, #tpu.memory_space<vmem>>, vector<4x128xf32>
    tpu.vector_store %arg19[%c0_44, %c384], %58 {strides = array<i32>} : memref<4x2304xf32, #tpu.memory_space<vmem>>, vector<4x128xf32>,
    %c8 = arith.constant 8 : index
    %c0_45 = arith.constant 0 : index
    %60 = tpu.strided_load %arg18[%c8, %c0_45] {strides = array<i32: 40, 1>} : memref<156x128xf32, #tpu.memory_space<vmem>>, vector<4x128xf32>
    %c9 = arith.constant 9 : index
    %c0_46 = arith.constant 0 : index
    %61 = tpu.strided_load %arg18[%c9, %c0_46] {strides = array<i32: 40, 1>} : memref<156x128xf32, #tpu.memory_space<vmem>>, vector<4x128xf32>
    %62 = arith.maximumf %60, %61 : vector<4x128xf32>
    %c0_47 = arith.constant 0 : index
    %c512 = arith.constant 512 : index
    %63 = vector.load %arg19[%c0_47, %c512] : memref<4x2304xf32, #tpu.memory_space<vmem>>, vector<4x128xf32>
    tpu.vector_store %arg19[%c0_47, %c512], %62 {strides = array<i32>} : memref<4x2304xf32, #tpu.memory_space<vmem>>, vector<4x128xf32>,
    %c10 = arith.constant 10 : index
    %c0_48 = arith.constant 0 : index
    %64 = tpu.strided_load %arg18[%c10, %c0_48] {strides = array<i32: 40, 1>} : memref<156x128xf32, #tpu.memory_space<vmem>>, vector<4x128xf32>
    %c11 = arith.constant 11 : index
    %c0_49 = arith.constant 0 : index
    %65 = tpu.strided_load %arg18[%c11, %c0_49] {strides = array<i32: 40, 1>} : memref<156x128xf32, #tpu.memory_space<vmem>>, vector<4x128xf32>
    %66 = arith.maximumf %64, %65 : vector<4x128xf32>
    %c0_50 = arith.constant 0 : index
    %c640 = arith.constant 640 : index
    %67 = vector.load %arg19[%c0_50, %c640] : memref<4x2304xf32, #tpu.memory_space<vmem>>, vector<4x128xf32>
    tpu.vector_store %arg19[%c0_50, %c640], %66 {strides = array<i32>} : memref<4x2304xf32, #tpu.memory_space<vmem>>, vector<4x128xf32>,
    %c12 = arith.constant 12 : index
    %c0_51 = arith.constant 0 : index
    %68 = tpu.strided_load %arg18[%c12, %c0_51] {strides = array<i32: 40, 1>} : memref<156x128xf32, #tpu.memory_space<vmem>>, vector<4x128xf32>
    %c13 = arith.constant 13 : index
    %c0_52 = arith.constant 0 : index
    %69 = tpu.strided_load %arg18[%c13, %c0_52] {strides = array<i32: 40, 1>} : memref<156x128xf32, #tpu.memory_space<vmem>>, vector<4x128xf32>
    %70 = arith.maximumf %68, %69 : vector<4x128xf32>
    %c0_53 = arith.constant 0 : index
    %c768 = arith.constant 768 : index
    %71 = vector.load %arg19[%c0_53, %c768] : memref<4x2304xf32, #tpu.memory_space<vmem>>, vector<4x128xf32>
    tpu.vector_store %arg19[%c0_53, %c768], %70 {strides = array<i32>} : memref<4x2304xf32, #tpu.memory_space<vmem>>, vector<4x128xf32>,
    %c14 = arith.constant 14 : index
    %c0_54 = arith.constant 0 : index
    %72 = tpu.strided_load %arg18[%c14, %c0_54] {strides = array<i32: 40, 1>} : memref<156x128xf32, #tpu.memory_space<vmem>>, vector<4x128xf32>
    %c15 = arith.constant 15 : index
    %c0_55 = arith.constant 0 : index
    %73 = tpu.strided_load %arg18[%c15, %c0_55] {strides = array<i32: 40, 1>} : memref<156x128xf32, #tpu.memory_space<vmem>>, vector<4x128xf32>
    %74 = arith.maximumf %72, %73 : vector<4x128xf32>
    %c0_56 = arith.constant 0 : index
    %c896 = arith.constant 896 : index
    %75 = vector.load %arg19[%c0_56, %c896] : memref<4x2304xf32, #tpu.memory_space<vmem>>, vector<4x128xf32>
    tpu.vector_store %arg19[%c0_56, %c896], %74 {strides = array<i32>} : memref<4x2304xf32, #tpu.memory_space<vmem>>, vector<4x128xf32>,
    %c16 = arith.constant 16 : index
    %c0_57 = arith.constant 0 : index
    %76 = tpu.strided_load %arg18[%c16, %c0_57] {strides = array<i32: 40, 1>} : memref<156x128xf32, #tpu.memory_space<vmem>>, vector<4x128xf32>
    %c17 = arith.constant 17 : index
    %c0_58 = arith.constant 0 : index
    %77 = tpu.strided_load %arg18[%c17, %c0_58] {strides = array<i32: 40, 1>} : memref<156x128xf32, #tpu.memory_space<vmem>>, vector<4x128xf32>
    %78 = arith.maximumf %76, %77 : vector<4x128xf32>
    %c0_59 = arith.constant 0 : index
    %c1024 = arith.constant 1024 : index
    %79 = vector.load %arg19[%c0_59, %c1024] : memref<4x2304xf32, #tpu.memory_space<vmem>>, vector<4x128xf32>
    tpu.vector_store %arg19[%c0_59, %c1024], %78 {strides = array<i32>} : memref<4x2304xf32, #tpu.memory_space<vmem>>, vector<4x128xf32>,
    %c18 = arith.constant 18 : index
    %c0_60 = arith.constant 0 : index
    %80 = tpu.strided_load %arg18[%c18, %c0_60] {strides = array<i32: 40, 1>} : memref<156x128xf32, #tpu.memory_space<vmem>>, vector<4x128xf32>
    %c19 = arith.constant 19 : index
    %c0_61 = arith.constant 0 : index
    %81 = tpu.strided_load %arg18[%c19, %c0_61] {strides = array<i32: 40, 1>} : memref<156x128xf32, #tpu.memory_space<vmem>>, vector<4x128xf32>
    %82 = arith.maximumf %80, %81 : vector<4x128xf32>
    %c0_62 = arith.constant 0 : index
    %c1152 = arith.constant 1152 : index
    %83 = vector.load %arg19[%c0_62, %c1152] : memref<4x2304xf32, #tpu.memory_space<vmem>>, vector<4x128xf32>
    tpu.vector_store %arg19[%c0_62, %c1152], %82 {strides = array<i32>} : memref<4x2304xf32, #tpu.memory_space<vmem>>, vector<4x128xf32>,
    %c20 = arith.constant 20 : index
    %c0_63 = arith.constant 0 : index
    %84 = tpu.strided_load %arg18[%c20, %c0_63] {strides = array<i32: 40, 1>} : memref<156x128xf32, #tpu.memory_space<vmem>>, vector<4x128xf32>
    %c21 = arith.constant 21 : index
    %c0_64 = arith.constant 0 : index
    %85 = tpu.strided_load %arg18[%c21, %c0_64] {strides = array<i32: 40, 1>} : memref<156x128xf32, #tpu.memory_space<vmem>>, vector<4x128xf32>
    %86 = arith.maximumf %84, %85 : vector<4x128xf32>
    %c0_65 = arith.constant 0 : index
    %c1280 = arith.constant 1280 : index
    %87 = vector.load %arg19[%c0_65, %c1280] : memref<4x2304xf32, #tpu.memory_space<vmem>>, vector<4x128xf32>
    tpu.vector_store %arg19[%c0_65, %c1280], %86 {strides = array<i32>} : memref<4x2304xf32, #tpu.memory_space<vmem>>, vector<4x128xf32>,
    %c22 = arith.constant 22 : index
    %c0_66 = arith.constant 0 : index
    %88 = tpu.strided_load %arg18[%c22, %c0_66] {strides = array<i32: 40, 1>} : memref<156x128xf32, #tpu.memory_space<vmem>>, vector<4x128xf32>
    %c23 = arith.constant 23 : index
    %c0_67 = arith.constant 0 : index
    %89 = tpu.strided_load %arg18[%c23, %c0_67] {strides = array<i32: 40, 1>} : memref<156x128xf32, #tpu.memory_space<vmem>>, vector<4x128xf32>
    %90 = arith.maximumf %88, %89 : vector<4x128xf32>
    %c0_68 = arith.constant 0 : index
    %c1408 = arith.constant 1408 : index
    %91 = vector.load %arg19[%c0_68, %c1408] : memref<4x2304xf32, #tpu.memory_space<vmem>>, vector<4x128xf32>
    tpu.vector_store %arg19[%c0_68, %c1408], %90 {strides = array<i32>} : memref<4x2304xf32, #tpu.memory_space<vmem>>, vector<4x128xf32>,
    %c24 = arith.constant 24 : index
    %c0_69 = arith.constant 0 : index
    %92 = tpu.strided_load %arg18[%c24, %c0_69] {strides = array<i32: 40, 1>} : memref<156x128xf32, #tpu.memory_space<vmem>>, vector<4x128xf32>
    %c25 = arith.constant 25 : index
    %c0_70 = arith.constant 0 : index
    %93 = tpu.strided_load %arg18[%c25, %c0_70] {strides = array<i32: 40, 1>} : memref<156x128xf32, #tpu.memory_space<vmem>>, vector<4x128xf32>
    %94 = arith.maximumf %92, %93 : vector<4x128xf32>
    %c0_71 = arith.constant 0 : index
    %c1536 = arith.constant 1536 : index
    %95 = vector.load %arg19[%c0_71, %c1536] : memref<4x2304xf32, #tpu.memory_space<vmem>>, vector<4x128xf32>
    tpu.vector_store %arg19[%c0_71, %c1536], %94 {strides = array<i32>} : memref<4x2304xf32, #tpu.memory_space<vmem>>, vector<4x128xf32>,
    %c26 = arith.constant 26 : index
    %c0_72 = arith.constant 0 : index
    %96 = tpu.strided_load %arg18[%c26, %c0_72] {strides = array<i32: 40, 1>} : memref<156x128xf32, #tpu.memory_space<vmem>>, vector<4x128xf32>
    %c27 = arith.constant 27 : index
    %c0_73 = arith.constant 0 : index
    %97 = tpu.strided_load %arg18[%c27, %c0_73] {strides = array<i32: 40, 1>} : memref<156x128xf32, #tpu.memory_space<vmem>>, vector<4x128xf32>
    %98 = arith.maximumf %96, %97 : vector<4x128xf32>
    %c0_74 = arith.constant 0 : index
    %c1664 = arith.constant 1664 : index
    %99 = vector.load %arg19[%c0_74, %c1664] : memref<4x2304xf32, #tpu.memory_space<vmem>>, vector<4x128xf32>
    tpu.vector_store %arg19[%c0_74, %c1664], %98 {strides = array<i32>} : memref<4x2304xf32, #tpu.memory_space<vmem>>, vector<4x128xf32>,
    %c28 = arith.constant 28 : index
    %c0_75 = arith.constant 0 : index
    %100 = tpu.strided_load %arg18[%c28, %c0_75] {strides = array<i32: 40, 1>} : memref<156x128xf32, #tpu.memory_space<vmem>>, vector<4x128xf32>
    %c29 = arith.constant 29 : index
    %c0_76 = arith.constant 0 : index
    %101 = tpu.strided_load %arg18[%c29, %c0_76] {strides = array<i32: 40, 1>} : memref<156x128xf32, #tpu.memory_space<vmem>>, vector<4x128xf32>
    %102 = arith.maximumf %100, %101 : vector<4x128xf32>
    %c0_77 = arith.constant 0 : index
    %c1792 = arith.constant 1792 : index
    %103 = vector.load %arg19[%c0_77, %c1792] : memref<4x2304xf32, #tpu.memory_space<vmem>>, vector<4x128xf32>
    tpu.vector_store %arg19[%c0_77, %c1792], %102 {strides = array<i32>} : memref<4x2304xf32, #tpu.memory_space<vmem>>, vector<4x128xf32>,
    %c30 = arith.constant 30 : index
    %c0_78 = arith.constant 0 : index
    %104 = tpu.strided_load %arg18[%c30, %c0_78] {strides = array<i32: 40, 1>} : memref<156x128xf32, #tpu.memory_space<vmem>>, vector<4x128xf32>
    %c31 = arith.constant 31 : index
    %c0_79 = arith.constant 0 : index
    %105 = tpu.strided_load %arg18[%c31, %c0_79] {strides = array<i32: 40, 1>} : memref<156x128xf32, #tpu.memory_space<vmem>>, vector<4x128xf32>
    %106 = arith.maximumf %104, %105 : vector<4x128xf32>
    %c0_80 = arith.constant 0 : index
    %c1920 = arith.constant 1920 : index
    %107 = vector.load %arg19[%c0_80, %c1920] : memref<4x2304xf32, #tpu.memory_space<vmem>>, vector<4x128xf32>
    tpu.vector_store %arg19[%c0_80, %c1920], %106 {strides = array<i32>} : memref<4x2304xf32, #tpu.memory_space<vmem>>, vector<4x128xf32>,
    %c32 = arith.constant 32 : index
    %c0_81 = arith.constant 0 : index
    %108 = tpu.strided_load %arg18[%c32, %c0_81] {strides = array<i32: 40, 1>} : memref<156x128xf32, #tpu.memory_space<vmem>>, vector<4x128xf32>
    %c33 = arith.constant 33 : index
    %c0_82 = arith.constant 0 : index
    %109 = tpu.strided_load %arg18[%c33, %c0_82] {strides = array<i32: 40, 1>} : memref<156x128xf32, #tpu.memory_space<vmem>>, vector<4x128xf32>
    %110 = arith.maximumf %108, %109 : vector<4x128xf32>
    %c0_83 = arith.constant 0 : index
    %c2048 = arith.constant 2048 : index
    %111 = vector.load %arg19[%c0_83, %c2048] : memref<4x2304xf32, #tpu.memory_space<vmem>>, vector<4x128xf32>
    tpu.vector_store %arg19[%c0_83, %c2048], %110 {strides = array<i32>} : memref<4x2304xf32, #tpu.memory_space<vmem>>, vector<4x128xf32>,
    %c34 = arith.constant 34 : index
    %c0_84 = arith.constant 0 : index
    %112 = tpu.strided_load %arg18[%c34, %c0_84] {strides = array<i32: 40, 1>} : memref<156x128xf32, #tpu.memory_space<vmem>>, vector<4x128xf32>
    %c35 = arith.constant 35 : index
    %c0_85 = arith.constant 0 : index
    %113 = tpu.strided_load %arg18[%c35, %c0_85] {strides = array<i32: 40, 1>} : memref<156x128xf32, #tpu.memory_space<vmem>>, vector<4x128xf32>
    %114 = arith.maximumf %112, %113 : vector<4x128xf32>
    %c0_86 = arith.constant 0 : index
    %c2176 = arith.constant 2176 : index
    %115 = vector.load %arg19[%c0_86, %c2176] : memref<4x2304xf32, #tpu.memory_space<vmem>>, vector<4x128xf32>
    tpu.vector_store %arg19[%c0_86, %c2176], %114 {strides = array<i32>} : memref<4x2304xf32, #tpu.memory_space<vmem>>, vector<4x128xf32>,
    tpu.wait_dma2 semaphore(%arg21 : memref<!tpu.dma_semaphore, #tpu.memory_space<semaphore_mem>>) src(%arg10 : memref<2304x64xbf16, #tpu.memory_space<any>>) dst(%arg20 : memref<2304x64xbf16, #tpu.memory_space<vmem>>)
    %c0_87 = arith.constant 0 : index
    %c0_88 = arith.constant 0 : index
    %116 = vector.load %arg19[%c0_87, %c0_88] : memref<4x2304xf32, #tpu.memory_space<vmem>>, vector<4x2304xf32>
    %117 = arith.truncf %116 : vector<4x2304xf32> to vector<4x2304xbf16>
    %c0_89 = arith.constant 0 : index
    %c0_90 = arith.constant 0 : index
    %118 = vector.load %arg20[%c0_89, %c0_90] : memref<2304x64xbf16, #tpu.memory_space<vmem>>, vector<2304x64xbf16>
    %cst_91 = arith.constant dense<0.000000e+00> : vector<4x64xf32>
    %119 = tpu.matmul %117, %118, %cst_91 {dimension_numbers = #tpu.dot_dimension_numbers<[1], [0], [0], [1], [0, 0, 1, 1], [], []>} : vector<4x2304xbf16>, vector<2304x64xbf16>, vector<4x64xf32> -> vector<4x64xf32>
    %c0_92 = arith.constant 0 : index
    %c0_93 = arith.constant 0 : index
    %120 = vector.load %arg11[%c0_92, %c0_93] : memref<1x64xf32, #tpu.memory_space<vmem>>, vector<1x64xf32>
    %121 = vector.broadcast %120 : vector<1x64xf32> to vector<4x64xf32>
    %122 = arith.addf %119, %121 : vector<4x64xf32>
    %cst_94 = arith.constant 0.000000e+00 : f32
    %123 = vector.broadcast %cst_94 : f32 to vector<4x64xf32>
    %124 = arith.maximumf %122, %123 : vector<4x64xf32>
    %125 = arith.truncf %124 : vector<4x64xf32> to vector<4x64xbf16>
    %c0_95 = arith.constant 0 : index
    %c0_96 = arith.constant 0 : index
    %126 = vector.load %arg12[%c0_95, %c0_96] : memref<64x64xbf16, #tpu.memory_space<vmem>>, vector<64x64xbf16>
    %cst_97 = arith.constant dense<0.000000e+00> : vector<4x64xf32>
    %127 = tpu.matmul %125, %126, %cst_97 {dimension_numbers = #tpu.dot_dimension_numbers<[1], [0], [0], [1], [0, 0, 1, 1], [], []>} : vector<4x64xbf16>, vector<64x64xbf16>, vector<4x64xf32> -> vector<4x64xf32>
    %c0_98 = arith.constant 0 : index
    %c0_99 = arith.constant 0 : index
    %128 = vector.load %arg13[%c0_98, %c0_99] : memref<1x64xf32, #tpu.memory_space<vmem>>, vector<1x64xf32>
    %129 = vector.broadcast %128 : vector<1x64xf32> to vector<4x64xf32>
    %130 = arith.addf %127, %129 : vector<4x64xf32>
    %cst_100 = arith.constant 0.000000e+00 : f32
    %131 = vector.broadcast %cst_100 : f32 to vector<4x64xf32>
    %132 = arith.maximumf %130, %131 : vector<4x64xf32>
    %133 = arith.truncf %132 : vector<4x64xf32> to vector<4x64xbf16>
    %c0_101 = arith.constant 0 : index
    %c0_102 = arith.constant 0 : index
    %134 = vector.load %arg14[%c0_101, %c0_102] : memref<64x8xbf16, #tpu.memory_space<vmem>>, vector<64x8xbf16>
    %cst_103 = arith.constant dense<0.000000e+00> : vector<4x8xf32>
    %135 = tpu.matmul %133, %134, %cst_103 {dimension_numbers = #tpu.dot_dimension_numbers<[1], [0], [0], [1], [0, 0, 1, 1], [], []>} : vector<4x64xbf16>, vector<64x8xbf16>, vector<4x8xf32> -> vector<4x8xf32>
    %c0_104 = arith.constant 0 : index
    %c0_105 = arith.constant 0 : index
    %136 = vector.load %arg15[%c0_104, %c0_105] : memref<1x8xf32, #tpu.memory_space<vmem>>, vector<1x8xf32>
    %137 = vector.broadcast %136 : vector<1x8xf32> to vector<4x8xf32>
    %138 = arith.addf %135, %137 : vector<4x8xf32>
    %c0_106 = arith.constant 0 : index
    %c0_107 = arith.constant 0 : index
    %c0_108 = arith.constant 0 : index
    %139 = vector.load %arg16[%c0_106, %c0_107, %c0_108] : memref<1x4x8xf32, #tpu.memory_space<vmem>>, vector<1x4x8xf32>
    %140 = vector.shape_cast %139 : vector<1x4x8xf32> to vector<4x8xf32>
    %141 = vector.shape_cast %138 : vector<4x8xf32> to vector<1x4x8xf32>
    tpu.vector_store %arg16[%c0_106, %c0_107, %c0_108], %141 {strides = array<i32>} : memref<1x4x8xf32, #tpu.memory_space<vmem>>, vector<1x4x8xf32>,
    return
  }
  func.func @transform_0(%arg0: i32) -> (i32, i32) {
    %c0_i32 = arith.constant 0 : i32
    %c0_i32_0 = arith.constant 0 : i32
    return %arg0, %c0_i32 : i32, i32
  }
  func.func @transform_1(%arg0: i32) -> (i32, i32) {
    %c0_i32 = arith.constant 0 : i32
    %c0_i32_0 = arith.constant 0 : i32
    %c0_i32_1 = arith.constant 0 : i32
    return %c0_i32, %c0_i32_0 : i32, i32
  }
  func.func @transform_2(%arg0: i32) -> (i32, i32) {
    %c0_i32 = arith.constant 0 : i32
    %c0_i32_0 = arith.constant 0 : i32
    %c0_i32_1 = arith.constant 0 : i32
    return %c0_i32, %c0_i32_0 : i32, i32
  }
  func.func @transform_3(%arg0: i32) -> (i32, i32) {
    %c0_i32 = arith.constant 0 : i32
    %c0_i32_0 = arith.constant 0 : i32
    %c0_i32_1 = arith.constant 0 : i32
    return %c0_i32, %c0_i32_0 : i32, i32
  }
  func.func @transform_4(%arg0: i32) -> (i32, i32) {
    %c0_i32 = arith.constant 0 : i32
    %c0_i32_0 = arith.constant 0 : i32
    %c0_i32_1 = arith.constant 0 : i32
    return %c0_i32, %c0_i32_0 : i32, i32
  }
  func.func @transform_5(%arg0: i32) -> (i32, i32) {
    %c0_i32 = arith.constant 0 : i32
    %c0_i32_0 = arith.constant 0 : i32
    %c0_i32_1 = arith.constant 0 : i32
    return %c0_i32, %c0_i32_0 : i32, i32
  }
  func.func @transform_6(%arg0: i32) -> (i32, i32) {
    %c0_i32 = arith.constant 0 : i32
    %c0_i32_0 = arith.constant 0 : i32
    %c0_i32_1 = arith.constant 0 : i32
    return %c0_i32, %c0_i32_0 : i32, i32
  }
  func.func @transform_7(%arg0: i32) -> (i32, i32) {
    %c0_i32 = arith.constant 0 : i32
    %c0_i32_0 = arith.constant 0 : i32
    %c0_i32_1 = arith.constant 0 : i32
    return %c0_i32, %c0_i32_0 : i32, i32
  }
  func.func @transform_8(%arg0: i32) -> (i32, i32) {
    %c0_i32 = arith.constant 0 : i32
    %c0_i32_0 = arith.constant 0 : i32
    %c0_i32_1 = arith.constant 0 : i32
    return %c0_i32, %c0_i32_0 : i32, i32
  }
  func.func @transform_10(%arg0: i32) -> (i32, i32) {
    %c0_i32 = arith.constant 0 : i32
    %c0_i32_0 = arith.constant 0 : i32
    %c0_i32_1 = arith.constant 0 : i32
    return %c0_i32, %c0_i32_0 : i32, i32
  }
  func.func @transform_11(%arg0: i32) -> (i32, i32) {
    %c0_i32 = arith.constant 0 : i32
    %c0_i32_0 = arith.constant 0 : i32
    %c0_i32_1 = arith.constant 0 : i32
    return %c0_i32, %c0_i32_0 : i32, i32
  }
  func.func @transform_12(%arg0: i32) -> (i32, i32) {
    %c0_i32 = arith.constant 0 : i32
    %c0_i32_0 = arith.constant 0 : i32
    %c0_i32_1 = arith.constant 0 : i32
    return %c0_i32, %c0_i32_0 : i32, i32
  }
  func.func @transform_13(%arg0: i32) -> (i32, i32) {
    %c0_i32 = arith.constant 0 : i32
    %c0_i32_0 = arith.constant 0 : i32
    %c0_i32_1 = arith.constant 0 : i32
    return %c0_i32, %c0_i32_0 : i32, i32
  }
  func.func @transform_14(%arg0: i32) -> (i32, i32) {
    %c0_i32 = arith.constant 0 : i32
    %c0_i32_0 = arith.constant 0 : i32
    %c0_i32_1 = arith.constant 0 : i32
    return %c0_i32, %c0_i32_0 : i32, i32
  }
  func.func @transform_15(%arg0: i32) -> (i32, i32, i32) {
    %c0_i32 = arith.constant 0 : i32
    %c0_i32_0 = arith.constant 0 : i32
    %c0_i32_1 = arith.constant 0 : i32
    return %arg0, %c0_i32, %c0_i32_0 : i32, i32, i32
  }
}

</mosaic_0001>

<llo_original>
// kernel: cnn_forward.1
$region0: #{cnn_forward.1}
  #allocation0 [shape = 'u32[]', space=smem, size = 0x4, offset = 0x4, fixed_abs, tag = 'smem constant byte address 0x4 - core index']
  #allocation1 [shape = 'u32[144,128]{1,0:T(1,128)}', space=vmem, size = 0x12000, scoped, tag = 'internal scratch']
  #allocation2 [shape = 'f32[318,64]{1,0:T(8,128)}', space=vmem, size = 0x28000, scoped, tag = 'scratch operand']
  #allocation3 [shape = 'f32[156,128]{1,0:T(8,128)}', space=vmem, size = 0x14000, scoped, tag = 'scratch operand']
  #allocation4 [shape = 'f32[4,2304]{1,0:T(4,128)}', space=vmem, size = 0x9000, scoped, tag = 'scratch operand']
  #allocation5 [shape = 'bf16[2304,64]{1,0:T(16,128)(2,1)}', space=vmem, size = 0x90000, scoped, tag = 'scratch operand']
  #allocation6 [shape = 's32[1]{0}', space=sflag, size = 0x4, scoped, tag = 'scratch operand']
  #allocation9 [shape = 's32[]', space=sflag, size = 0x4, offset = 0, fixed_abs, tag = 'sflag constant byte address 0x0 - dummy sync flag']
  %s0 = inlined_call_operand.vmem [shape: f32[640,32], index: 0, kind: input, shape index: {}]
  %s1 = inlined_call_operand.vmem [shape: f32[2,32], index: 1, kind: input, shape index: {}]
  %s2 = inlined_call_operand.vmem [shape: f32[1,32], index: 2, kind: input, shape index: {}]
  %s3 = inlined_call_operand.vmem [shape: bf16[64,64], index: 3, kind: input, shape index: {}]
  %s4 = inlined_call_operand.vmem [shape: f32[1,64], index: 4, kind: input, shape index: {}]
  %s5 = inlined_call_operand.vmem [shape: bf16[128,64], index: 5, kind: input, shape index: {}]
  %s6 = inlined_call_operand.vmem [shape: f32[1,64], index: 6, kind: input, shape index: {}]
  %s7 = inlined_call_operand.vmem [shape: bf16[128,128], index: 7, kind: input, shape index: {}]
  %s8 = inlined_call_operand.vmem [shape: f32[1,128], index: 8, kind: input, shape index: {}]
  %s9 = inlined_call_operand.vmem [shape: bf16[2304,64], index: 9, kind: input, shape index: {}]
  %s10 = inlined_call_operand.vmem [shape: f32[1,64], index: 10, kind: input, shape index: {}]
  %s11 = inlined_call_operand.vmem [shape: bf16[64,64], index: 11, kind: input, shape index: {}]
  %s12 = inlined_call_operand.vmem [shape: f32[1,64], index: 12, kind: input, shape index: {}]
  %s13 = inlined_call_operand.vmem [shape: bf16[64,8], index: 13, kind: input, shape index: {}]
  %s14 = inlined_call_operand.vmem [shape: f32[1,8], index: 14, kind: input, shape index: {}]
  %s15 = inlined_call_operand.hbm [shape: f32[2,4,8], index: 15, kind: output, shape index: {}]
  %s16 = sld [smem:[#allocation0]]
  $region123: #{cnn_forward.1} parent=0
    _
  %s18 = ssub.s32 1, %s16
  %s19 = scalar_select 0, %s18, %s16
  $region1: #{cnn_forward.1} parent=0
    #allocation7 [shape = 'u8[4096]{0}', space=vmem, size = 0x1000, scoped, tag = 'output window, operand 0']
    #allocation8 [shape = 's32[2]{0}', space=sflag, size = 0x8, scoped, tag = 'scoped memory for cnn_forward.1']
    %20 = vsyncpa [#allocation8], 0
    %s21 = scalar_lea.sflag [#allocation8], 1
    %22 = vsyncpa %s21, 0
    loop: start=0, step=1, limit=4
    $region2: #{cnn_forward.1} parent=1 // loop_pre_header
      _
    $region3: #{cnn_forward.1} parent=1 // loop_header
      %s24 = sphi 0, %s28
      %p25 = scmp.ge.s32.totalorder %s24, 4
      %s34 = sphi 0, %s36
      %s37 = sphi 0, %s34
      %s38 = sphi 0, %s37
      %s54 = sphi 0, %s38
      %s58 = sphi 0, %s58
      %s60 = sphi 0, %s58
      %s61 = sphi 0, %s60
      %s75 = sphi 0, %s61
      %s79 = sphi 0, %s79
      %s81 = sphi 0, %s79
      %s82 = sphi 0, %s81
      %s96 = sphi 0, %s82
      %s100 = sphi 0, %s100
      %s102 = sphi 0, %s100
      %s103 = sphi 0, %s102
      %s117 = sphi 0, %s103
      %s121 = sphi 0, %s121
      %s123 = sphi 0, %s121
      %s124 = sphi 0, %s123
      %s138 = sphi 0, %s124
      %s142 = sphi 0, %s142
      %s144 = sphi 0, %s142
      %s145 = sphi 0, %s144
      %s159 = sphi 0, %s145
      %s163 = sphi 0, %s163
      %s165 = sphi 0, %s163
      %s166 = sphi 0, %s165
      %s180 = sphi 0, %s166
      %s184 = sphi 0, %s184
      %s186 = sphi 0, %s184
      %s187 = sphi 0, %s186
      %s201 = sphi 0, %s187
      %s205 = sphi 0, %s205
      %s207 = sphi 0, %s205
      %s208 = sphi 0, %s207
      %s222 = sphi 0, %s208
      %s226 = sphi 0, %s226
      %s228 = sphi 0, %s226
      %s229 = sphi 0, %s228
      %s243 = sphi 0, %s229
      %s247 = sphi 0, %s247
      %s249 = sphi 0, %s247
      %s250 = sphi 0, %s249
      %s264 = sphi 0, %s250
      %s268 = sphi 0, %s268
      %s270 = sphi 0, %s268
      %s271 = sphi 0, %s270
      %s285 = sphi 0, %s271
      %s289 = sphi 0, %s289
      %s291 = sphi 0, %s289
      %s292 = sphi 0, %s291
      %s306 = sphi 0, %s292
      %s310 = sphi 0, %s310
      %s312 = sphi 0, %s310
      %s313 = sphi 0, %s312
      %s327 = sphi 0, %s313
      %s333 = sphi 0, %s335
      %s336 = sphi 0, %s333
      %s337 = sphi 0, %s336
      %s353 = sphi 0, %s337
    $region4: #{cnn_forward.1} parent=1 // loop_header_branch
      %27 = sbr.rel (%p25) target = $region8
    $region5: #{cnn_forward.1} parent=1 // loop_body
      %s29 = ssub.s32 %s24, 1
      %s30 = ssub.s32 %s24, 2
      %s31 = sadd.s32 %s24, 1
      %s32 = ssub.s32 %s24, %s31
      %p33 = scmp.eq.s32.totalorder %s32, 0
      %s35 = sadd.s32 %s34, 1
      %s36 = scalar_select %p33, %s34, %s35
      %p39 = pneg %p33
      %p40 = scmp.eq.s32.totalorder %s24, 1
      %p41 = por %p39, %p40
      %p42 = scmp.ne.s32.totalorder %s34, %s37
      %p43 = scmp.eq.s32.totalorder %s24, 0
      %p44 = por %p42, %p43
      %p45 = scmp.ne.s32.totalorder %s34, %s37
      %p46 = scmp.eq.s32.totalorder %s29, 1
      %p47 = por %p45, %p46
      %p48 = scmp.ne.s32.totalorder %s37, %s38
      %p49 = scmp.eq.s32.totalorder %s29, 0
      %p50 = por %p48, %p49
      %p51 = scmp.ne.s32.totalorder %s37, %s38
      %p52 = scmp.eq.s32.totalorder %s30, 1
      %p53 = por %p51, %p52
      %p55 = scmp.ne.s32.totalorder %s38, %s54
      %p56 = scmp.eq.s32.totalorder %s30, 0
      %p57 = por %p55, %p56
      %s59 = sadd.s32 %s58, 1
      %p62 = scmp.eq.s32.totalorder %s24, 1
      %p63 = scmp.ne.s32.totalorder %s58, %s60
      %p64 = scmp.eq.s32.totalorder %s24, 0
      %p65 = por %p63, %p64
      %p66 = scmp.ne.s32.totalorder %s58, %s60
      %p67 = scmp.eq.s32.totalorder %s29, 1
      %p68 = por %p66, %p67
      %p69 = scmp.ne.s32.totalorder %s60, %s61
      %p70 = scmp.eq.s32.totalorder %s29, 0
      %p71 = por %p69, %p70
      %p72 = scmp.ne.s32.totalorder %s60, %s61
      %p73 = scmp.eq.s32.totalorder %s30, 1
      %p74 = por %p72, %p73
      %p76 = scmp.ne.s32.totalorder %s61, %s75
      %p77 = scmp.eq.s32.totalorder %s30, 0
      %p78 = por %p76, %p77
      %s80 = sadd.s32 %s79, 1
      %p83 = scmp.eq.s32.totalorder %s24, 1
      %p84 = scmp.ne.s32.totalorder %s79, %s81
      %p85 = scmp.eq.s32.totalorder %s24, 0
      %p86 = por %p84, %p85
      %p87 = scmp.ne.s32.totalorder %s79, %s81
      %p88 = scmp.eq.s32.totalorder %s29, 1
      %p89 = por %p87, %p88
      %p90 = scmp.ne.s32.totalorder %s81, %s82
      %p91 = scmp.eq.s32.totalorder %s29, 0
      %p92 = por %p90, %p91
      %p93 = scmp.ne.s32.totalorder %s81, %s82
      %p94 = scmp.eq.s32.totalorder %s30, 1
      %p95 = por %p93, %p94
      %p97 = scmp.ne.s32.totalorder %s82, %s96
      %p98 = scmp.eq.s32.totalorder %s30, 0
      %p99 = por %p97, %p98
      %s101 = sadd.s32 %s100, 1
      %p104 = scmp.eq.s32.totalorder %s24, 1
      %p105 = scmp.ne.s32.totalorder %s100, %s102
      %p106 = scmp.eq.s32.totalorder %s24, 0
      %p107 = por %p105, %p106
      %p108 = scmp.ne.s32.totalorder %s100, %s102
      %p109 = scmp.eq.s32.totalorder %s29, 1
      %p110 = por %p108, %p109
      %p111 = scmp.ne.s32.totalorder %s102, %s103
      %p112 = scmp.eq.s32.totalorder %s29, 0
      %p113 = por %p111, %p112
      %p114 = scmp.ne.s32.totalorder %s102, %s103
      %p115 = scmp.eq.s32.totalorder %s30, 1
      %p116 = por %p114, %p115
      %p118 = scmp.ne.s32.totalorder %s103, %s117
      %p119 = scmp.eq.s32.totalorder %s30, 0
      %p120 = por %p118, %p119
      %s122 = sadd.s32 %s121, 1
      %p125 = scmp.eq.s32.totalorder %s24, 1
      %p126 = scmp.ne.s32.totalorder %s121, %s123
      %p127 = scmp.eq.s32.totalorder %s24, 0
      %p128 = por %p126, %p127
      %p129 = scmp.ne.s32.totalorder %s121, %s123
      %p130 = scmp.eq.s32.totalorder %s29, 1
      %p131 = por %p129, %p130
      %p132 = scmp.ne.s32.totalorder %s123, %s124
      %p133 = scmp.eq.s32.totalorder %s29, 0
      %p134 = por %p132, %p133
      %p135 = scmp.ne.s32.totalorder %s123, %s124
      %p136 = scmp.eq.s32.totalorder %s30, 1
      %p137 = por %p135, %p136
      %p139 = scmp.ne.s32.totalorder %s124, %s138
      %p140 = scmp.eq.s32.totalorder %s30, 0
      %p141 = por %p139, %p140
      %s143 = sadd.s32 %s142, 1
      %p146 = scmp.eq.s32.totalorder %s24, 1
      %p147 = scmp.ne.s32.totalorder %s142, %s144
      %p148 = scmp.eq.s32.totalorder %s24, 0
      %p149 = por %p147, %p148
      %p150 = scmp.ne.s32.totalorder %s142, %s144
      %p151 = scmp.eq.s32.totalorder %s29, 1
      %p152 = por %p150, %p151
      %p153 = scmp.ne.s32.totalorder %s144, %s145
      %p154 = scmp.eq.s32.totalorder %s29, 0
      %p155 = por %p153, %p154
      %p156 = scmp.ne.s32.totalorder %s144, %s145
      %p157 = scmp.eq.s32.totalorder %s30, 1
      %p158 = por %p156, %p157
      %p160 = scmp.ne.s32.totalorder %s145, %s159
      %p161 = scmp.eq.s32.totalorder %s30, 0
      %p162 = por %p160, %p161
      %s164 = sadd.s32 %s163, 1
      %p167 = scmp.eq.s32.totalorder %s24, 1
      %p168 = scmp.ne.s32.totalorder %s163, %s165
      %p169 = scmp.eq.s32.totalorder %s24, 0
      %p170 = por %p168, %p169
      %p171 = scmp.ne.s32.totalorder %s163, %s165
      %p172 = scmp.eq.s32.totalorder %s29, 1
      %p173 = por %p171, %p172
      %p174 = scmp.ne.s32.totalorder %s165, %s166
      %p175 = scmp.eq.s32.totalorder %s29, 0
      %p176 = por %p174, %p175
      %p177 = scmp.ne.s32.totalorder %s165, %s166
      %p178 = scmp.eq.s32.totalorder %s30, 1
      %p179 = por %p177, %p178
      %p181 = scmp.ne.s32.totalorder %s166, %s180
      %p182 = scmp.eq.s32.totalorder %s30, 0
      %p183 = por %p181, %p182
      %s185 = sadd.s32 %s184, 1
      %p188 = scmp.eq.s32.totalorder %s24, 1
      %p189 = scmp.ne.s32.totalorder %s184, %s186
      %p190 = scmp.eq.s32.totalorder %s24, 0
      %p191 = por %p189, %p190
      %p192 = scmp.ne.s32.totalorder %s184, %s186
      %p193 = scmp.eq.s32.totalorder %s29, 1
      %p194 = por %p192, %p193
      %p195 = scmp.ne.s32.totalorder %s186, %s187
      %p196 = scmp.eq.s32.totalorder %s29, 0
      %p197 = por %p195, %p196
      %p198 = scmp.ne.s32.totalorder %s186, %s187
      %p199 = scmp.eq.s32.totalorder %s30, 1
      %p200 = por %p198, %p199
      %p202 = scmp.ne.s32.totalorder %s187, %s201
      %p203 = scmp.eq.s32.totalorder %s30, 0
      %p204 = por %p202, %p203
      %s206 = sadd.s32 %s205, 1
      %p209 = scmp.eq.s32.totalorder %s24, 1
      %p210 = scmp.ne.s32.totalorder %s205, %s207
      %p211 = scmp.eq.s32.totalorder %s24, 0
      %p212 = por %p210, %p211
      %p213 = scmp.ne.s32.totalorder %s205, %s207
      %p214 = scmp.eq.s32.totalorder %s29, 1
      %p215 = por %p213, %p214
      %p216 = scmp.ne.s32.totalorder %s207, %s208
      %p217 = scmp.eq.s32.totalorder %s29, 0
      %p218 = por %p216, %p217
      %p219 = scmp.ne.s32.totalorder %s207, %s208
      %p220 = scmp.eq.s32.totalorder %s30, 1
      %p221 = por %p219, %p220
      %p223 = scmp.ne.s32.totalorder %s208, %s222
      %p224 = scmp.eq.s32.totalorder %s30, 0
      %p225 = por %p223, %p224
      %s227 = sadd.s32 %s226, 1
      %p230 = scmp.eq.s32.totalorder %s24, 1
      %p231 = scmp.ne.s32.totalorder %s226, %s228
      %p232 = scmp.eq.s32.totalorder %s24, 0
      %p233 = por %p231, %p232
      %p234 = scmp.ne.s32.totalorder %s226, %s228
      %p235 = scmp.eq.s32.totalorder %s29, 1
      %p236 = por %p234, %p235
      %p237 = scmp.ne.s32.totalorder %s228, %s229
      %p238 = scmp.eq.s32.totalorder %s29, 0
      %p239 = por %p237, %p238
      %p240 = scmp.ne.s32.totalorder %s228, %s229
      %p241 = scmp.eq.s32.totalorder %s30, 1
      %p242 = por %p240, %p241
      %p244 = scmp.ne.s32.totalorder %s229, %s243
      %p245 = scmp.eq.s32.totalorder %s30, 0
      %p246 = por %p244, %p245
      %s248 = sadd.s32 %s247, 1
      %p251 = scmp.eq.s32.totalorder %s24, 1
      %p252 = scmp.ne.s32.totalorder %s247, %s249
      %p253 = scmp.eq.s32.totalorder %s24, 0
      %p254 = por %p252, %p253
      %p255 = scmp.ne.s32.totalorder %s247, %s249
      %p256 = scmp.eq.s32.totalorder %s29, 1
      %p257 = por %p255, %p256
      %p258 = scmp.ne.s32.totalorder %s249, %s250
      %p259 = scmp.eq.s32.totalorder %s29, 0
      %p260 = por %p258, %p259
      %p261 = scmp.ne.s32.totalorder %s249, %s250
      %p262 = scmp.eq.s32.totalorder %s30, 1
      %p263 = por %p261, %p262
      %p265 = scmp.ne.s32.totalorder %s250, %s264
      %p266 = scmp.eq.s32.totalorder %s30, 0
      %p267 = por %p265, %p266
      %s269 = sadd.s32 %s268, 1
      %p272 = scmp.eq.s32.totalorder %s24, 1
      %p273 = scmp.ne.s32.totalorder %s268, %s270
      %p274 = scmp.eq.s32.totalorder %s24, 0
      %p275 = por %p273, %p274
      %p276 = scmp.ne.s32.totalorder %s268, %s270
      %p277 = scmp.eq.s32.totalorder %s29, 1
      %p278 = por %p276, %p277
      %p279 = scmp.ne.s32.totalorder %s270, %s271
      %p280 = scmp.eq.s32.totalorder %s29, 0
      %p281 = por %p279, %p280
      %p282 = scmp.ne.s32.totalorder %s270, %s271
      %p283 = scmp.eq.s32.totalorder %s30, 1
      %p284 = por %p282, %p283
      %p286 = scmp.ne.s32.totalorder %s271, %s285
      %p287 = scmp.eq.s32.totalorder %s30, 0
      %p288 = por %p286, %p287
      %s290 = sadd.s32 %s289, 1
      %p293 = scmp.eq.s32.totalorder %s24, 1
      %p294 = scmp.ne.s32.totalorder %s289, %s291
      %p295 = scmp.eq.s32.totalorder %s24, 0
      %p296 = por %p294, %p295
      %p297 = scmp.ne.s32.totalorder %s289, %s291
      %p298 = scmp.eq.s32.totalorder %s29, 1
      %p299 = por %p297, %p298
      %p300 = scmp.ne.s32.totalorder %s291, %s292
      %p301 = scmp.eq.s32.totalorder %s29, 0
      %p302 = por %p300, %p301
      %p303 = scmp.ne.s32.totalorder %s291, %s292
      %p304 = scmp.eq.s32.totalorder %s30, 1
      %p305 = por %p303, %p304
      %p307 = scmp.ne.s32.totalorder %s292, %s306
      %p308 = scmp.eq.s32.totalorder %s30, 0
      %p309 = por %p307, %p308
      %s311 = sadd.s32 %s310, 1
      %p314 = scmp.eq.s32.totalorder %s24, 1
      %p315 = scmp.ne.s32.totalorder %s310, %s312
      %p316 = scmp.eq.s32.totalorder %s24, 0
      %p317 = por %p315, %p316
      %p318 = scmp.ne.s32.totalorder %s310, %s312
      %p319 = scmp.eq.s32.totalorder %s29, 1
      %p320 = por %p318, %p319
      %p321 = scmp.ne.s32.totalorder %s312, %s313
      %p322 = scmp.eq.s32.totalorder %s29, 0
      %p323 = por %p321, %p322
      %p324 = scmp.ne.s32.totalorder %s312, %s313
      %p325 = scmp.eq.s32.totalorder %s30, 1
      %p326 = por %p324, %p325
      %p328 = scmp.ne.s32.totalorder %s313, %s327
      %p329 = scmp.eq.s32.totalorder %s30, 0
      %p330 = por %p328, %p329
      %s331 = ssub.s32 %s24, %s31
      %p332 = scmp.eq.s32.totalorder %s331, 0
      %s334 = sadd.s32 %s333, 1
      %s335 = scalar_select %p332, %s333, %s334
      %p338 = pneg %p332
      %p339 = scmp.eq.s32.totalorder %s24, 1
      %p340 = por %p338, %p339
      %p341 = scmp.ne.s32.totalorder %s333, %s336
      %p342 = scmp.eq.s32.totalorder %s24, 0
      %p343 = por %p341, %p342
      %p344 = scmp.ne.s32.totalorder %s333, %s336
      %p345 = scmp.eq.s32.totalorder %s29, 1
      %p346 = por %p344, %p345
      %p347 = scmp.ne.s32.totalorder %s336, %s337
      %p348 = scmp.eq.s32.totalorder %s29, 0
      %p349 = por %p347, %p348
      %p350 = scmp.ne.s32.totalorder %s336, %s337
      %p351 = scmp.eq.s32.totalorder %s30, 1
      %p352 = por %p350, %p351
      %p354 = scmp.ne.s32.totalorder %s337, %s353
      %p355 = scmp.eq.s32.totalorder %s30, 0
      %p356 = por %p354, %p355
      %p357 = scmp.le.s32.totalorder 1, %s24
      %p358 = scmp.lt.s32.totalorder %s24, 3
      %p359 = pnand %p357, %p358
      %p360 = pneg %p359
      // Predicated region
      $region9: #{cnn_forward.1} parent=5 // pred_check
        _
      $region10: #{cnn_forward.1} parent=5 // pred_check_branch
        %362 = sbr.rel (%p359) target = $region12
      $region11: #{cnn_forward.1} parent=5 // pred_region
        %s363 = ssub.s32 %s24, 1
        // Predicated region
        $region13: #{cnn_forward.1} parent=11 // pred_check
          %p364 = pneg %p71
        $region14: #{cnn_forward.1} parent=11 // pred_check_branch
          %366 = sbr.rel (%p364) target = $region16
        $region15: #{cnn_forward.1} parent=11 // pred_region
          _
        $region16: #{cnn_forward.1} parent=11 // pred_fallthru
          _
        // Predicated region
        $region17: #{cnn_forward.1} parent=11 // pred_check
          %p367 = pneg %p92
        $region18: #{cnn_forward.1} parent=11 // pred_check_branch
          %369 = sbr.rel (%p367) target = $region20
        $region19: #{cnn_forward.1} parent=11 // pred_region
          _
        $region20: #{cnn_forward.1} parent=11 // pred_fallthru
          _
        // Predicated region
        $region21: #{cnn_forward.1} parent=11 // pred_check
          %p370 = pneg %p113
        $region22: #{cnn_forward.1} parent=11 // pred_check_branch
          %372 = sbr.rel (%p370) target = $region24
        $region23: #{cnn_forward.1} parent=11 // pred_region
          _
        $region24: #{cnn_forward.1} parent=11 // pred_fallthru
          _
        // Predicated region
        $region25: #{cnn_forward.1} parent=11 // pred_check
          %p373 = pneg %p134
        $region26: #{cnn_forward.1} parent=11 // pred_check_branch
          %375 = sbr.rel (%p373) target = $region28
        $region27: #{cnn_forward.1} parent=11 // pred_region
          _
        $region28: #{cnn_forward.1} parent=11 // pred_fallthru
          _
        // Predicated region
        $region29: #{cnn_forward.1} parent=11 // pred_check
          %p376 = pneg %p155
        $region30: #{cnn_forward.1} parent=11 // pred_check_branch
          %378 = sbr.rel (%p376) target = $region32
        $region31: #{cnn_forward.1} parent=11 // pred_region
          _
        $region32: #{cnn_forward.1} parent=11 // pred_fallthru
          _
        // Predicated region
        $region33: #{cnn_forward.1} parent=11 // pred_check
          %p379 = pneg %p176
        $region34: #{cnn_forward.1} parent=11 // pred_check_branch
          %381 = sbr.rel (%p379) target = $region36
        $region35: #{cnn_forward.1} parent=11 // pred_region
          _
        $region36: #{cnn_forward.1} parent=11 // pred_fallthru
          _
        // Predicated region
        $region37: #{cnn_forward.1} parent=11 // pred_check
          %p382 = pneg %p197
        $region38: #{cnn_forward.1} parent=11 // pred_check_branch
          %384 = sbr.rel (%p382) target = $region40
        $region39: #{cnn_forward.1} parent=11 // pred_region
          _
        $region40: #{cnn_forward.1} parent=11 // pred_fallthru
          _
        // Predicated region
        $region41: #{cnn_forward.1} parent=11 // pred_check
          %p385 = pneg %p218
        $region42: #{cnn_forward.1} parent=11 // pred_check_branch
          %387 = sbr.rel (%p385) target = $region44
        $region43: #{cnn_forward.1} parent=11 // pred_region
          _
        $region44: #{cnn_forward.1} parent=11 // pred_fallthru
          _
        // Predicated region
        $region45: #{cnn_forward.1} parent=11 // pred_check
          %p388 = pneg %p239
        $region46: #{cnn_forward.1} parent=11 // pred_check_branch
          %390 = sbr.rel (%p388) target = $region48
        $region47: #{cnn_forward.1} parent=11 // pred_region
          _
        $region48: #{cnn_forward.1} parent=11 // pred_fallthru
          _
        // Predicated region
        $region49: #{cnn_forward.1} parent=11 // pred_check
          %p391 = pneg %p260
        $region50: #{cnn_forward.1} parent=11 // pred_check_branch
          %393 = sbr.rel (%p391) target = $region52
        $region51: #{cnn_forward.1} parent=11 // pred_region
          _
        $region52: #{cnn_forward.1} parent=11 // pred_fallthru
          _
        // Predicated region
        $region53: #{cnn_forward.1} parent=11 // pred_check
          %p394 = pneg %p281
        $region54: #{cnn_forward.1} parent=11 // pred_check_branch
          %396 = sbr.rel (%p394) target = $region56
        $region55: #{cnn_forward.1} parent=11 // pred_region
          _
        $region56: #{cnn_forward.1} parent=11 // pred_fallthru
          _
        // Predicated region
        $region57: #{cnn_forward.1} parent=11 // pred_check
          %p397 = pneg %p302
        $region58: #{cnn_forward.1} parent=11 // pred_check_branch
          %399 = sbr.rel (%p397) target = $region60
        $region59: #{cnn_forward.1} parent=11 // pred_region
          _
        $region60: #{cnn_forward.1} parent=11 // pred_fallthru
          _
        // Predicated region
        $region61: #{cnn_forward.1} parent=11 // pred_check
          %p400 = pneg %p323
        $region62: #{cnn_forward.1} parent=11 // pred_check_branch
          %402 = sbr.rel (%p400) target = $region64
        $region63: #{cnn_forward.1} parent=11 // pred_region
          _
        $region64: #{cnn_forward.1} parent=11 // pred_fallthru
          _
      $region12: #{cnn_forward.1} parent=5 // pred_fallthru
        _
      %p403 = scmp.lt.s32.totalorder %s24, 2
      // Predicated region
      $region65: #{cnn_forward.1} parent=5 // pred_check
        %p404 = pneg %p403
      $region66: #{cnn_forward.1} parent=5 // pred_check_branch
        %406 = sbr.rel (%p404) target = $region68
      $region67: #{cnn_forward.1} parent=5 // pred_region
        // Predicated region
        $region69: #{cnn_forward.1} parent=67 // pred_check
          %p407 = pneg %p44
        $region70: #{cnn_forward.1} parent=67 // pred_check_branch
          %409 = sbr.rel (%p407) target = $region72
        $region71: #{cnn_forward.1} parent=67 // pred_region
          %s410 = smul.u32 40, %s24
          %p411 = scmp.lt.s32.totalorder %s410, 79
          %s412 = scalar_select %p411, %s410, 79
          %s413 = smul.addr %s412, 8
          %s414 = scalar_lea.vmem %s0, %s413
          %s415 = smul.u32 40, %s24
        $region72: #{cnn_forward.1} parent=67 // pred_fallthru
          _
      $region68: #{cnn_forward.1} parent=5 // pred_fallthru
        _
      %p416 = scmp.le.s32.totalorder 1, %s24
      %p417 = scmp.lt.s32.totalorder %s24, 3
      %p418 = pnand %p416, %p417
      %p419 = pneg %p418
      // Predicated region
      $region73: #{cnn_forward.1} parent=5 // pred_check
        _
      $region74: #{cnn_forward.1} parent=5 // pred_check_branch
        %421 = sbr.rel (%p418) target = $region76
      $region75: #{cnn_forward.1} parent=5 // pred_region
        %s422 = ssub.s32 %s24, 1
        %s423 = smul.u32 40, %s29
        %p424 = scmp.lt.s32.totalorder %s423, 79
        %s425 = scalar_select %p424, %s423, 79
        %s426 = smul.addr %s425, 8
        %s427 = scalar_lea.vmem %s0, %s426
        %p428 = pneg %p50
        %p429 = pneg %p47
        %p430 = pneg %p71
        %p431 = pneg %p68
        %p432 = pneg %p92
        %p433 = pneg %p89
        %p434 = pneg %p113
        %p435 = pneg %p110
        %p436 = pneg %p134
        %p437 = pneg %p131
        %p438 = pneg %p155
        %p439 = pneg %p152
        %p440 = pneg %p176
        %p441 = pneg %p173
        %p442 = pneg %p197
        %p443 = pneg %p194
        %p444 = pneg %p218
        %p445 = pneg %p215
        %p446 = pneg %p239
        %p447 = pneg %p236
        %p448 = pneg %p260
        %p449 = pneg %p257
        %p450 = pneg %p281
        %p451 = pneg %p278
        %p452 = pneg %p302
        %p453 = pneg %p299
        %p454 = pneg %p323
        %p455 = pneg %p320
        %p456 = pneg %p349
        %p457 = pneg %p346
        %s458 = sand.u32 %s336, 1
        %s459 = scalar_lea.sflag [#allocation8], %s458
        %s460 = sand.u32 %s336, 1
        %s461 = smul.addr %s460, 4
        %s462 = scalar_lea.vmem [#allocation7], %s461
        %s463 = smul.u32 40, %s29
        %p464 = scmp.lt.s32.totalorder %s463, 79
        %s465 = scalar_select %p464, %s463, 79
        %s466 = smul.addr %s465, 8
        %s467 = scalar_lea.vmem %s0, %s466
        %s468 = smul.u32 40, %s29
        %p471 = scmp.lt.u32.totalorder 1152, 8
        %p472 = pneg %p471
        // Predicated region
        $region77: #{cnn_forward.1} parent=75 // pred_check
          _
        $region78: #{cnn_forward.1} parent=75 // pred_check_branch
          %474 = sbr.rel (%p471) target = $region80
        $region79: #{cnn_forward.1} parent=75 // pred_region
          %s489 = sand.u32 1152, 7
          %p490 = scmp.eq.s32.totalorder %s489, 0
          // Predicated region
          $region92: #{cnn_forward.1} parent=79 // pred_check
            %p491 = pneg %p490
          $region93: #{cnn_forward.1} parent=79 // pred_check_branch
            %493 = sbr.rel (%p491) target = $region95
          $region94: #{cnn_forward.1} parent=79 // pred_region
            loop: start=0, step=1, limit=1
            $region96: #{cnn_forward.1} parent=94 // loop_pre_header
              _
            $region97: #{cnn_forward.1} parent=94 // loop_header
              %s495 = sphi 0, %s499
              %p496 = scmp.ge.s32.totalorder %s495, 1
              %s500 = sphi %s9, %s9
              %s501 = sphi [#allocation5], [#allocation5]
            $region98: #{cnn_forward.1} parent=94 // loop_header_branch
              %498 = sbr.rel (%p496) target = $region102
            $region99: #{cnn_forward.1} parent=94 // loop_body
              %v502 = vld [vmem:[%s500] sm:$0xff]
              %503 = vst [vmem:[%s501] sm:$0xff] %v502
              %v504 = vld [vmem:[%s500 + $0x8] sm:$0xff]
              %505 = vst [vmem:[%s501 + $0x8] sm:$0xff] %v504
              %v506 = vld [vmem:[%s500 + $0x10] sm:$0xff]
              %507 = vst [vmem:[%s501 + $0x10] sm:$0xff] %v506
              %v508 = vld [vmem:[%s500 + $0x18] sm:$0xff]
              %509 = vst [vmem:[%s501 + $0x18] sm:$0xff] %v508
              %v510 = vld [vmem:[%s500 + $0x20] sm:$0xff]
              %511 = vst [vmem:[%s501 + $0x20] sm:$0xff] %v510
              %v512 = vld [vmem:[%s500 + $0x28] sm:$0xff]
              %513 = vst [vmem:[%s501 + $0x28] sm:$0xff] %v512
              %v514 = vld [vmem:[%s500 + $0x30] sm:$0xff]
              %515 = vst [vmem:[%s501 + $0x30] sm:$0xff] %v514
              %v516 = vld [vmem:[%s500 + $0x38] sm:$0xff]
              %517 = vst [vmem:[%s501 + $0x38] sm:$0xff] %v516
              %v518 = vld [vmem:[%s500 + $0x40] sm:$0xff]
              %519 = vst [vmem:[%s501 + $0x40] sm:$0xff] %v518
              %v520 = vld [vmem:[%s500 + $0x48] sm:$0xff]
              %521 = vst [vmem:[%s501 + $0x48] sm:$0xff] %v520
              %v522 = vld [vmem:[%s500 + $0x50] sm:$0xff]
              %523 = vst [vmem:[%s501 + $0x50] sm:$0xff] %v522
              %v524 = vld [vmem:[%s500 + $0x58] sm:$0xff]
              %525 = vst [vmem:[%s501 + $0x58] sm:$0xff] %v524
              %v526 = vld [vmem:[%s500 + $0x60] sm:$0xff]
              %527 = vst [vmem:[%s501 + $0x60] sm:$0xff] %v526
              %v528 = vld [vmem:[%s500 + $0x68] sm:$0xff]
              %529 = vst [vmem:[%s501 + $0x68] sm:$0xff] %v528
              %v530 = vld [vmem:[%s500 + $0x70] sm:$0xff]
              %531 = vst [vmem:[%s501 + $0x70] sm:$0xff] %v530
              %v532 = vld [vmem:[%s500 + $0x78] sm:$0xff]
              %533 = vst [vmem:[%s501 + $0x78] sm:$0xff] %v532
              %v534 = vld [vmem:[%s500 + $0x80] sm:$0xff]
              %535 = vst [vmem:[%s501 + $0x80] sm:$0xff] %v534
              %v536 = vld [vmem:[%s500 + $0x88] sm:$0xff]
              %537 = vst [vmem:[%s501 + $0x88] sm:$0xff] %v536
              %v538 = vld [vmem:[%s500 + $0x90] sm:$0xff]
              %539 = vst [vmem:[%s501 + $0x90] sm:$0xff] %v538
              %v540 = vld [vmem:[%s500 + $0x98] sm:$0xff]
              %541 = vst [vmem:[%s501 + $0x98] sm:$0xff] %v540
              %v542 = vld [vmem:[%s500 + $0xa0] sm:$0xff]
              %543 = vst [vmem:[%s501 + $0xa0] sm:$0xff] %v542
              %v544 = vld [vmem:[%s500 + $0xa8] sm:$0xff]
              %545 = vst [vmem:[%s501 + $0xa8] sm:$0xff] %v544
              %v546 = vld [vmem:[%s500 + $0xb0] sm:$0xff]
              %547 = vst [vmem:[%s501 + $0xb0] sm:$0xff] %v546
              %v548 = vld [vmem:[%s500 + $0xb8] sm:$0xff]
              %549 = vst [vmem:[%s501 + $0xb8] sm:$0xff] %v548
              %v550 = vld [vmem:[%s500 + $0xc0] sm:$0xff]
              %551 = vst [vmem:[%s501 + $0xc0] sm:$0xff] %v550
              %v552 = vld [vmem:[%s500 + $0xc8] sm:$0xff]
              %553 = vst [vmem:[%s501 + $0xc8] sm:$0xff] %v552
              %v554 = vld [vmem:[%s500 + $0xd0] sm:$0xff]
              %555 = vst [vmem:[%s501 + $0xd0] sm:$0xff] %v554
              %v556 = vld [vmem:[%s500 + $0xd8] sm:$0xff]
              %557 = vst [vmem:[%s501 + $0xd8] sm:$0xff] %v556
              %v558 = vld [vmem:[%s500 + $0xe0] sm:$0xff]
              %559 = vst [vmem:[%s501 + $0xe0] sm:$0xff] %v558
              %v560 = vld [vmem:[%s500 + $0xe8] sm:$0xff]
              %561 = vst [vmem:[%s501 + $0xe8] sm:$0xff] %v560
              %v562 = vld [vmem:[%s500 + $0xf0] sm:$0xff]
              %563 = vst [vmem:[%s501 + $0xf0] sm:$0xff] %v562
              %v564 = vld [vmem:[%s500 + $0xf8] sm:$0xff]
              %565 = vst [vmem:[%s501 + $0xf8] sm:$0xff] %v564
              %v566 = vld [vmem:[%s500 + $0x100] sm:$0xff]
              %567 = vst [vmem:[%s501 + $0x100] sm:$0xff] %v566
              %v568 = vld [vmem:[%s500 + $0x108] sm:$0xff]
              %569 = vst [vmem:[%s501 + $0x108] sm:$0xff] %v568
              %v570 = vld [vmem:[%s500 + $0x110] sm:$0xff]
              %571 = vst [vmem:[%s501 + $0x110] sm:$0xff] %v570
              %v572 = vld [vmem:[%s500 + $0x118] sm:$0xff]
              %573 = vst [vmem:[%s501 + $0x118] sm:$0xff] %v572
              %v574 = vld [vmem:[%s500 + $0x120] sm:$0xff]
              %575 = vst [vmem:[%s501 + $0x120] sm:$0xff] %v574
              %v576 = vld [vmem:[%s500 + $0x128] sm:$0xff]
              %577 = vst [vmem:[%s501 + $0x128] sm:$0xff] %v576
              %v578 = vld [vmem:[%s500 + $0x130] sm:$0xff]
              %579 = vst [vmem:[%s501 + $0x130] sm:$0xff] %v578
              %v580 = vld [vmem:[%s500 + $0x138] sm:$0xff]
              %581 = vst [vmem:[%s501 + $0x138] sm:$0xff] %v580
              %v582 = vld [vmem:[%s500 + $0x140] sm:$0xff]
              %583 = vst [vmem:[%s501 + $0x140] sm:$0xff] %v582
              %v584 = vld [vmem:[%s500 + $0x148] sm:$0xff]
              %585 = vst [vmem:[%s501 + $0x148] sm:$0xff] %v584
              %v586 = vld [vmem:[%s500 + $0x150] sm:$0xff]
              %587 = vst [vmem:[%s501 + $0x150] sm:$0xff] %v586
              %v588 = vld [vmem:[%s500 + $0x158] sm:$0xff]
              %589 = vst [vmem:[%s501 + $0x158] sm:$0xff] %v588
              %v590 = vld [vmem:[%s500 + $0x160] sm:$0xff]
              %591 = vst [vmem:[%s501 + $0x160] sm:$0xff] %v590
              %v592 = vld [vmem:[%s500 + $0x168] sm:$0xff]
              %593 = vst [vmem:[%s501 + $0x168] sm:$0xff] %v592
              %v594 = vld [vmem:[%s500 + $0x170] sm:$0xff]
              %595 = vst [vmem:[%s501 + $0x170] sm:$0xff] %v594
              %v596 = vld [vmem:[%s500 + $0x178] sm:$0xff]
              %597 = vst [vmem:[%s501 + $0x178] sm:$0xff] %v596
              %v598 = vld [vmem:[%s500 + $0x180] sm:$0xff]
              %599 = vst [vmem:[%s501 + $0x180] sm:$0xff] %v598
              %v600 = vld [vmem:[%s500 + $0x188] sm:$0xff]
              %601 = vst [vmem:[%s501 + $0x188] sm:$0xff] %v600
              %v602 = vld [vmem:[%s500 + $0x190] sm:$0xff]
              %603 = vst [vmem:[%s501 + $0x190] sm:$0xff] %v602
              %v604 = vld [vmem:[%s500 + $0x198] sm:$0xff]
              %605 = vst [vmem:[%s501 + $0x198] sm:$0xff] %v604
              %v606 = vld [vmem:[%s500 + $0x1a0] sm:$0xff]
              %607 = vst [vmem:[%s501 + $0x1a0] sm:$0xff] %v606
              %v608 = vld [vmem:[%s500 + $0x1a8] sm:$0xff]
              %609 = vst [vmem:[%s501 + $0x1a8] sm:$0xff] %v608
              %v610 = vld [vmem:[%s500 + $0x1b0] sm:$0xff]
              %611 = vst [vmem:[%s501 + $0x1b0] sm:$0xff] %v610
              %v612 = vld [vmem:[%s500 + $0x1b8] sm:$0xff]
              %613 = vst [vmem:[%s501 + $0x1b8] sm:$0xff] %v612
              %v614 = vld [vmem:[%s500 + $0x1c0] sm:$0xff]
              %615 = vst [vmem:[%s501 + $0x1c0] sm:$0xff] %v614
              %v616 = vld [vmem:[%s500 + $0x1c8] sm:$0xff]
              %617 = vst [vmem:[%s501 + $0x1c8] sm:$0xff] %v616
              %v618 = vld [vmem:[%s500 + $0x1d0] sm:$0xff]
              %619 = vst [vmem:[%s501 + $0x1d0] sm:$0xff] %v618
              %v620 = vld [vmem:[%s500 + $0x1d8] sm:$0xff]
              %621 = vst [vmem:[%s501 + $0x1d8] sm:$0xff] %v620
              %v622 = vld [vmem:[%s500 + $0x1e0] sm:$0xff]
              %623 = vst [vmem:[%s501 + $0x1e0] sm:$0xff] %v622
              %v624 = vld [vmem:[%s500 + $0x1e8] sm:$0xff]
              %625 = vst [vmem:[%s501 + $0x1e8] sm:$0xff] %v624
              %v626 = vld [vmem:[%s500 + $0x1f0] sm:$0xff]
              %627 = vst [vmem:[%s501 + $0x1f0] sm:$0xff] %v626
              %v628 = vld [vmem:[%s500 + $0x1f8] sm:$0xff]
              %629 = vst [vmem:[%s501 + $0x1f8] sm:$0xff] %v628
              %v630 = vld [vmem:[%s500 + $0x200] sm:$0xff]
              %631 = vst [vmem:[%s501 + $0x200] sm:$0xff] %v630
              %v632 = vld [vmem:[%s500 + $0x208] sm:$0xff]
              %633 = vst [vmem:[%s501 + $0x208] sm:$0xff] %v632
              %v634 = vld [vmem:[%s500 + $0x210] sm:$0xff]
              %635 = vst [vmem:[%s501 + $0x210] sm:$0xff] %v634
              %v636 = vld [vmem:[%s500 + $0x218] sm:$0xff]
              %637 = vst [vmem:[%s501 + $0x218] sm:$0xff] %v636
              %v638 = vld [vmem:[%s500 + $0x220] sm:$0xff]
              %639 = vst [vmem:[%s501 + $0x220] sm:$0xff] %v638
              %v640 = vld [vmem:[%s500 + $0x228] sm:$0xff]
              %641 = vst [vmem:[%s501 + $0x228] sm:$0xff] %v640
              %v642 = vld [vmem:[%s500 + $0x230] sm:$0xff]
              %643 = vst [vmem:[%s501 + $0x230] sm:$0xff] %v642
              %v644 = vld [vmem:[%s500 + $0x238] sm:$0xff]
              %645 = vst [vmem:[%s501 + $0x238] sm:$0xff] %v644
              %v646 = vld [vmem:[%s500 + $0x240] sm:$0xff]
              %647 = vst [vmem:[%s501 + $0x240] sm:$0xff] %v646
              %v648 = vld [vmem:[%s500 + $0x248] sm:$0xff]
              %649 = vst [vmem:[%s501 + $0x248] sm:$0xff] %v648
              %v650 = vld [vmem:[%s500 + $0x250] sm:$0xff]
              %651 = vst [vmem:[%s501 + $0x250] sm:$0xff] %v650
              %v652 = vld [vmem:[%s500 + $0x258] sm:$0xff]
              %653 = vst [vmem:[%s501 + $0x258] sm:$0xff] %v652
              %v654 = vld [vmem:[%s500 + $0x260] sm:$0xff]
              %655 = vst [vmem:[%s501 + $0x260] sm:$0xff] %v654
              %v656 = vld [vmem:[%s500 + $0x268] sm:$0xff]
              %657 = vst [vmem:[%s501 + $0x268] sm:$0xff] %v656
              %v658 = vld [vmem:[%s500 + $0x270] sm:$0xff]
              %659 = vst [vmem:[%s501 + $0x270] sm:$0xff] %v658
              %v660 = vld [vmem:[%s500 + $0x278] sm:$0xff]
              %661 = vst [vmem:[%s501 + $0x278] sm:$0xff] %v660
              %v662 = vld [vmem:[%s500 + $0x280] sm:$0xff]
              %663 = vst [vmem:[%s501 + $0x280] sm:$0xff] %v662
              %v664 = vld [vmem:[%s500 + $0x288] sm:$0xff]
              %665 = vst [vmem:[%s501 + $0x288] sm:$0xff] %v664
              %v666 = vld [vmem:[%s500 + $0x290] sm:$0xff]
              %667 = vst [vmem:[%s501 + $0x290] sm:$0xff] %v666
              %v668 = vld [vmem:[%s500 + $0x298] sm:$0xff]
              %669 = vst [vmem:[%s501 + $0x298] sm:$0xff] %v668
              %v670 = vld [vmem:[%s500 + $0x2a0] sm:$0xff]
              %671 = vst [vmem:[%s501 + $0x2a0] sm:$0xff] %v670
              %v672 = vld [vmem:[%s500 + $0x2a8] sm:$0xff]
              %673 = vst [vmem:[%s501 + $0x2a8] sm:$0xff] %v672
              %v674 = vld [vmem:[%s500 + $0x2b0] sm:$0xff]
              %675 = vst [vmem:[%s501 + $0x2b0] sm:$0xff] %v674
              %v676 = vld [vmem:[%s500 + $0x2b8] sm:$0xff]
              %677 = vst [vmem:[%s501 + $0x2b8] sm:$0xff] %v676
              %v678 = vld [vmem:[%s500 + $0x2c0] sm:$0xff]
              %679 = vst [vmem:[%s501 + $0x2c0] sm:$0xff] %v678
              %v680 = vld [vmem:[%s500 + $0x2c8] sm:$0xff]
              %681 = vst [vmem:[%s501 + $0x2c8] sm:$0xff] %v680
              %v682 = vld [vmem:[%s500 + $0x2d0] sm:$0xff]
              %683 = vst [vmem:[%s501 + $0x2d0] sm:$0xff] %v682
              %v684 = vld [vmem:[%s500 + $0x2d8] sm:$0xff]
              %685 = vst [vmem:[%s501 + $0x2d8] sm:$0xff] %v684
              %v686 = vld [vmem:[%s500 + $0x2e0] sm:$0xff]
              %687 = vst [vmem:[%s501 + $0x2e0] sm:$0xff] %v686
              %v688 = vld [vmem:[%s500 + $0x2e8] sm:$0xff]
              %689 = vst [vmem:[%s501 + $0x2e8] sm:$0xff] %v688
              %v690 = vld [vmem:[%s500 + $0x2f0] sm:$0xff]
              %691 = vst [vmem:[%s501 + $0x2f0] sm:$0xff] %v690
              %v692 = vld [vmem:[%s500 + $0x2f8] sm:$0xff]
              %693 = vst [vmem:[%s501 + $0x2f8] sm:$0xff] %v692
              %v694 = vld [vmem:[%s500 + $0x300] sm:$0xff]
              %695 = vst [vmem:[%s501 + $0x300] sm:$0xff] %v694
              %v696 = vld [vmem:[%s500 + $0x308] sm:$0xff]
              %697 = vst [vmem:[%s501 + $0x308] sm:$0xff] %v696
              %v698 = vld [vmem:[%s500 + $0x310] sm:$0xff]
              %699 = vst [vmem:[%s501 + $0x310] sm:$0xff] %v698
              %v700 = vld [vmem:[%s500 + $0x318] sm:$0xff]
              %701 = vst [vmem:[%s501 + $0x318] sm:$0xff] %v700
              %v702 = vld [vmem:[%s500 + $0x320] sm:$0xff]
              %703 = vst [vmem:[%s501 + $0x320] sm:$0xff] %v702
              %v704 = vld [vmem:[%s500 + $0x328] sm:$0xff]
              %705 = vst [vmem:[%s501 + $0x328] sm:$0xff] %v704
              %v706 = vld [vmem:[%s500 + $0x330] sm:$0xff]
              %707 = vst [vmem:[%s501 + $0x330] sm:$0xff] %v706
              %v708 = vld [vmem:[%s500 + $0x338] sm:$0xff]
              %709 = vst [vmem:[%s501 + $0x338] sm:$0xff] %v708
              %v710 = vld [vmem:[%s500 + $0x340] sm:$0xff]
              %711 = vst [vmem:[%s501 + $0x340] sm:$0xff] %v710
              %v712 = vld [vmem:[%s500 + $0x348] sm:$0xff]
              %713 = vst [vmem:[%s501 + $0x348] sm:$0xff] %v712
              %v714 = vld [vmem:[%s500 + $0x350] sm:$0xff]
              %715 = vst [vmem:[%s501 + $0x350] sm:$0xff] %v714
              %v716 = vld [vmem:[%s500 + $0x358] sm:$0xff]
              %717 = vst [vmem:[%s501 + $0x358] sm:$0xff] %v716
              %v718 = vld [vmem:[%s500 + $0x360] sm:$0xff]
              %719 = vst [vmem:[%s501 + $0x360] sm:$0xff] %v718
              %v720 = vld [vmem:[%s500 + $0x368] sm:$0xff]
              %721 = vst [vmem:[%s501 + $0x368] sm:$0xff] %v720
              %v722 = vld [vmem:[%s500 + $0x370] sm:$0xff]
              %723 = vst [vmem:[%s501 + $0x370] sm:$0xff] %v722
              %v724 = vld [vmem:[%s500 + $0x378] sm:$0xff]
              %725 = vst [vmem:[%s501 + $0x378] sm:$0xff] %v724
              %v726 = vld [vmem:[%s500 + $0x380] sm:$0xff]
              %727 = vst [vmem:[%s501 + $0x380] sm:$0xff] %v726
              %v728 = vld [vmem:[%s500 + $0x388] sm:$0xff]
              %729 = vst [vmem:[%s501 + $0x388] sm:$0xff] %v728
              %v730 = vld [vmem:[%s500 + $0x390] sm:$0xff]
              %731 = vst [vmem:[%s501 + $0x390] sm:$0xff] %v730
              %v732 = vld [vmem:[%s500 + $0x398] sm:$0xff]
              %733 = vst [vmem:[%s501 + $0x398] sm:$0xff] %v732
              %v734 = vld [vmem:[%s500 + $0x3a0] sm:$0xff]
              %735 = vst [vmem:[%s501 + $0x3a0] sm:$0xff] %v734
              %v736 = vld [vmem:[%s500 + $0x3a8] sm:$0xff]
              %737 = vst [vmem:[%s501 + $0x3a8] sm:$0xff] %v736
              %v738 = vld [vmem:[%s500 + $0x3b0] sm:$0xff]
              %739 = vst [vmem:[%s501 + $0x3b0] sm:$0xff] %v738
              %v740 = vld [vmem:[%s500 + $0x3b8] sm:$0xff]
              %741 = vst [vmem:[%s501 + $0x3b8] sm:$0xff] %v740
              %v742 = vld [vmem:[%s500 + $0x3c0] sm:$0xff]
              %743 = vst [vmem:[%s501 + $0x3c0] sm:$0xff] %v742
              %v744 = vld [vmem:[%s500 + $0x3c8] sm:$0xff]
              %745 = vst [vmem:[%s501 + $0x3c8] sm:$0xff] %v744
              %v746 = vld [vmem:[%s500 + $0x3d0] sm:$0xff]
              %747 = vst [vmem:[%s501 + $0x3d0] sm:$0xff] %v746
              %v748 = vld [vmem:[%s500 + $0x3d8] sm:$0xff]
              %749 = vst [vmem:[%s501 + $0x3d8] sm:$0xff] %v748
              %v750 = vld [vmem:[%s500 + $0x3e0] sm:$0xff]
              %751 = vst [vmem:[%s501 + $0x3e0] sm:$0xff] %v750
              %v752 = vld [vmem:[%s500 + $0x3e8] sm:$0xff]
              %753 = vst [vmem:[%s501 + $0x3e8] sm:$0xff] %v752
              %v754 = vld [vmem:[%s500 + $0x3f0] sm:$0xff]
              %755 = vst [vmem:[%s501 + $0x3f0] sm:$0xff] %v754
              %v756 = vld [vmem:[%s500 + $0x3f8] sm:$0xff]
              %757 = vst [vmem:[%s501 + $0x3f8] sm:$0xff] %v756
              %v758 = vld [vmem:[%s500 + $0x400] sm:$0xff]
              %759 = vst [vmem:[%s501 + $0x400] sm:$0xff] %v758
              %v760 = vld [vmem:[%s500 + $0x408] sm:$0xff]
              %761 = vst [vmem:[%s501 + $0x408] sm:$0xff] %v760
              %v762 = vld [vmem:[%s500 + $0x410] sm:$0xff]
              %763 = vst [vmem:[%s501 + $0x410] sm:$0xff] %v762
              %v764 = vld [vmem:[%s500 + $0x418] sm:$0xff]
              %765 = vst [vmem:[%s501 + $0x418] sm:$0xff] %v764
              %v766 = vld [vmem:[%s500 + $0x420] sm:$0xff]
              %767 = vst [vmem:[%s501 + $0x420] sm:$0xff] %v766
              %v768 = vld [vmem:[%s500 + $0x428] sm:$0xff]
              %769 = vst [vmem:[%s501 + $0x428] sm:$0xff] %v768
              %v770 = vld [vmem:[%s500 + $0x430] sm:$0xff]
              %771 = vst [vmem:[%s501 + $0x430] sm:$0xff] %v770
              %v772 = vld [vmem:[%s500 + $0x438] sm:$0xff]
              %773 = vst [vmem:[%s501 + $0x438] sm:$0xff] %v772
              %v774 = vld [vmem:[%s500 + $0x440] sm:$0xff]
              %775 = vst [vmem:[%s501 + $0x440] sm:$0xff] %v774
              %v776 = vld [vmem:[%s500 + $0x448] sm:$0xff]
              %777 = vst [vmem:[%s501 + $0x448] sm:$0xff] %v776
              %v778 = vld [vmem:[%s500 + $0x450] sm:$0xff]
              %779 = vst [vmem:[%s501 + $0x450] sm:$0xff] %v778
              %v780 = vld [vmem:[%s500 + $0x458] sm:$0xff]
              %781 = vst [vmem:[%s501 + $0x458] sm:$0xff] %v780
              %v782 = vld [vmem:[%s500 + $0x460] sm:$0xff]
              %783 = vst [vmem:[%s501 + $0x460] sm:$0xff] %v782
              %v784 = vld [vmem:[%s500 + $0x468] sm:$0xff]
              %785 = vst [vmem:[%s501 + $0x468] sm:$0xff] %v784
              %v786 = vld [vmem:[%s500 + $0x470] sm:$0xff]
              %787 = vst [vmem:[%s501 + $0x470] sm:$0xff] %v786
              %v788 = vld [vmem:[%s500 + $0x478] sm:$0xff]
              %789 = vst [vmem:[%s501 + $0x478] sm:$0xff] %v788
            $region100: #{cnn_forward.1} parent=94 // loop_footer
              %s499 = sadd.s32 1, %s495
            $region101: #{cnn_forward.1} parent=94 // loop_footer_branch
              %494 = sbr.rel target = $region97
            $region102: #{cnn_forward.1} parent=94 // loop_exit
              _
          $region95: #{cnn_forward.1} parent=79 // pred_fallthru
            _
          %p790 = pneg %p490
          // Predicated region
          $region103: #{cnn_forward.1} parent=79 // pred_check
            _
          $region104: #{cnn_forward.1} parent=79 // pred_check_branch
            %792 = sbr.rel (%p490) target = $region106
          $region105: #{cnn_forward.1} parent=79 // pred_region
            %s793 = sand.u32 1152, 7
          $region106: #{cnn_forward.1} parent=79 // pred_fallthru
            _
        $region80: #{cnn_forward.1} parent=75 // pred_fallthru
          _
        // Predicated region
        $region81: #{cnn_forward.1} parent=75 // pred_check
          %p475 = pneg %p471
        $region82: #{cnn_forward.1} parent=75 // pred_check_branch
          %477 = sbr.rel (%p475) target = $region84
        $region83: #{cnn_forward.1} parent=75 // pred_region
          %s478 = sshllo.u32 0, 1152
          loop: start=0, step=1, limit=1
          $region85: #{cnn_forward.1} parent=83 // loop_pre_header
            _
          $region86: #{cnn_forward.1} parent=83 // loop_header
            %s480 = sphi 0, %s484
            %p481 = scmp.ge.s32.totalorder %s480, 1
            %s485 = sphi %s9, %s9
            %s486 = sphi [#allocation5], [#allocation5]
          $region87: #{cnn_forward.1} parent=83 // loop_header_branch
            %483 = sbr.rel (%p481) target = $region91
          $region88: #{cnn_forward.1} parent=83 // loop_body
            %v487 = vld [vmem:[%s485] sm:%s478]
            %488 = vst [vmem:[%s486] sm:%s478] %v487
          $region89: #{cnn_forward.1} parent=83 // loop_footer
            %s484 = sadd.s32 1, %s480
          $region90: #{cnn_forward.1} parent=83 // loop_footer_branch
            %479 = sbr.rel target = $region86
          $region91: #{cnn_forward.1} parent=83 // loop_exit
            _
        $region84: #{cnn_forward.1} parent=75 // pred_fallthru
          _
        // Predicated region
        $region107: #{cnn_forward.1} parent=75 // pred_check
          _
        $region108: #{cnn_forward.1} parent=75 // pred_check_branch
          %796 = sbr.rel (0) target = $region110
        $region109: #{cnn_forward.1} parent=75 // pred_region
          %797 = vsyncadd [#allocation6], 18432
        $region110: #{cnn_forward.1} parent=75 // pred_fallthru
          _
        %v798 = vld [vmem:[%s467] sm:$0xff]
        %v799 = vld [vmem:[%s467 + $0x8] sm:$0xff]
        %v800 = vld [vmem:[%s467 + $0x10] sm:$0xff]
        %v801 = vld [vmem:[%s467 + $0x18] sm:$0xff]
        %v802 = vld [vmem:[%s467 + $0x20] sm:$0xff]
        %v803 = vld [vmem:[%s467 + $0x28] sm:$0xff]
        %v804 = vld [vmem:[%s467 + $0x30] sm:$0xff]
        %v805 = vld [vmem:[%s467 + $0x38] sm:$0xff]
        %v806 = vld [vmem:[%s467 + $0x40] sm:$0xff]
        %v807 = vld [vmem:[%s467 + $0x48] sm:$0xff]
        %v808 = vld [vmem:[%s467 + $0x50] sm:$0xff]
        %v809 = vld [vmem:[%s467 + $0x58] sm:$0xff]
        %v810 = vld [vmem:[%s467 + $0x60] sm:$0xff]
        %v811 = vld [vmem:[%s467 + $0x68] sm:$0xff]
        %v812 = vld [vmem:[%s467 + $0x70] sm:$0xff]
        %v813 = vld [vmem:[%s467 + $0x78] sm:$0xff]
        %v814 = vld [vmem:[%s467 + $0x80] sm:$0xff]
        %v815 = vld [vmem:[%s467 + $0x88] sm:$0xff]
        %v816 = vld [vmem:[%s467 + $0x90] sm:$0xff]
        %v817 = vld [vmem:[%s467 + $0x98] sm:$0xff]
        %v818 = vld [vmem:[%s467 + $0xa0] sm:$0xff]
        %v819 = vld [vmem:[%s467 + $0xa8] sm:$0xff]
        %v820 = vld [vmem:[%s467 + $0xb0] sm:$0xff]
        %v821 = vld [vmem:[%s467 + $0xb8] sm:$0xff]
        %v822 = vld [vmem:[%s467 + $0xc0] sm:$0xff]
        %v823 = vld [vmem:[%s467 + $0xc8] sm:$0xff]
        %v824 = vld [vmem:[%s467 + $0xd0] sm:$0xff]
        %v825 = vld [vmem:[%s467 + $0xd8] sm:$0xff]
        %v826 = vld [vmem:[%s467 + $0xe0] sm:$0xff]
        %v827 = vld [vmem:[%s467 + $0xe8] sm:$0xff]
        %v828 = vld [vmem:[%s467 + $0xf0] sm:$0xff]
        %v829 = vld [vmem:[%s467 + $0xf8] sm:$0xff]
        %v830 = vld [vmem:[%s467 + $0x100] sm:$0xff]
        %v831 = vld [vmem:[%s467 + $0x108] sm:$0xff]
        %v832 = vld [vmem:[%s467 + $0x110] sm:$0xff]
        %v833 = vld [vmem:[%s467 + $0x118] sm:$0xff]
        %v834 = vld [vmem:[%s467 + $0x120] sm:$0xff]
        %v835 = vld [vmem:[%s467 + $0x128] sm:$0xff]
        %v836 = vld [vmem:[%s467 + $0x130] sm:$0xff]
        %v837 = vld [vmem:[%s467 + $0x138] sm:$0x7f]
        %v838 = vld [vmem:[%s467 + $0x1] sm:$0xff]
        %v839 = vld [vmem:[%s467 + $0x9] sm:$0xff]
        %v840 = vld [vmem:[%s467 + $0x11] sm:$0xff]
        %v841 = vld [vmem:[%s467 + $0x19] sm:$0xff]
        %v842 = vld [vmem:[%s467 + $0x21] sm:$0xff]
        %v843 = vld [vmem:[%s467 + $0x29] sm:$0xff]
        %v844 = vld [vmem:[%s467 + $0x31] sm:$0xff]
        %v845 = vld [vmem:[%s467 + $0x39] sm:$0xff]
        %v846 = vld [vmem:[%s467 + $0x41] sm:$0xff]
        %v847 = vld [vmem:[%s467 + $0x49] sm:$0xff]
        %v848 = vld [vmem:[%s467 + $0x51] sm:$0xff]
        %v849 = vld [vmem:[%s467 + $0x59] sm:$0xff]
        %v850 = vld [vmem:[%s467 + $0x61] sm:$0xff]
        %v851 = vld [vmem:[%s467 + $0x69] sm:$0xff]
        %v852 = vld [vmem:[%s467 + $0x71] sm:$0xff]
        %v853 = vld [vmem:[%s467 + $0x79] sm:$0xff]
        %v854 = vld [vmem:[%s467 + $0x81] sm:$0xff]
        %v855 = vld [vmem:[%s467 + $0x89] sm:$0xff]
        %v856 = vld [vmem:[%s467 + $0x91] sm:$0xff]
        %v857 = vld [vmem:[%s467 + $0x99] sm:$0xff]
        %v858 = vld [vmem:[%s467 + $0xa1] sm:$0xff]
        %v859 = vld [vmem:[%s467 + $0xa9] sm:$0xff]
        %v860 = vld [vmem:[%s467 + $0xb1] sm:$0xff]
        %v861 = vld [vmem:[%s467 + $0xb9] sm:$0xff]
        %v862 = vld [vmem:[%s467 + $0xc1] sm:$0xff]
        %v863 = vld [vmem:[%s467 + $0xc9] sm:$0xff]
        %v864 = vld [vmem:[%s467 + $0xd1] sm:$0xff]
        %v865 = vld [vmem:[%s467 + $0xd9] sm:$0xff]
        %v866 = vld [vmem:[%s467 + $0xe1] sm:$0xff]
        %v867 = vld [vmem:[%s467 + $0xe9] sm:$0xff]
        %v868 = vld [vmem:[%s467 + $0xf1] sm:$0xff]
        %v869 = vld [vmem:[%s467 + $0xf9] sm:$0xff]
        %v870 = vld [vmem:[%s467 + $0x101] sm:$0xff]
        %v871 = vld [vmem:[%s467 + $0x109] sm:$0xff]
        %v872 = vld [vmem:[%s467 + $0x111] sm:$0xff]
        %v873 = vld [vmem:[%s467 + $0x119] sm:$0xff]
        %v874 = vld [vmem:[%s467 + $0x121] sm:$0xff]
        %v875 = vld [vmem:[%s467 + $0x129] sm:$0xff]
        %v876 = vld [vmem:[%s467 + $0x131] sm:$0xff]
        %v877 = vld [vmem:[%s467 + $0x139] sm:$0x7f]
        %v878 = vld [vmem:[%s1] sm:$0x1]
        %v879 = vlaneseq
        %v880 = vshrl.u32 %v879, 7
        %v881 = vsub.s32 0, %v880
        %v882 = vrot.slane %v878, %v881
        %v883 = vmul.f32 %v798, %v882
        %v884 = vmul.f32 %v799, %v882
        %v885 = vmul.f32 %v800, %v882
        %v886 = vmul.f32 %v801, %v882
        %v887 = vmul.f32 %v802, %v882
        %v888 = vmul.f32 %v803, %v882
        %v889 = vmul.f32 %v804, %v882
        %v890 = vmul.f32 %v805, %v882
        %v891 = vmul.f32 %v806, %v882
        %v892 = vmul.f32 %v807, %v882
        %v893 = vmul.f32 %v808, %v882
        %v894 = vmul.f32 %v809, %v882
        %v895 = vmul.f32 %v810, %v882
        %v896 = vmul.f32 %v811, %v882
        %v897 = vmul.f32 %v812, %v882
        %v898 = vmul.f32 %v813, %v882
        %v899 = vmul.f32 %v814, %v882
        %v900 = vmul.f32 %v815, %v882
        %v901 = vmul.f32 %v816, %v882
        %v902 = vmul.f32 %v817, %v882
        %v903 = vmul.f32 %v818, %v882
        %v904 = vmul.f32 %v819, %v882
        %v905 = vmul.f32 %v820, %v882
        %v906 = vmul.f32 %v821, %v882
        %v907 = vmul.f32 %v822, %v882
        %v908 = vmul.f32 %v823, %v882
        %v909 = vmul.f32 %v824, %v882
        %v910 = vmul.f32 %v825, %v882
        %v911 = vmul.f32 %v826, %v882
        %v912 = vmul.f32 %v827, %v882
        %v913 = vmul.f32 %v828, %v882
        %v914 = vmul.f32 %v829, %v882
        %v915 = vmul.f32 %v830, %v882
        %v916 = vmul.f32 %v831, %v882
        %v917 = vmul.f32 %v832, %v882
        %v918 = vmul.f32 %v833, %v882
        %v919 = vmul.f32 %v834, %v882
        %v920 = vmul.f32 %v835, %v882
        %v921 = vmul.f32 %v836, %v882
        %v922 = vmul.f32 %v837, %v882
        %v923 = vld [vmem:[%s1 + $0x1] sm:$0x1]
        %v924 = vlaneseq
        %v925 = vshrl.u32 %v924, 7
        %v926 = vsub.s32 0, %v925
        %v927 = vrot.slane %v923, %v926
        %v928 = vmul.f32 %v838, %v927
        %v929 = vmul.f32 %v839, %v927
        %v930 = vmul.f32 %v840, %v927
        %v931 = vmul.f32 %v841, %v927
        %v932 = vmul.f32 %v842, %v927
        %v933 = vmul.f32 %v843, %v927
        %v934 = vmul.f32 %v844, %v927
        %v935 = vmul.f32 %v845, %v927
        %v936 = vmul.f32 %v846, %v927
        %v937 = vmul.f32 %v847, %v927
        %v938 = vmul.f32 %v848, %v927
        %v939 = vmul.f32 %v849, %v927
        %v940 = vmul.f32 %v850, %v927
        %v941 = vmul.f32 %v851, %v927
        %v942 = vmul.f32 %v852, %v927
        %v943 = vmul.f32 %v853, %v927
        %v944 = vmul.f32 %v854, %v927
        %v945 = vmul.f32 %v855, %v927
        %v946 = vmul.f32 %v856, %v927
        %v947 = vmul.f32 %v857, %v927
        %v948 = vmul.f32 %v858, %v927
        %v949 = vmul.f32 %v859, %v927
        %v950 = vmul.f32 %v860, %v927
        %v951 = vmul.f32 %v861, %v927
        %v952 = vmul.f32 %v862, %v927
        %v953 = vmul.f32 %v863, %v927
        %v954 = vmul.f32 %v864, %v927
        %v955 = vmul.f32 %v865, %v927
        %v956 = vmul.f32 %v866, %v927
        %v957 = vmul.f32 %v867, %v927
        %v958 = vmul.f32 %v868, %v927
        %v959 = vmul.f32 %v869, %v927
        %v960 = vmul.f32 %v870, %v927
        %v961 = vmul.f32 %v871, %v927
        %v962 = vmul.f32 %v872, %v927
        %v963 = vmul.f32 %v873, %v927
        %v964 = vmul.f32 %v874, %v927
        %v965 = vmul.f32 %v875, %v927
        %v966 = vmul.f32 %v876, %v927
        %v967 = vmul.f32 %v877, %v927
        %v968 = vadd.f32 %v883, %v928
        %v969 = vadd.f32 %v884, %v929
        %v970 = vadd.f32 %v885, %v930
        %v971 = vadd.f32 %v886, %v931
        %v972 = vadd.f32 %v887, %v932
        %v973 = vadd.f32 %v888, %v933
        %v974 = vadd.f32 %v889, %v934
        %v975 = vadd.f32 %v890, %v935
        %v976 = vadd.f32 %v891, %v936
        %v977 = vadd.f32 %v892, %v937
        %v978 = vadd.f32 %v893, %v938
        %v979 = vadd.f32 %v894, %v939
        %v980 = vadd.f32 %v895, %v940
        %v981 = vadd.f32 %v896, %v941
        %v982 = vadd.f32 %v897, %v942
        %v983 = vadd.f32 %v898, %v943
        %v984 = vadd.f32 %v899, %v944
        %v985 = vadd.f32 %v900, %v945
        %v986 = vadd.f32 %v901, %v946
        %v987 = vadd.f32 %v902, %v947
        %v988 = vadd.f32 %v903, %v948
        %v989 = vadd.f32 %v904, %v949
        %v990 = vadd.f32 %v905, %v950
        %v991 = vadd.f32 %v906, %v951
        %v992 = vadd.f32 %v907, %v952
        %v993 = vadd.f32 %v908, %v953
        %v994 = vadd.f32 %v909, %v954
        %v995 = vadd.f32 %v910, %v955
        %v996 = vadd.f32 %v911, %v956
        %v997 = vadd.f32 %v912, %v957
        %v998 = vadd.f32 %v913, %v958
        %v999 = vadd.f32 %v914, %v959
        %v1000 = vadd.f32 %v915, %v960
        %v1001 = vadd.f32 %v916, %v961
        %v1002 = vadd.f32 %v917, %v962
        %v1003 = vadd.f32 %v918, %v963
        %v1004 = vadd.f32 %v919, %v964
        %v1005 = vadd.f32 %v920, %v965
        %v1006 = vadd.f32 %v921, %v966
        %v1007 = vadd.f32 %v922, %v967
        %v1008 = vld [vmem:[%s2] sm:$0x1]
        %v1010 = vlaneseq
        %v1011 = vshrl.u32 %v1010, 7
        %v1012 = vsub.s32 0, %v1011
        %v1013 = vrot.slane %v1008, %v1012
        %v1015 = vadd.f32 %v968, %v1013
        %v1016 = vadd.f32 %v969, %v1013
        %v1017 = vadd.f32 %v970, %v1013
        %v1018 = vadd.f32 %v971, %v1013
        %v1019 = vadd.f32 %v972, %v1013
        %v1020 = vadd.f32 %v973, %v1013
        %v1021 = vadd.f32 %v974, %v1013
        %v1022 = vadd.f32 %v975, %v1013
        %v1023 = vadd.f32 %v976, %v1013
        %v1024 = vadd.f32 %v977, %v1013
        %v1025 = vadd.f32 %v978, %v1013
        %v1026 = vadd.f32 %v979, %v1013
        %v1027 = vadd.f32 %v980, %v1013
        %v1028 = vadd.f32 %v981, %v1013
        %v1029 = vadd.f32 %v982, %v1013
        %v1030 = vadd.f32 %v983, %v1013
        %v1031 = vadd.f32 %v984, %v1013
        %v1032 = vadd.f32 %v985, %v1013
        %v1033 = vadd.f32 %v986, %v1013
        %v1034 = vadd.f32 %v987, %v1013
        %v1035 = vadd.f32 %v988, %v1013
        %v1036 = vadd.f32 %v989, %v1013
        %v1037 = vadd.f32 %v990, %v1013
        %v1038 = vadd.f32 %v991, %v1013
        %v1039 = vadd.f32 %v992, %v1013
        %v1040 = vadd.f32 %v993, %v1013
        %v1041 = vadd.f32 %v994, %v1013
        %v1042 = vadd.f32 %v995, %v1013
        %v1043 = vadd.f32 %v996, %v1013
        %v1044 = vadd.f32 %v997, %v1013
        %v1045 = vadd.f32 %v998, %v1013
        %v1046 = vadd.f32 %v999, %v1013
        %v1047 = vadd.f32 %v1000, %v1013
        %v1048 = vadd.f32 %v1001, %v1013
        %v1049 = vadd.f32 %v1002, %v1013
        %v1050 = vadd.f32 %v1003, %v1013
        %v1051 = vadd.f32 %v1004, %v1013
        %v1052 = vadd.f32 %v1005, %v1013
        %v1053 = vadd.f32 %v1006, %v1013
        %v1054 = vadd.f32 %v1007, %v1013
        %vm1095 = vcmask 1046528
        %v1096 = vrot.slane %v1015, 1
        %v1097 = vrot.slane %v1016, 1
        %v1098 = vsel %vm1095, %v1096, %v1097
        %v1099 = vrot.slane %v1017, 1
        %v1100 = vsel %vm1095, %v1097, %v1099
        %v1101 = vrot.slane %v1018, 1
        %v1102 = vsel %vm1095, %v1099, %v1101
        %v1103 = vrot.slane %v1019, 1
        %v1104 = vsel %vm1095, %v1101, %v1103
        %v1105 = vrot.slane %v1020, 1
        %v1106 = vsel %vm1095, %v1103, %v1105
        %v1107 = vrot.slane %v1021, 1
        %v1108 = vsel %vm1095, %v1105, %v1107
        %v1109 = vrot.slane %v1022, 1
        %v1110 = vsel %vm1095, %v1107, %v1109
        %v1111 = vrot.slane %v1023, 1
        %v1112 = vsel %vm1095, %v1109, %v1111
        %v1113 = vrot.slane %v1024, 1
        %v1114 = vsel %vm1095, %v1111, %v1113
        %v1115 = vrot.slane %v1025, 1
        %v1116 = vsel %vm1095, %v1113, %v1115
        %v1117 = vrot.slane %v1026, 1
        %v1118 = vsel %vm1095, %v1115, %v1117
        %v1119 = vrot.slane %v1027, 1
        %v1120 = vsel %vm1095, %v1117, %v1119
        %v1121 = vrot.slane %v1028, 1
        %v1122 = vsel %vm1095, %v1119, %v1121
        %v1123 = vrot.slane %v1029, 1
        %v1124 = vsel %vm1095, %v1121, %v1123
        %v1125 = vrot.slane %v1030, 1
        %v1126 = vsel %vm1095, %v1123, %v1125
        %v1127 = vrot.slane %v1031, 1
        %v1128 = vsel %vm1095, %v1125, %v1127
        %v1129 = vrot.slane %v1032, 1
        %v1130 = vsel %vm1095, %v1127, %v1129
        %v1131 = vrot.slane %v1033, 1
        %v1132 = vsel %vm1095, %v1129, %v1131
        %v1133 = vrot.slane %v1034, 1
        %v1134 = vsel %vm1095, %v1131, %v1133
        %v1135 = vrot.slane %v1035, 1
        %v1136 = vsel %vm1095, %v1133, %v1135
        %v1137 = vrot.slane %v1036, 1
        %v1138 = vsel %vm1095, %v1135, %v1137
        %v1139 = vrot.slane %v1037, 1
        %v1140 = vsel %vm1095, %v1137, %v1139
        %v1141 = vrot.slane %v1038, 1
        %v1142 = vsel %vm1095, %v1139, %v1141
        %v1143 = vrot.slane %v1039, 1
        %v1144 = vsel %vm1095, %v1141, %v1143
        %v1145 = vrot.slane %v1040, 1
        %v1146 = vsel %vm1095, %v1143, %v1145
        %v1147 = vrot.slane %v1041, 1
        %v1148 = vsel %vm1095, %v1145, %v1147
        %v1149 = vrot.slane %v1042, 1
        %v1150 = vsel %vm1095, %v1147, %v1149
        %v1151 = vrot.slane %v1043, 1
        %v1152 = vsel %vm1095, %v1149, %v1151
        %v1153 = vrot.slane %v1044, 1
        %v1154 = vsel %vm1095, %v1151, %v1153
        %v1155 = vrot.slane %v1045, 1
        %v1156 = vsel %vm1095, %v1153, %v1155
        %v1157 = vrot.slane %v1046, 1
        %v1158 = vsel %vm1095, %v1155, %v1157
        %v1159 = vrot.slane %v1047, 1
        %v1160 = vsel %vm1095, %v1157, %v1159
        %v1161 = vrot.slane %v1048, 1
        %v1162 = vsel %vm1095, %v1159, %v1161
        %v1163 = vrot.slane %v1049, 1
        %v1164 = vsel %vm1095, %v1161, %v1163
        %v1165 = vrot.slane %v1050, 1
        %v1166 = vsel %vm1095, %v1163, %v1165
        %v1167 = vrot.slane %v1051, 1
        %v1168 = vsel %vm1095, %v1165, %v1167
        %v1169 = vrot.slane %v1052, 1
        %v1170 = vsel %vm1095, %v1167, %v1169
        %v1171 = vrot.slane %v1053, 1
        %v1172 = vsel %vm1095, %v1169, %v1171
        %v1173 = vrot.slane %v1054, 1
        %v1174 = vsel %vm1095, %v1171, %v1173
        %1175 = vrot.lane.b32.xlu0 %v1098, 32
        %v1176 = vpop.permute.xlu0 %1175
        %1177 = vrot.lane.b32.xlu0 %v1100, 32
        %v1178 = vpop.permute.xlu0 %1177
        %1179 = vrot.lane.b32.xlu0 %v1102, 32
        %v1180 = vpop.permute.xlu0 %1179
        %1181 = vrot.lane.b32.xlu0 %v1104, 32
        %v1182 = vpop.permute.xlu0 %1181
        %1183 = vrot.lane.b32.xlu0 %v1106, 32
        %v1184 = vpop.permute.xlu0 %1183
        %1185 = vrot.lane.b32.xlu0 %v1108, 32
        %v1186 = vpop.permute.xlu0 %1185
        %1187 = vrot.lane.b32.xlu0 %v1110, 32
        %v1188 = vpop.permute.xlu0 %1187
        %1189 = vrot.lane.b32.xlu0 %v1112, 32
        %v1190 = vpop.permute.xlu0 %1189
        %1191 = vrot.lane.b32.xlu0 %v1114, 32
        %v1192 = vpop.permute.xlu0 %1191
        %1193 = vrot.lane.b32.xlu0 %v1116, 32
        %v1194 = vpop.permute.xlu0 %1193
        %1195 = vrot.lane.b32.xlu0 %v1118, 32
        %v1196 = vpop.permute.xlu0 %1195
        %1197 = vrot.lane.b32.xlu0 %v1120, 32
        %v1198 = vpop.permute.xlu0 %1197
        %1199 = vrot.lane.b32.xlu0 %v1122, 32
        %v1200 = vpop.permute.xlu0 %1199
        %1201 = vrot.lane.b32.xlu0 %v1124, 32
        %v1202 = vpop.permute.xlu0 %1201
        %1203 = vrot.lane.b32.xlu0 %v1126, 32
        %v1204 = vpop.permute.xlu0 %1203
        %1205 = vrot.lane.b32.xlu0 %v1128, 32
        %v1206 = vpop.permute.xlu0 %1205
        %1207 = vrot.lane.b32.xlu0 %v1130, 32
        %v1208 = vpop.permute.xlu0 %1207
        %1209 = vrot.lane.b32.xlu0 %v1132, 32
        %v1210 = vpop.permute.xlu0 %1209
        %1211 = vrot.lane.b32.xlu0 %v1134, 32
        %v1212 = vpop.permute.xlu0 %1211
        %1213 = vrot.lane.b32.xlu0 %v1136, 32
        %v1214 = vpop.permute.xlu0 %1213
        %1215 = vrot.lane.b32.xlu0 %v1138, 32
        %v1216 = vpop.permute.xlu0 %1215
        %1217 = vrot.lane.b32.xlu0 %v1140, 32
        %v1218 = vpop.permute.xlu0 %1217
        %1219 = vrot.lane.b32.xlu0 %v1142, 32
        %v1220 = vpop.permute.xlu0 %1219
        %1221 = vrot.lane.b32.xlu0 %v1144, 32
        %v1222 = vpop.permute.xlu0 %1221
        %1223 = vrot.lane.b32.xlu0 %v1146, 32
        %v1224 = vpop.permute.xlu0 %1223
        %1225 = vrot.lane.b32.xlu0 %v1148, 32
        %v1226 = vpop.permute.xlu0 %1225
        %1227 = vrot.lane.b32.xlu0 %v1150, 32
        %v1228 = vpop.permute.xlu0 %1227
        %1229 = vrot.lane.b32.xlu0 %v1152, 32
        %v1230 = vpop.permute.xlu0 %1229
        %1231 = vrot.lane.b32.xlu0 %v1154, 32
        %v1232 = vpop.permute.xlu0 %1231
        %1233 = vrot.lane.b32.xlu0 %v1156, 32
        %v1234 = vpop.permute.xlu0 %1233
        %1235 = vrot.lane.b32.xlu0 %v1158, 32
        %v1236 = vpop.permute.xlu0 %1235
        %1237 = vrot.lane.b32.xlu0 %v1160, 32
        %v1238 = vpop.permute.xlu0 %1237
        %1239 = vrot.lane.b32.xlu0 %v1162, 32
        %v1240 = vpop.permute.xlu0 %1239
        %1241 = vrot.lane.b32.xlu0 %v1164, 32
        %v1242 = vpop.permute.xlu0 %1241
        %1243 = vrot.lane.b32.xlu0 %v1166, 32
        %v1244 = vpop.permute.xlu0 %1243
        %1245 = vrot.lane.b32.xlu0 %v1168, 32
        %v1246 = vpop.permute.xlu0 %1245
        %1247 = vrot.lane.b32.xlu0 %v1170, 32
        %v1248 = vpop.permute.xlu0 %1247
        %1249 = vrot.lane.b32.xlu0 %v1172, 32
        %v1250 = vpop.permute.xlu0 %1249
        %1251 = vrot.lane.b32.xlu0 %v1174, 32
        %v1252 = vpop.permute.xlu0 %1251
        %1253 = vrot.lane.b32.xlu0 %v1173, 32
        %v1254 = vpop.permute.xlu0 %1253
        %vm1295 = vcmask 261120
        %v1296 = vsel %vm1295, %v1015, %v1176
        %v1297 = vsel %vm1295, %v1016, %v1178
        %v1298 = vsel %vm1295, %v1017, %v1180
        %v1299 = vsel %vm1295, %v1018, %v1182
        %v1300 = vsel %vm1295, %v1019, %v1184
        %v1301 = vsel %vm1295, %v1020, %v1186
        %v1302 = vsel %vm1295, %v1021, %v1188
        %v1303 = vsel %vm1295, %v1022, %v1190
        %v1304 = vsel %vm1295, %v1023, %v1192
        %v1305 = vsel %vm1295, %v1024, %v1194
        %v1306 = vsel %vm1295, %v1025, %v1196
        %v1307 = vsel %vm1295, %v1026, %v1198
        %v1308 = vsel %vm1295, %v1027, %v1200
        %v1309 = vsel %vm1295, %v1028, %v1202
        %v1310 = vsel %vm1295, %v1029, %v1204
        %v1311 = vsel %vm1295, %v1030, %v1206
        %v1312 = vsel %vm1295, %v1031, %v1208
        %v1313 = vsel %vm1295, %v1032, %v1210
        %v1314 = vsel %vm1295, %v1033, %v1212
        %v1315 = vsel %vm1295, %v1034, %v1214
        %v1316 = vsel %vm1295, %v1035, %v1216
        %v1317 = vsel %vm1295, %v1036, %v1218
        %v1318 = vsel %vm1295, %v1037, %v1220
        %v1319 = vsel %vm1295, %v1038, %v1222
        %v1320 = vsel %vm1295, %v1039, %v1224
        %v1321 = vsel %vm1295, %v1040, %v1226
        %v1322 = vsel %vm1295, %v1041, %v1228
        %v1323 = vsel %vm1295, %v1042, %v1230
        %v1324 = vsel %vm1295, %v1043, %v1232
        %v1325 = vsel %vm1295, %v1044, %v1234
        %v1326 = vsel %vm1295, %v1045, %v1236
        %v1327 = vsel %vm1295, %v1046, %v1238
        %v1328 = vsel %vm1295, %v1047, %v1240
        %v1329 = vsel %vm1295, %v1048, %v1242
        %v1330 = vsel %vm1295, %v1049, %v1244
        %v1331 = vsel %vm1295, %v1050, %v1246
        %v1332 = vsel %vm1295, %v1051, %v1248
        %v1333 = vsel %vm1295, %v1052, %v1250
        %v1334 = vsel %vm1295, %v1053, %v1252
        %v1335 = vsel %vm1295, %v1054, %v1254
        %v1336 = vpack.c.bf16 %v1297, %v1296
        %v1337 = vpack.c.bf16 %v1299, %v1298
        %v1338 = vpack.c.bf16 %v1301, %v1300
        %v1339 = vpack.c.bf16 %v1303, %v1302
        %v1340 = vpack.c.bf16 %v1305, %v1304
        %v1341 = vpack.c.bf16 %v1307, %v1306
        %v1342 = vpack.c.bf16 %v1309, %v1308
        %v1343 = vpack.c.bf16 %v1311, %v1310
        %v1344 = vpack.c.bf16 %v1313, %v1312
        %v1345 = vpack.c.bf16 %v1315, %v1314
        %v1346 = vpack.c.bf16 %v1317, %v1316
        %v1347 = vpack.c.bf16 %v1319, %v1318
        %v1348 = vpack.c.bf16 %v1321, %v1320
        %v1349 = vpack.c.bf16 %v1323, %v1322
        %v1350 = vpack.c.bf16 %v1325, %v1324
        %v1351 = vpack.c.bf16 %v1327, %v1326
        %v1352 = vpack.c.bf16 %v1329, %v1328
        %v1353 = vpack.c.bf16 %v1331, %v1330
        %v1354 = vpack.c.bf16 %v1333, %v1332
        %v1355 = vpack.c.bf16 %v1335, %v1334
        %v1356 = vld [vmem:[%s3] sm:$0xf]
        %v1357 = vld [vmem:[%s3 + $0x4] sm:$0xf]
        %v1358 = vld [vmem:[%s3 + $0x8] sm:$0xf]
        %v1359 = vld [vmem:[%s3 + $0xc] sm:$0xf]
        %v1360 = vld [vmem:[%s3 + $0x10] sm:$0xf]
        %v1361 = vld [vmem:[%s3 + $0x14] sm:$0xf]
        %v1362 = vld [vmem:[%s3 + $0x18] sm:$0xf]
        %v1363 = vld [vmem:[%s3 + $0x1c] sm:$0xf]
        %v1364 = vld [vmem:[%s4] sm:$0x1]
        %v1366 = vlaneseq
        %v1367 = vshrl.u32 %v1366, 7
        %v1368 = vsub.s32 0, %v1367
        %v1369 = vrot.slane %v1364, %v1368
        %v1379 = vunpack.c.l.b16 %v1356
        %v1380 = vunpack.c.l.b16 %v1357
        %v1381 = vunpack.c.l.b16 %v1358
        %v1382 = vunpack.c.l.b16 %v1359
        %v1383 = vunpack.c.l.b16 %v1360
        %v1384 = vunpack.c.l.b16 %v1361
        %v1385 = vunpack.c.l.b16 %v1362
        %v1386 = vunpack.c.l.b16 %v1363
        %v1387 = vpack.c.b16 %v1380, %v1379
        %v1388 = vpack.c.b16 %v1382, %v1381
        %v1389 = vpack.c.b16 %v1384, %v1383
        %v1390 = vpack.c.b16 %v1386, %v1385
        %vm1395 = vcmask 523264
        %v1397 = vsel %vm1395, %v1336, 0
        %v1400 = vsel %vm1395, %v1337, 0
        %v1403 = vsel %vm1395, %v1338, 0
        %v1406 = vsel %vm1395, %v1339, 0
        %v1409 = vsel %vm1395, %v1340, 0
        %v1412 = vsel %vm1395, %v1341, 0
        %v1415 = vsel %vm1395, %v1342, 0
        %v1418 = vsel %vm1395, %v1343, 0
        %v1421 = vsel %vm1395, %v1344, 0
        %v1424 = vsel %vm1395, %v1345, 0
        %v1427 = vsel %vm1395, %v1346, 0
        %v1430 = vsel %vm1395, %v1347, 0
        %v1433 = vsel %vm1395, %v1348, 0
        %v1436 = vsel %vm1395, %v1349, 0
        %v1439 = vsel %vm1395, %v1350, 0
        %v1442 = vsel %vm1395, %v1351, 0
        %v1445 = vsel %vm1395, %v1352, 0
        %v1448 = vsel %vm1395, %v1353, 0
        %v1451 = vsel %vm1395, %v1354, 0
        %v1454 = vsel %vm1395, %v1355, 0
        %1456 = vmatprep.subr.bf16.mxu0 0
        %1457 = vmatpush1.bf16.msra.mxu0 %v1387
        %1458 = vmatprep.subr.bf16.mxu0 0
        %1459 = vmatpush1.bf16.msra.mxu0 %v1388
        %1460 = vmatprep.subr.bf16.mxu0 0
        %1461 = vmatpush1.bf16.msra.mxu0 %v1389
        %1462 = vmatprep.subr.bf16.mxu0 0
        %1463 = vmatpush1.bf16.msra.mxu0 %v1390
        %1464 = vmatprep.subr.bf16.mxu0 0
        %1465 = vmatpush1.bf16.msra.mxu0 0
        %1466 = vmatprep.subr.bf16.mxu0 0
        %1467 = vmatpush1.bf16.msra.mxu0 0
        %1468 = vmatprep.subr.bf16.mxu0 0
        %1469 = vmatpush1.bf16.msra.mxu0 0
        %1470 = vmatprep.subr.bf16.mxu0 0
        %1471 = vmatpush1.bf16.msra.mxu0 0
        %1472 = vmatprep.subr.bf16.mxu0 0
        %1473 = vmatpush1.bf16.msra.mxu0 0
        %1474 = vmatprep.subr.bf16.mxu0 0
        %1475 = vmatpush1.bf16.msra.mxu0 0
        %1476 = vmatprep.subr.bf16.mxu0 0
        %1477 = vmatpush1.bf16.msra.mxu0 0
        %1478 = vmatprep.subr.bf16.mxu0 0
        %1479 = vmatpush1.bf16.msra.mxu0 0
        %1480 = vmatprep.subr.bf16.mxu0 0
        %1481 = vmatpush1.bf16.msra.mxu0 0
        %1482 = vmatprep.subr.bf16.mxu0 0
        %1483 = vmatpush1.bf16.msra.mxu0 0
        %1484 = vmatprep.subr.bf16.mxu0 0
        %1485 = vmatpush1.bf16.msra.mxu0 0
        %1486 = vmatprep.subr.bf16.mxu0 0
        %1487 = vmatpush1.bf16.msra.mxu0 0
        %1488 = vmatprep.mubr.bf16.mxu0 0
        %1489 = vmatmul.mubr.bf16.gmra.mrb[0].mxu0 %v1397
        %v1490 = vpop.f32.mrb[0].mxu0
        %v1491 = vadd.f32 %v1369, %v1490
        %v1492 = vpop.f32.mrb[0].mxu0
        %v1493 = vpop.f32.mrb[0].mxu0
        %v1494 = vadd.f32 %v1369, %v1493
        %v1495 = vpop.f32.mrb[0].mxu0
        %1496 = vmatprep.mubr.bf16.mxu0 0
        %1497 = vmatmul.mubr.bf16.gmra.mrb[0].mxu0 %v1400
        %v1498 = vpop.f32.mrb[0].mxu0
        %v1499 = vadd.f32 %v1369, %v1498
        %v1500 = vpop.f32.mrb[0].mxu0
        %v1501 = vpop.f32.mrb[0].mxu0
        %v1502 = vadd.f32 %v1369, %v1501
        %v1503 = vpop.f32.mrb[0].mxu0
        %1504 = vmatprep.mubr.bf16.mxu0 0
        %1505 = vmatmul.mubr.bf16.gmra.mrb[0].mxu0 %v1403
        %v1506 = vpop.f32.mrb[0].mxu0
        %v1507 = vadd.f32 %v1369, %v1506
        %v1508 = vpop.f32.mrb[0].mxu0
        %v1509 = vpop.f32.mrb[0].mxu0
        %v1510 = vadd.f32 %v1369, %v1509
        %v1511 = vpop.f32.mrb[0].mxu0
        %1512 = vmatprep.mubr.bf16.mxu0 0
        %1513 = vmatmul.mubr.bf16.gmra.mrb[0].mxu0 %v1406
        %v1514 = vpop.f32.mrb[0].mxu0
        %v1515 = vadd.f32 %v1369, %v1514
        %v1516 = vpop.f32.mrb[0].mxu0
        %v1517 = vpop.f32.mrb[0].mxu0
        %v1518 = vadd.f32 %v1369, %v1517
        %v1519 = vpop.f32.mrb[0].mxu0
        %1520 = vmatprep.mubr.bf16.mxu0 0
        %1521 = vmatmul.mubr.bf16.gmra.mrb[0].mxu0 %v1409
        %v1522 = vpop.f32.mrb[0].mxu0
        %v1523 = vadd.f32 %v1369, %v1522
        %v1524 = vpop.f32.mrb[0].mxu0
        %v1525 = vpop.f32.mrb[0].mxu0
        %v1526 = vadd.f32 %v1369, %v1525
        %v1527 = vpop.f32.mrb[0].mxu0
        %1528 = vmatprep.mubr.bf16.mxu0 0
        %1529 = vmatmul.mubr.bf16.gmra.mrb[0].mxu0 %v1412
        %v1530 = vpop.f32.mrb[0].mxu0
        %v1531 = vadd.f32 %v1369, %v1530
        %v1532 = vpop.f32.mrb[0].mxu0
        %v1533 = vpop.f32.mrb[0].mxu0
        %v1534 = vadd.f32 %v1369, %v1533
        %v1535 = vpop.f32.mrb[0].mxu0
        %1536 = vmatprep.mubr.bf16.mxu0 0
        %1537 = vmatmul.mubr.bf16.gmra.mrb[0].mxu0 %v1415
        %v1538 = vpop.f32.mrb[0].mxu0
        %v1539 = vadd.f32 %v1369, %v1538
        %v1540 = vpop.f32.mrb[0].mxu0
        %v1541 = vpop.f32.mrb[0].mxu0
        %v1542 = vadd.f32 %v1369, %v1541
        %v1543 = vpop.f32.mrb[0].mxu0
        %1544 = vmatprep.mubr.bf16.mxu0 0
        %1545 = vmatmul.mubr.bf16.gmra.mrb[0].mxu0 %v1418
        %v1546 = vpop.f32.mrb[0].mxu0
        %v1547 = vadd.f32 %v1369, %v1546
        %v1548 = vpop.f32.mrb[0].mxu0
        %v1549 = vpop.f32.mrb[0].mxu0
        %v1550 = vadd.f32 %v1369, %v1549
        %v1551 = vpop.f32.mrb[0].mxu0
        %1552 = vmatprep.mubr.bf16.mxu0 0
        %1553 = vmatmul.mubr.bf16.gmra.mrb[0].mxu0 %v1421
        %v1554 = vpop.f32.mrb[0].mxu0
        %v1555 = vadd.f32 %v1369, %v1554
        %v1556 = vpop.f32.mrb[0].mxu0
        %v1557 = vpop.f32.mrb[0].mxu0
        %v1558 = vadd.f32 %v1369, %v1557
        %v1559 = vpop.f32.mrb[0].mxu0
        %1560 = vmatprep.mubr.bf16.mxu0 0
        %1561 = vmatmul.mubr.bf16.gmra.mrb[0].mxu0 %v1424
        %v1562 = vpop.f32.mrb[0].mxu0
        %v1563 = vadd.f32 %v1369, %v1562
        %v1564 = vpop.f32.mrb[0].mxu0
        %v1565 = vpop.f32.mrb[0].mxu0
        %v1566 = vadd.f32 %v1369, %v1565
        %v1567 = vpop.f32.mrb[0].mxu0
        %1568 = vmatprep.mubr.bf16.mxu0 0
        %1569 = vmatmul.mubr.bf16.gmra.mrb[0].mxu0 %v1427
        %v1570 = vpop.f32.mrb[0].mxu0
        %v1571 = vadd.f32 %v1369, %v1570
        %v1572 = vpop.f32.mrb[0].mxu0
        %v1573 = vpop.f32.mrb[0].mxu0
        %v1574 = vadd.f32 %v1369, %v1573
        %v1575 = vpop.f32.mrb[0].mxu0
        %1576 = vmatprep.mubr.bf16.mxu0 0
        %1577 = vmatmul.mubr.bf16.gmra.mrb[0].mxu0 %v1430
        %v1578 = vpop.f32.mrb[0].mxu0
        %v1579 = vadd.f32 %v1369, %v1578
        %v1580 = vpop.f32.mrb[0].mxu0
        %v1581 = vpop.f32.mrb[0].mxu0
        %v1582 = vadd.f32 %v1369, %v1581
        %v1583 = vpop.f32.mrb[0].mxu0
        %1584 = vmatprep.mubr.bf16.mxu0 0
        %1585 = vmatmul.mubr.bf16.gmra.mrb[0].mxu0 %v1433
        %v1586 = vpop.f32.mrb[0].mxu0
        %v1587 = vadd.f32 %v1369, %v1586
        %v1588 = vpop.f32.mrb[0].mxu0
        %v1589 = vpop.f32.mrb[0].mxu0
        %v1590 = vadd.f32 %v1369, %v1589
        %v1591 = vpop.f32.mrb[0].mxu0
        %1592 = vmatprep.mubr.bf16.mxu0 0
        %1593 = vmatmul.mubr.bf16.gmra.mrb[0].mxu0 %v1436
        %v1594 = vpop.f32.mrb[0].mxu0
        %v1595 = vadd.f32 %v1369, %v1594
        %v1596 = vpop.f32.mrb[0].mxu0
        %v1597 = vpop.f32.mrb[0].mxu0
        %v1598 = vadd.f32 %v1369, %v1597
        %v1599 = vpop.f32.mrb[0].mxu0
        %1600 = vmatprep.mubr.bf16.mxu0 0
        %1601 = vmatmul.mubr.bf16.gmra.mrb[0].mxu0 %v1439
        %v1602 = vpop.f32.mrb[0].mxu0
        %v1603 = vadd.f32 %v1369, %v1602
        %v1604 = vpop.f32.mrb[0].mxu0
        %v1605 = vpop.f32.mrb[0].mxu0
        %v1606 = vadd.f32 %v1369, %v1605
        %v1607 = vpop.f32.mrb[0].mxu0
        %1608 = vmatprep.mubr.bf16.mxu0 0
        %1609 = vmatmul.mubr.bf16.gmra.mrb[0].mxu0 %v1442
        %v1610 = vpop.f32.mrb[0].mxu0
        %v1611 = vadd.f32 %v1369, %v1610
        %v1612 = vpop.f32.mrb[0].mxu0
        %v1613 = vpop.f32.mrb[0].mxu0
        %v1614 = vadd.f32 %v1369, %v1613
        %v1615 = vpop.f32.mrb[0].mxu0
        %1616 = vmatprep.mubr.bf16.mxu0 0
        %1617 = vmatmul.mubr.bf16.gmra.mrb[0].mxu0 %v1445
        %v1618 = vpop.f32.mrb[0].mxu0
        %v1619 = vadd.f32 %v1369, %v1618
        %v1620 = vpop.f32.mrb[0].mxu0
        %v1621 = vpop.f32.mrb[0].mxu0
        %v1622 = vadd.f32 %v1369, %v1621
        %v1623 = vpop.f32.mrb[0].mxu0
        %1624 = vmatprep.mubr.bf16.mxu0 0
        %1625 = vmatmul.mubr.bf16.gmra.mrb[0].mxu0 %v1448
        %v1626 = vpop.f32.mrb[0].mxu0
        %v1627 = vadd.f32 %v1369, %v1626
        %v1628 = vpop.f32.mrb[0].mxu0
        %v1629 = vpop.f32.mrb[0].mxu0
        %v1630 = vadd.f32 %v1369, %v1629
        %v1631 = vpop.f32.mrb[0].mxu0
        %1632 = vmatprep.mubr.bf16.mxu0 0
        %1633 = vmatmul.mubr.bf16.gmra.mrb[0].mxu0 %v1451
        %v1634 = vpop.f32.mrb[0].mxu0
        %v1635 = vadd.f32 %v1369, %v1634
        %v1636 = vpop.f32.mrb[0].mxu0
        %v1637 = vpop.f32.mrb[0].mxu0
        %v1638 = vadd.f32 %v1369, %v1637
        %v1639 = vpop.f32.mrb[0].mxu0
        %1640 = vmatprep.mubr.bf16.mxu0 0
        %1641 = vmatmul.mubr.bf16.gmra.mrb[0].mxu0 %v1454
        %v1642 = vpop.f32.mrb[0].mxu0
        %v1643 = vadd.f32 %v1369, %v1642
        %v1644 = vpop.f32.mrb[0].mxu0
        %v1645 = vpop.f32.mrb[0].mxu0
        %v1646 = vadd.f32 %v1369, %v1645
        %v1647 = vpop.f32.mrb[0].mxu0
        %1648 = vdwg.mxu0
        %1649 = vst.msk [vmem:[#allocation2] sm:$0xff] %vm1395, %v1491
        %1650 = vst.msk [vmem:[#allocation2 + $0x8] sm:$0xff] %vm1395, %v1494
        %1651 = vst.msk [vmem:[#allocation2 + $0x10] sm:$0xff] %vm1395, %v1499
        %1652 = vst.msk [vmem:[#allocation2 + $0x18] sm:$0xff] %vm1395, %v1502
        %1653 = vst.msk [vmem:[#allocation2 + $0x20] sm:$0xff] %vm1395, %v1507
        %1654 = vst.msk [vmem:[#allocation2 + $0x28] sm:$0xff] %vm1395, %v1510
        %1655 = vst.msk [vmem:[#allocation2 + $0x30] sm:$0xff] %vm1395, %v1515
        %1656 = vst.msk [vmem:[#allocation2 + $0x38] sm:$0xff] %vm1395, %v1518
        %1657 = vst.msk [vmem:[#allocation2 + $0x40] sm:$0xff] %vm1395, %v1523
        %1658 = vst.msk [vmem:[#allocation2 + $0x48] sm:$0xff] %vm1395, %v1526
        %1659 = vst.msk [vmem:[#allocation2 + $0x50] sm:$0xff] %vm1395, %v1531
        %1660 = vst.msk [vmem:[#allocation2 + $0x58] sm:$0xff] %vm1395, %v1534
        %1661 = vst.msk [vmem:[#allocation2 + $0x60] sm:$0xff] %vm1395, %v1539
        %1662 = vst.msk [vmem:[#allocation2 + $0x68] sm:$0xff] %vm1395, %v1542
        %1663 = vst.msk [vmem:[#allocation2 + $0x70] sm:$0xff] %vm1395, %v1547
        %1664 = vst.msk [vmem:[#allocation2 + $0x78] sm:$0xff] %vm1395, %v1550
        %1665 = vst.msk [vmem:[#allocation2 + $0x80] sm:$0xff] %vm1395, %v1555
        %1666 = vst.msk [vmem:[#allocation2 + $0x88] sm:$0xff] %vm1395, %v1558
        %1667 = vst.msk [vmem:[#allocation2 + $0x90] sm:$0xff] %vm1395, %v1563
        %1668 = vst.msk [vmem:[#allocation2 + $0x98] sm:$0xff] %vm1395, %v1566
        %1669 = vst.msk [vmem:[#allocation2 + $0xa0] sm:$0xff] %vm1395, %v1571
        %1670 = vst.msk [vmem:[#allocation2 + $0xa8] sm:$0xff] %vm1395, %v1574
        %1671 = vst.msk [vmem:[#allocation2 + $0xb0] sm:$0xff] %vm1395, %v1579
        %1672 = vst.msk [vmem:[#allocation2 + $0xb8] sm:$0xff] %vm1395, %v1582
        %1673 = vst.msk [vmem:[#allocation2 + $0xc0] sm:$0xff] %vm1395, %v1587
        %1674 = vst.msk [vmem:[#allocation2 + $0xc8] sm:$0xff] %vm1395, %v1590
        %1675 = vst.msk [vmem:[#allocation2 + $0xd0] sm:$0xff] %vm1395, %v1595
        %1676 = vst.msk [vmem:[#allocation2 + $0xd8] sm:$0xff] %vm1395, %v1598
        %1677 = vst.msk [vmem:[#allocation2 + $0xe0] sm:$0xff] %vm1395, %v1603
        %1678 = vst.msk [vmem:[#allocation2 + $0xe8] sm:$0xff] %vm1395, %v1606
        %1679 = vst.msk [vmem:[#allocation2 + $0xf0] sm:$0xff] %vm1395, %v1611
        %1680 = vst.msk [vmem:[#allocation2 + $0xf8] sm:$0xff] %vm1395, %v1614
        %1681 = vst.msk [vmem:[#allocation2 + $0x100] sm:$0xff] %vm1395, %v1619
        %1682 = vst.msk [vmem:[#allocation2 + $0x108] sm:$0xff] %vm1395, %v1622
        %1683 = vst.msk [vmem:[#allocation2 + $0x110] sm:$0xff] %vm1395, %v1627
        %1684 = vst.msk [vmem:[#allocation2 + $0x118] sm:$0xff] %vm1395, %v1630
        %1685 = vst.msk [vmem:[#allocation2 + $0x120] sm:$0xff] %vm1395, %v1635
        %1686 = vst.msk [vmem:[#allocation2 + $0x128] sm:$0xff] %vm1395, %v1638
        %1687 = vst.msk [vmem:[#allocation2 + $0x130] sm:$0xff] %vm1395, %v1643
        %vm1688 = vcmask 521216
        %1689 = vst.msk [vmem:[#allocation2 + $0x138] sm:$0x3f] %vm1688, %v1646
        %v1690 = vld [vmem:[#allocation2] ss:$2 sm:$0xff]
        %s1691 = scalar_lea.vmem [#allocation2], 16
        %v1692 = vld [vmem:[%s1691] ss:$2 sm:$0xff]
        %s1693 = scalar_lea.vmem [#allocation2], 32
        %v1694 = vld [vmem:[%s1693] ss:$2 sm:$0xff]
        %s1695 = scalar_lea.vmem [#allocation2], 48
        %v1696 = vld [vmem:[%s1695] ss:$2 sm:$0xff]
        %s1697 = scalar_lea.vmem [#allocation2], 64
        %v1698 = vld [vmem:[%s1697] ss:$2 sm:$0xff]
        %s1699 = scalar_lea.vmem [#allocation2], 80
        %v1700 = vld [vmem:[%s1699] ss:$2 sm:$0xff]
        %s1701 = scalar_lea.vmem [#allocation2], 96
        %v1702 = vld [vmem:[%s1701] ss:$2 sm:$0xff]
        %s1703 = scalar_lea.vmem [#allocation2], 112
        %v1704 = vld [vmem:[%s1703] ss:$2 sm:$0xff]
        %s1705 = scalar_lea.vmem [#allocation2], 128
        %v1706 = vld [vmem:[%s1705] ss:$2 sm:$0xff]
        %s1707 = scalar_lea.vmem [#allocation2], 144
        %v1708 = vld [vmem:[%s1707] ss:$2 sm:$0xff]
        %s1709 = scalar_lea.vmem [#allocation2], 160
        %v1710 = vld [vmem:[%s1709] ss:$2 sm:$0xff]
        %s1711 = scalar_lea.vmem [#allocation2], 176
        %v1712 = vld [vmem:[%s1711] ss:$2 sm:$0xff]
        %s1713 = scalar_lea.vmem [#allocation2], 192
        %v1714 = vld [vmem:[%s1713] ss:$2 sm:$0xff]
        %s1715 = scalar_lea.vmem [#allocation2], 208
        %v1716 = vld [vmem:[%s1715] ss:$2 sm:$0xff]
        %s1717 = scalar_lea.vmem [#allocation2], 224
        %v1718 = vld [vmem:[%s1717] ss:$2 sm:$0xff]
        %s1719 = scalar_lea.vmem [#allocation2], 240
        %v1720 = vld [vmem:[%s1719] ss:$2 sm:$0xff]
        %s1721 = scalar_lea.vmem [#allocation2], 256
        %v1722 = vld [vmem:[%s1721] ss:$2 sm:$0xff]
        %s1723 = scalar_lea.vmem [#allocation2], 272
        %v1724 = vld [vmem:[%s1723] ss:$2 sm:$0xff]
        %s1725 = scalar_lea.vmem [#allocation2], 288
        %v1726 = vld [vmem:[%s1725] ss:$2 sm:$0xff]
        %s1727 = scalar_lea.vmem [#allocation2], 304
        %v1728 = vld [vmem:[%s1727] ss:$2 sm:$0x3f]
        %s1729 = scalar_lea.vmem [#allocation2], 1
        %v1730 = vld [vmem:[%s1729] ss:$2 sm:$0xff]
        %s1731 = scalar_lea.vmem [#allocation2], 17
        %v1732 = vld [vmem:[%s1731] ss:$2 sm:$0xff]
        %s1733 = scalar_lea.vmem [#allocation2], 33
        %v1734 = vld [vmem:[%s1733] ss:$2 sm:$0xff]
        %s1735 = scalar_lea.vmem [#allocation2], 49
        %v1736 = vld [vmem:[%s1735] ss:$2 sm:$0xff]
        %s1737 = scalar_lea.vmem [#allocation2], 65
        %v1738 = vld [vmem:[%s1737] ss:$2 sm:$0xff]
        %s1739 = scalar_lea.vmem [#allocation2], 81
        %v1740 = vld [vmem:[%s1739] ss:$2 sm:$0xff]
        %s1741 = scalar_lea.vmem [#allocation2], 97
        %v1742 = vld [vmem:[%s1741] ss:$2 sm:$0xff]
        %s1743 = scalar_lea.vmem [#allocation2], 113
        %v1744 = vld [vmem:[%s1743] ss:$2 sm:$0xff]
        %s1745 = scalar_lea.vmem [#allocation2], 129
        %v1746 = vld [vmem:[%s1745] ss:$2 sm:$0xff]
        %s1747 = scalar_lea.vmem [#allocation2], 145
        %v1748 = vld [vmem:[%s1747] ss:$2 sm:$0xff]
        %s1749 = scalar_lea.vmem [#allocation2], 161
        %v1750 = vld [vmem:[%s1749] ss:$2 sm:$0xff]
        %s1751 = scalar_lea.vmem [#allocation2], 177
        %v1752 = vld [vmem:[%s1751] ss:$2 sm:$0xff]
        %s1753 = scalar_lea.vmem [#allocation2], 193
        %v1754 = vld [vmem:[%s1753] ss:$2 sm:$0xff]
        %s1755 = scalar_lea.vmem [#allocation2], 209
        %v1756 = vld [vmem:[%s1755] ss:$2 sm:$0xff]
        %s1757 = scalar_lea.vmem [#allocation2], 225
        %v1758 = vld [vmem:[%s1757] ss:$2 sm:$0xff]
        %s1759 = scalar_lea.vmem [#allocation2], 241
        %v1760 = vld [vmem:[%s1759] ss:$2 sm:$0xff]
        %s1761 = scalar_lea.vmem [#allocation2], 257
        %v1762 = vld [vmem:[%s1761] ss:$2 sm:$0xff]
        %s1763 = scalar_lea.vmem [#allocation2], 273
        %v1764 = vld [vmem:[%s1763] ss:$2 sm:$0xff]
        %s1765 = scalar_lea.vmem [#allocation2], 289
        %v1766 = vld [vmem:[%s1765] ss:$2 sm:$0xff]
        %s1767 = scalar_lea.vmem [#allocation2], 305
        %v1768 = vld [vmem:[%s1767] ss:$2 sm:$0x3f]
        %v1769 = vmax.f32 %v1690, %v1730
        %v1770 = vmax.f32 %v1692, %v1732
        %v1771 = vmax.f32 %v1694, %v1734
        %v1772 = vmax.f32 %v1696, %v1736
        %v1773 = vmax.f32 %v1698, %v1738
        %v1774 = vmax.f32 %v1700, %v1740
        %v1775 = vmax.f32 %v1702, %v1742
        %v1776 = vmax.f32 %v1704, %v1744
        %v1777 = vmax.f32 %v1706, %v1746
        %v1778 = vmax.f32 %v1708, %v1748
        %v1779 = vmax.f32 %v1710, %v1750
        %v1780 = vmax.f32 %v1712, %v1752
        %v1781 = vmax.f32 %v1714, %v1754
        %v1782 = vmax.f32 %v1716, %v1756
        %v1783 = vmax.f32 %v1718, %v1758
        %v1784 = vmax.f32 %v1720, %v1760
        %v1785 = vmax.f32 %v1722, %v1762
        %v1786 = vmax.f32 %v1724, %v1764
        %v1787 = vmax.f32 %v1726, %v1766
        %v1788 = vmax.f32 %v1728, %v1768
        %v1809 = vrot.slane %v1769, 1
        %v1810 = vrot.slane %v1770, 1
        %v1811 = vsel %vm1095, %v1809, %v1810
        %v1812 = vrot.slane %v1771, 1
        %v1813 = vsel %vm1095, %v1810, %v1812
        %v1814 = vrot.slane %v1772, 1
        %v1815 = vsel %vm1095, %v1812, %v1814
        %v1816 = vrot.slane %v1773, 1
        %v1817 = vsel %vm1095, %v1814, %v1816
        %v1818 = vrot.slane %v1774, 1
        %v1819 = vsel %vm1095, %v1816, %v1818
        %v1820 = vrot.slane %v1775, 1
        %v1821 = vsel %vm1095, %v1818, %v1820
        %v1822 = vrot.slane %v1776, 1
        %v1823 = vsel %vm1095, %v1820, %v1822
        %v1824 = vrot.slane %v1777, 1
        %v1825 = vsel %vm1095, %v1822, %v1824
        %v1826 = vrot.slane %v1778, 1
        %v1827 = vsel %vm1095, %v1824, %v1826
        %v1828 = vrot.slane %v1779, 1
        %v1829 = vsel %vm1095, %v1826, %v1828
        %v1830 = vrot.slane %v1780, 1
        %v1831 = vsel %vm1095, %v1828, %v1830
        %v1832 = vrot.slane %v1781, 1
        %v1833 = vsel %vm1095, %v1830, %v1832
        %v1834 = vrot.slane %v1782, 1
        %v1835 = vsel %vm1095, %v1832, %v1834
        %v1836 = vrot.slane %v1783, 1
        %v1837 = vsel %vm1095, %v1834, %v1836
        %v1838 = vrot.slane %v1784, 1
        %v1839 = vsel %vm1095, %v1836, %v1838
        %v1840 = vrot.slane %v1785, 1
        %v1841 = vsel %vm1095, %v1838, %v1840
        %v1842 = vrot.slane %v1786, 1
        %v1843 = vsel %vm1095, %v1840, %v1842
        %v1844 = vrot.slane %v1787, 1
        %v1845 = vsel %vm1095, %v1842, %v1844
        %v1846 = vrot.slane %v1788, 1
        %v1847 = vsel %vm1095, %v1844, %v1846
        %1848 = vrot.lane.b32.xlu0 %v1811, 64
        %v1849 = vpop.permute.xlu0 %1848
        %1850 = vrot.lane.b32.xlu0 %v1813, 64
        %v1851 = vpop.permute.xlu0 %1850
        %1852 = vrot.lane.b32.xlu0 %v1815, 64
        %v1853 = vpop.permute.xlu0 %1852
        %1854 = vrot.lane.b32.xlu0 %v1817, 64
        %v1855 = vpop.permute.xlu0 %1854
        %1856 = vrot.lane.b32.xlu0 %v1819, 64
        %v1857 = vpop.permute.xlu0 %1856
        %1858 = vrot.lane.b32.xlu0 %v1821, 64
        %v1859 = vpop.permute.xlu0 %1858
        %1860 = vrot.lane.b32.xlu0 %v1823, 64
        %v1861 = vpop.permute.xlu0 %1860
        %1862 = vrot.lane.b32.xlu0 %v1825, 64
        %v1863 = vpop.permute.xlu0 %1862
        %1864 = vrot.lane.b32.xlu0 %v1827, 64
        %v1865 = vpop.permute.xlu0 %1864
        %1866 = vrot.lane.b32.xlu0 %v1829, 64
        %v1867 = vpop.permute.xlu0 %1866
        %1868 = vrot.lane.b32.xlu0 %v1831, 64
        %v1869 = vpop.permute.xlu0 %1868
        %1870 = vrot.lane.b32.xlu0 %v1833, 64
        %v1871 = vpop.permute.xlu0 %1870
        %1872 = vrot.lane.b32.xlu0 %v1835, 64
        %v1873 = vpop.permute.xlu0 %1872
        %1874 = vrot.lane.b32.xlu0 %v1837, 64
        %v1875 = vpop.permute.xlu0 %1874
        %1876 = vrot.lane.b32.xlu0 %v1839, 64
        %v1877 = vpop.permute.xlu0 %1876
        %1878 = vrot.lane.b32.xlu0 %v1841, 64
        %v1879 = vpop.permute.xlu0 %1878
        %1880 = vrot.lane.b32.xlu0 %v1843, 64
        %v1881 = vpop.permute.xlu0 %1880
        %1882 = vrot.lane.b32.xlu0 %v1845, 64
        %v1883 = vpop.permute.xlu0 %1882
        %1884 = vrot.lane.b32.xlu0 %v1847, 64
        %v1885 = vpop.permute.xlu0 %1884
        %1886 = vrot.lane.b32.xlu0 %v1846, 64
        %v1887 = vpop.permute.xlu0 %1886
        %v1908 = vsel %vm1395, %v1769, %v1849
        %v1909 = vsel %vm1395, %v1770, %v1851
        %v1910 = vsel %vm1395, %v1771, %v1853
        %v1911 = vsel %vm1395, %v1772, %v1855
        %v1912 = vsel %vm1395, %v1773, %v1857
        %v1913 = vsel %vm1395, %v1774, %v1859
        %v1914 = vsel %vm1395, %v1775, %v1861
        %v1915 = vsel %vm1395, %v1776, %v1863
        %v1916 = vsel %vm1395, %v1777, %v1865
        %v1917 = vsel %vm1395, %v1778, %v1867
        %v1918 = vsel %vm1395, %v1779, %v1869
        %v1919 = vsel %vm1395, %v1780, %v1871
        %v1920 = vsel %vm1395, %v1781, %v1873
        %v1921 = vsel %vm1395, %v1782, %v1875
        %v1922 = vsel %vm1395, %v1783, %v1877
        %v1923 = vsel %vm1395, %v1784, %v1879
        %v1924 = vsel %vm1395, %v1785, %v1881
        %v1925 = vsel %vm1395, %v1786, %v1883
        %v1926 = vsel %vm1395, %v1787, %v1885
        %v1927 = vsel %vm1395, %v1788, %v1887
        %v1928 = vpack.c.bf16 %v1909, %v1908
        %v1929 = vpack.c.bf16 %v1911, %v1910
        %v1930 = vpack.c.bf16 %v1913, %v1912
        %v1931 = vpack.c.bf16 %v1915, %v1914
        %v1932 = vpack.c.bf16 %v1917, %v1916
        %v1933 = vpack.c.bf16 %v1919, %v1918
        %v1934 = vpack.c.bf16 %v1921, %v1920
        %v1935 = vpack.c.bf16 %v1923, %v1922
        %v1936 = vpack.c.bf16 %v1925, %v1924
        %v1937 = vpack.c.bf16 %v1927, %v1926
        %v1938 = vld [vmem:[%s5] sm:$0xf]
        %v1939 = vld [vmem:[%s5 + $0x4] sm:$0xf]
        %v1940 = vld [vmem:[%s5 + $0x8] sm:$0xf]
        %v1941 = vld [vmem:[%s5 + $0xc] sm:$0xf]
        %v1942 = vld [vmem:[%s5 + $0x10] sm:$0xf]
        %v1943 = vld [vmem:[%s5 + $0x14] sm:$0xf]
        %v1944 = vld [vmem:[%s5 + $0x18] sm:$0xf]
        %v1945 = vld [vmem:[%s5 + $0x1c] sm:$0xf]
        %v1946 = vld [vmem:[%s5 + $0x20] sm:$0xf]
        %v1947 = vld [vmem:[%s5 + $0x24] sm:$0xf]
        %v1948 = vld [vmem:[%s5 + $0x28] sm:$0xf]
        %v1949 = vld [vmem:[%s5 + $0x2c] sm:$0xf]
        %v1950 = vld [vmem:[%s5 + $0x30] sm:$0xf]
        %v1951 = vld [vmem:[%s5 + $0x34] sm:$0xf]
        %v1952 = vld [vmem:[%s5 + $0x38] sm:$0xf]
        %v1953 = vld [vmem:[%s5 + $0x3c] sm:$0xf]
        %v1954 = vld [vmem:[%s6] sm:$0x1]
        %v1956 = vlaneseq
        %v1957 = vshrl.u32 %v1956, 7
        %v1958 = vsub.s32 0, %v1957
        %v1959 = vrot.slane %v1954, %v1958
        %v1977 = vunpack.c.l.b16 %v1938
        %v1978 = vunpack.c.l.b16 %v1939
        %v1979 = vunpack.c.l.b16 %v1940
        %v1980 = vunpack.c.l.b16 %v1941
        %v1981 = vunpack.c.l.b16 %v1942
        %v1982 = vunpack.c.l.b16 %v1943
        %v1983 = vunpack.c.l.b16 %v1944
        %v1984 = vunpack.c.l.b16 %v1945
        %v1985 = vunpack.c.l.b16 %v1946
        %v1986 = vunpack.c.l.b16 %v1947
        %v1987 = vunpack.c.l.b16 %v1948
        %v1988 = vunpack.c.l.b16 %v1949
        %v1989 = vunpack.c.l.b16 %v1950
        %v1990 = vunpack.c.l.b16 %v1951
        %v1991 = vunpack.c.l.b16 %v1952
        %v1992 = vunpack.c.l.b16 %v1953
        %v1993 = vpack.c.b16 %v1978, %v1977
        %v1994 = vpack.c.b16 %v1980, %v1979
        %v1995 = vpack.c.b16 %v1982, %v1981
        %v1996 = vpack.c.b16 %v1984, %v1983
        %v1997 = vpack.c.b16 %v1986, %v1985
        %v1998 = vpack.c.b16 %v1988, %v1987
        %v1999 = vpack.c.b16 %v1990, %v1989
        %v2000 = vpack.c.b16 %v1992, %v1991
        %2009 = vmatprep.subr.bf16.mxu0 0
        %2010 = vmatpush1.bf16.msra.mxu0 %v1993
        %2011 = vmatprep.subr.bf16.mxu0 0
        %2012 = vmatpush1.bf16.msra.mxu0 %v1994
        %2013 = vmatprep.subr.bf16.mxu0 0
        %2014 = vmatpush1.bf16.msra.mxu0 %v1995
        %2015 = vmatprep.subr.bf16.mxu0 0
        %2016 = vmatpush1.bf16.msra.mxu0 %v1996
        %2017 = vmatprep.subr.bf16.mxu0 0
        %2018 = vmatpush1.bf16.msra.mxu0 %v1997
        %2019 = vmatprep.subr.bf16.mxu0 0
        %2020 = vmatpush1.bf16.msra.mxu0 %v1998
        %2021 = vmatprep.subr.bf16.mxu0 0
        %2022 = vmatpush1.bf16.msra.mxu0 %v1999
        %2023 = vmatprep.subr.bf16.mxu0 0
        %2024 = vmatpush1.bf16.msra.mxu0 %v2000
        %2025 = vmatprep.subr.bf16.mxu0 0
        %2026 = vmatpush1.bf16.msra.mxu0 0
        %2027 = vmatprep.subr.bf16.mxu0 0
        %2028 = vmatpush1.bf16.msra.mxu0 0
        %2029 = vmatprep.subr.bf16.mxu0 0
        %2030 = vmatpush1.bf16.msra.mxu0 0
        %2031 = vmatprep.subr.bf16.mxu0 0
        %2032 = vmatpush1.bf16.msra.mxu0 0
        %2033 = vmatprep.subr.bf16.mxu0 0
        %2034 = vmatpush1.bf16.msra.mxu0 0
        %2035 = vmatprep.subr.bf16.mxu0 0
        %2036 = vmatpush1.bf16.msra.mxu0 0
        %2037 = vmatprep.subr.bf16.mxu0 0
        %2038 = vmatpush1.bf16.msra.mxu0 0
        %2039 = vmatprep.subr.bf16.mxu0 0
        %2040 = vmatpush1.bf16.msra.mxu0 0
        %2041 = vmatprep.mubr.bf16.mxu0 0
        %2042 = vmatmul.mubr.bf16.gmra.mrb[0].mxu0 %v1928
        %v2043 = vpop.f32.mrb[0].mxu0
        %v2044 = vadd.f32 %v1959, %v2043
        %v2045 = vpop.f32.mrb[0].mxu0
        %v2046 = vpop.f32.mrb[0].mxu0
        %v2047 = vadd.f32 %v1959, %v2046
        %v2048 = vpop.f32.mrb[0].mxu0
        %2049 = vmatprep.mubr.bf16.mxu0 0
        %2050 = vmatmul.mubr.bf16.gmra.mrb[0].mxu0 %v1929
        %v2051 = vpop.f32.mrb[0].mxu0
        %v2052 = vadd.f32 %v1959, %v2051
        %v2053 = vpop.f32.mrb[0].mxu0
        %v2054 = vpop.f32.mrb[0].mxu0
        %v2055 = vadd.f32 %v1959, %v2054
        %v2056 = vpop.f32.mrb[0].mxu0
        %2057 = vmatprep.mubr.bf16.mxu0 0
        %2058 = vmatmul.mubr.bf16.gmra.mrb[0].mxu0 %v1930
        %v2059 = vpop.f32.mrb[0].mxu0
        %v2060 = vadd.f32 %v1959, %v2059
        %v2061 = vpop.f32.mrb[0].mxu0
        %v2062 = vpop.f32.mrb[0].mxu0
        %v2063 = vadd.f32 %v1959, %v2062
        %v2064 = vpop.f32.mrb[0].mxu0
        %2065 = vmatprep.mubr.bf16.mxu0 0
        %2066 = vmatmul.mubr.bf16.gmra.mrb[0].mxu0 %v1931
        %v2067 = vpop.f32.mrb[0].mxu0
        %v2068 = vadd.f32 %v1959, %v2067
        %v2069 = vpop.f32.mrb[0].mxu0
        %v2070 = vpop.f32.mrb[0].mxu0
        %v2071 = vadd.f32 %v1959, %v2070
        %v2072 = vpop.f32.mrb[0].mxu0
        %2073 = vmatprep.mubr.bf16.mxu0 0
        %2074 = vmatmul.mubr.bf16.gmra.mrb[0].mxu0 %v1932
        %v2075 = vpop.f32.mrb[0].mxu0
        %v2076 = vadd.f32 %v1959, %v2075
        %v2077 = vpop.f32.mrb[0].mxu0
        %v2078 = vpop.f32.mrb[0].mxu0
        %v2079 = vadd.f32 %v1959, %v2078
        %v2080 = vpop.f32.mrb[0].mxu0
        %2081 = vmatprep.mubr.bf16.mxu0 0
        %2082 = vmatmul.mubr.bf16.gmra.mrb[0].mxu0 %v1933
        %v2083 = vpop.f32.mrb[0].mxu0
        %v2084 = vadd.f32 %v1959, %v2083
        %v2085 = vpop.f32.mrb[0].mxu0
        %v2086 = vpop.f32.mrb[0].mxu0
        %v2087 = vadd.f32 %v1959, %v2086
        %v2088 = vpop.f32.mrb[0].mxu0
        %2089 = vmatprep.mubr.bf16.mxu0 0
        %2090 = vmatmul.mubr.bf16.gmra.mrb[0].mxu0 %v1934
        %v2091 = vpop.f32.mrb[0].mxu0
        %v2092 = vadd.f32 %v1959, %v2091
        %v2093 = vpop.f32.mrb[0].mxu0
        %v2094 = vpop.f32.mrb[0].mxu0
        %v2095 = vadd.f32 %v1959, %v2094
        %v2096 = vpop.f32.mrb[0].mxu0
        %2097 = vmatprep.mubr.bf16.mxu0 0
        %2098 = vmatmul.mubr.bf16.gmra.mrb[0].mxu0 %v1935
        %v2099 = vpop.f32.mrb[0].mxu0
        %v2100 = vadd.f32 %v1959, %v2099
        %v2101 = vpop.f32.mrb[0].mxu0
        %v2102 = vpop.f32.mrb[0].mxu0
        %v2103 = vadd.f32 %v1959, %v2102
        %v2104 = vpop.f32.mrb[0].mxu0
        %2105 = vmatprep.mubr.bf16.mxu0 0
        %2106 = vmatmul.mubr.bf16.gmra.mrb[0].mxu0 %v1936
        %v2107 = vpop.f32.mrb[0].mxu0
        %v2108 = vadd.f32 %v1959, %v2107
        %v2109 = vpop.f32.mrb[0].mxu0
        %v2110 = vpop.f32.mrb[0].mxu0
        %v2111 = vadd.f32 %v1959, %v2110
        %v2112 = vpop.f32.mrb[0].mxu0
        %2113 = vmatprep.mubr.bf16.mxu0 0
        %2114 = vmatmul.mubr.bf16.gmra.mrb[0].mxu0 %v1937
        %v2115 = vpop.f32.mrb[0].mxu0
        %v2116 = vadd.f32 %v1959, %v2115
        %v2117 = vpop.f32.mrb[0].mxu0
        %v2118 = vpop.f32.mrb[0].mxu0
        %v2119 = vadd.f32 %v1959, %v2118
        %v2120 = vpop.f32.mrb[0].mxu0
        %2121 = vdwg.mxu0
        %v2142 = vrot.slane %v2044, 1
        %v2143 = vrot.slane %v2047, 1
        %v2144 = vsel %vm1095, %v2142, %v2143
        %v2145 = vrot.slane %v2052, 1
        %v2146 = vsel %vm1095, %v2143, %v2145
        %v2147 = vrot.slane %v2055, 1
        %v2148 = vsel %vm1095, %v2145, %v2147
        %v2149 = vrot.slane %v2060, 1
        %v2150 = vsel %vm1095, %v2147, %v2149
        %v2151 = vrot.slane %v2063, 1
        %v2152 = vsel %vm1095, %v2149, %v2151
        %v2153 = vrot.slane %v2068, 1
        %v2154 = vsel %vm1095, %v2151, %v2153
        %v2155 = vrot.slane %v2071, 1
        %v2156 = vsel %vm1095, %v2153, %v2155
        %v2157 = vrot.slane %v2076, 1
        %v2158 = vsel %vm1095, %v2155, %v2157
        %v2159 = vrot.slane %v2079, 1
        %v2160 = vsel %vm1095, %v2157, %v2159
        %v2161 = vrot.slane %v2084, 1
        %v2162 = vsel %vm1095, %v2159, %v2161
        %v2163 = vrot.slane %v2087, 1
        %v2164 = vsel %vm1095, %v2161, %v2163
        %v2165 = vrot.slane %v2092, 1
        %v2166 = vsel %vm1095, %v2163, %v2165
        %v2167 = vrot.slane %v2095, 1
        %v2168 = vsel %vm1095, %v2165, %v2167
        %v2169 = vrot.slane %v2100, 1
        %v2170 = vsel %vm1095, %v2167, %v2169
        %v2171 = vrot.slane %v2103, 1
        %v2172 = vsel %vm1095, %v2169, %v2171
        %v2173 = vrot.slane %v2108, 1
        %v2174 = vsel %vm1095, %v2171, %v2173
        %v2175 = vrot.slane %v2111, 1
        %v2176 = vsel %vm1095, %v2173, %v2175
        %v2177 = vrot.slane %v2116, 1
        %v2178 = vsel %vm1095, %v2175, %v2177
        %v2179 = vrot.slane %v2119, 1
        %v2180 = vsel %vm1095, %v2177, %v2179
        %2181 = vrot.lane.b32.xlu0 %v2144, 64
        %v2182 = vpop.permute.xlu0 %2181
        %2183 = vrot.lane.b32.xlu0 %v2146, 64
        %v2184 = vpop.permute.xlu0 %2183
        %2185 = vrot.lane.b32.xlu0 %v2148, 64
        %v2186 = vpop.permute.xlu0 %2185
        %2187 = vrot.lane.b32.xlu0 %v2150, 64
        %v2188 = vpop.permute.xlu0 %2187
        %2189 = vrot.lane.b32.xlu0 %v2152, 64
        %v2190 = vpop.permute.xlu0 %2189
        %2191 = vrot.lane.b32.xlu0 %v2154, 64
        %v2192 = vpop.permute.xlu0 %2191
        %2193 = vrot.lane.b32.xlu0 %v2156, 64
        %v2194 = vpop.permute.xlu0 %2193
        %2195 = vrot.lane.b32.xlu0 %v2158, 64
        %v2196 = vpop.permute.xlu0 %2195
        %2197 = vrot.lane.b32.xlu0 %v2160, 64
        %v2198 = vpop.permute.xlu0 %2197
        %2199 = vrot.lane.b32.xlu0 %v2162, 64
        %v2200 = vpop.permute.xlu0 %2199
        %2201 = vrot.lane.b32.xlu0 %v2164, 64
        %v2202 = vpop.permute.xlu0 %2201
        %2203 = vrot.lane.b32.xlu0 %v2166, 64
        %v2204 = vpop.permute.xlu0 %2203
        %2205 = vrot.lane.b32.xlu0 %v2168, 64
        %v2206 = vpop.permute.xlu0 %2205
        %2207 = vrot.lane.b32.xlu0 %v2170, 64
        %v2208 = vpop.permute.xlu0 %2207
        %2209 = vrot.lane.b32.xlu0 %v2172, 64
        %v2210 = vpop.permute.xlu0 %2209
        %2211 = vrot.lane.b32.xlu0 %v2174, 64
        %v2212 = vpop.permute.xlu0 %2211
        %2213 = vrot.lane.b32.xlu0 %v2176, 64
        %v2214 = vpop.permute.xlu0 %2213
        %2215 = vrot.lane.b32.xlu0 %v2178, 64
        %v2216 = vpop.permute.xlu0 %2215
        %2217 = vrot.lane.b32.xlu0 %v2180, 64
        %v2218 = vpop.permute.xlu0 %2217
        %2219 = vrot.lane.b32.xlu0 %v2179, 64
        %v2220 = vpop.permute.xlu0 %2219
        %v2241 = vsel %vm1395, %v2044, %v2182
        %v2242 = vsel %vm1395, %v2047, %v2184
        %v2243 = vsel %vm1395, %v2052, %v2186
        %v2244 = vsel %vm1395, %v2055, %v2188
        %v2245 = vsel %vm1395, %v2060, %v2190
        %v2246 = vsel %vm1395, %v2063, %v2192
        %v2247 = vsel %vm1395, %v2068, %v2194
        %v2248 = vsel %vm1395, %v2071, %v2196
        %v2249 = vsel %vm1395, %v2076, %v2198
        %v2250 = vsel %vm1395, %v2079, %v2200
        %v2251 = vsel %vm1395, %v2084, %v2202
        %v2252 = vsel %vm1395, %v2087, %v2204
        %v2253 = vsel %vm1395, %v2092, %v2206
        %v2254 = vsel %vm1395, %v2095, %v2208
        %v2255 = vsel %vm1395, %v2100, %v2210
        %v2256 = vsel %vm1395, %v2103, %v2212
        %v2257 = vsel %vm1395, %v2108, %v2214
        %v2258 = vsel %vm1395, %v2111, %v2216
        %v2259 = vsel %vm1395, %v2116, %v2218
        %v2260 = vsel %vm1395, %v2119, %v2220
        %v2261 = vpack.c.bf16 %v2242, %v2241
        %v2262 = vpack.c.bf16 %v2244, %v2243
        %v2263 = vpack.c.bf16 %v2246, %v2245
        %v2264 = vpack.c.bf16 %v2248, %v2247
        %v2265 = vpack.c.bf16 %v2250, %v2249
        %v2266 = vpack.c.bf16 %v2252, %v2251
        %v2267 = vpack.c.bf16 %v2254, %v2253
        %v2268 = vpack.c.bf16 %v2256, %v2255
        %v2269 = vpack.c.bf16 %v2258, %v2257
        %v2270 = vpack.c.bf16 %v2260, %v2259
        %v2271 = vld [vmem:[%s7] sm:$0xf]
        %v2272 = vld [vmem:[%s7 + $0x4] sm:$0xf]
        %v2273 = vld [vmem:[%s7 + $0x8] sm:$0xf]
        %v2274 = vld [vmem:[%s7 + $0xc] sm:$0xf]
        %v2275 = vld [vmem:[%s7 + $0x10] sm:$0xf]
        %v2276 = vld [vmem:[%s7 + $0x14] sm:$0xf]
        %v2277 = vld [vmem:[%s7 + $0x18] sm:$0xf]
        %v2278 = vld [vmem:[%s7 + $0x1c] sm:$0xf]
        %v2279 = vld [vmem:[%s7 + $0x20] sm:$0xf]
        %v2280 = vld [vmem:[%s7 + $0x24] sm:$0xf]
        %v2281 = vld [vmem:[%s7 + $0x28] sm:$0xf]
        %v2282 = vld [vmem:[%s7 + $0x2c] sm:$0xf]
        %v2283 = vld [vmem:[%s7 + $0x30] sm:$0xf]
        %v2284 = vld [vmem:[%s7 + $0x34] sm:$0xf]
        %v2285 = vld [vmem:[%s7 + $0x38] sm:$0xf]
        %v2286 = vld [vmem:[%s7 + $0x3c] sm:$0xf]
        %v2287 = vld [vmem:[%s8] sm:$0x1]
        %v2289 = vlaneseq
        %v2290 = vshrl.u32 %v2289, 7
        %v2291 = vsub.s32 0, %v2290
        %v2292 = vrot.slane %v2287, %v2291
        %v2310 = vunpack.c.l.b16 %v2271
        %v2311 = vunpack.c.l.b16 %v2272
        %v2312 = vunpack.c.l.b16 %v2273
        %v2313 = vunpack.c.l.b16 %v2274
        %v2314 = vunpack.c.l.b16 %v2275
        %v2315 = vunpack.c.l.b16 %v2276
        %v2316 = vunpack.c.l.b16 %v2277
        %v2317 = vunpack.c.l.b16 %v2278
        %v2318 = vunpack.c.l.b16 %v2279
        %v2319 = vunpack.c.l.b16 %v2280
        %v2320 = vunpack.c.l.b16 %v2281
        %v2321 = vunpack.c.l.b16 %v2282
        %v2322 = vunpack.c.l.b16 %v2283
        %v2323 = vunpack.c.l.b16 %v2284
        %v2324 = vunpack.c.l.b16 %v2285
        %v2325 = vunpack.c.l.b16 %v2286
        %v2326 = vpack.c.b16 %v2311, %v2310
        %v2327 = vpack.c.b16 %v2313, %v2312
        %v2328 = vpack.c.b16 %v2315, %v2314
        %v2329 = vpack.c.b16 %v2317, %v2316
        %v2330 = vpack.c.b16 %v2319, %v2318
        %v2331 = vpack.c.b16 %v2321, %v2320
        %v2332 = vpack.c.b16 %v2323, %v2322
        %v2333 = vpack.c.b16 %v2325, %v2324
        %2342 = vmatprep.subr.bf16.mxu0 0
        %2343 = vmatpush1.bf16.msra.mxu0 %v2326
        %2344 = vmatprep.subr.bf16.mxu0 0
        %2345 = vmatpush1.bf16.msra.mxu0 %v2327
        %2346 = vmatprep.subr.bf16.mxu0 0
        %2347 = vmatpush1.bf16.msra.mxu0 %v2328
        %2348 = vmatprep.subr.bf16.mxu0 0
        %2349 = vmatpush1.bf16.msra.mxu0 %v2329
        %2350 = vmatprep.subr.bf16.mxu0 0
        %2351 = vmatpush1.bf16.msra.mxu0 %v2330
        %2352 = vmatprep.subr.bf16.mxu0 0
        %2353 = vmatpush1.bf16.msra.mxu0 %v2331
        %2354 = vmatprep.subr.bf16.mxu0 0
        %2355 = vmatpush1.bf16.msra.mxu0 %v2332
        %2356 = vmatprep.subr.bf16.mxu0 0
        %2357 = vmatpush1.bf16.msra.mxu0 %v2333
        %2358 = vmatprep.subr.bf16.mxu0 0
        %2359 = vmatpush1.bf16.msra.mxu0 0
        %2360 = vmatprep.subr.bf16.mxu0 0
        %2361 = vmatpush1.bf16.msra.mxu0 0
        %2362 = vmatprep.subr.bf16.mxu0 0
        %2363 = vmatpush1.bf16.msra.mxu0 0
        %2364 = vmatprep.subr.bf16.mxu0 0
        %2365 = vmatpush1.bf16.msra.mxu0 0
        %2366 = vmatprep.subr.bf16.mxu0 0
        %2367 = vmatpush1.bf16.msra.mxu0 0
        %2368 = vmatprep.subr.bf16.mxu0 0
        %2369 = vmatpush1.bf16.msra.mxu0 0
        %2370 = vmatprep.subr.bf16.mxu0 0
        %2371 = vmatpush1.bf16.msra.mxu0 0
        %2372 = vmatprep.subr.bf16.mxu0 0
        %2373 = vmatpush1.bf16.msra.mxu0 0
        %2374 = vmatprep.mubr.bf16.mxu0 0
        %2375 = vmatmul.mubr.bf16.gmra.mrb[0].mxu0 %v2261
        %v2376 = vpop.f32.mrb[0].mxu0
        %v2377 = vadd.f32 %v2292, %v2376
        %v2378 = vpop.f32.mrb[0].mxu0
        %v2379 = vpop.f32.mrb[0].mxu0
        %v2380 = vadd.f32 %v2292, %v2379
        %v2381 = vpop.f32.mrb[0].mxu0
        %2382 = vmatprep.mubr.bf16.mxu0 0
        %2383 = vmatmul.mubr.bf16.gmra.mrb[0].mxu0 %v2262
        %v2384 = vpop.f32.mrb[0].mxu0
        %v2385 = vadd.f32 %v2292, %v2384
        %v2386 = vpop.f32.mrb[0].mxu0
        %v2387 = vpop.f32.mrb[0].mxu0
        %v2388 = vadd.f32 %v2292, %v2387
        %v2389 = vpop.f32.mrb[0].mxu0
        %2390 = vmatprep.mubr.bf16.mxu0 0
        %2391 = vmatmul.mubr.bf16.gmra.mrb[0].mxu0 %v2263
        %v2392 = vpop.f32.mrb[0].mxu0
        %v2393 = vadd.f32 %v2292, %v2392
        %v2394 = vpop.f32.mrb[0].mxu0
        %v2395 = vpop.f32.mrb[0].mxu0
        %v2396 = vadd.f32 %v2292, %v2395
        %v2397 = vpop.f32.mrb[0].mxu0
        %2398 = vmatprep.mubr.bf16.mxu0 0
        %2399 = vmatmul.mubr.bf16.gmra.mrb[0].mxu0 %v2264
        %v2400 = vpop.f32.mrb[0].mxu0
        %v2401 = vadd.f32 %v2292, %v2400
        %v2402 = vpop.f32.mrb[0].mxu0
        %v2403 = vpop.f32.mrb[0].mxu0
        %v2404 = vadd.f32 %v2292, %v2403
        %v2405 = vpop.f32.mrb[0].mxu0
        %2406 = vmatprep.mubr.bf16.mxu0 0
        %2407 = vmatmul.mubr.bf16.gmra.mrb[0].mxu0 %v2265
        %v2408 = vpop.f32.mrb[0].mxu0
        %v2409 = vadd.f32 %v2292, %v2408
        %v2410 = vpop.f32.mrb[0].mxu0
        %v2411 = vpop.f32.mrb[0].mxu0
        %v2412 = vadd.f32 %v2292, %v2411
        %v2413 = vpop.f32.mrb[0].mxu0
        %2414 = vmatprep.mubr.bf16.mxu0 0
        %2415 = vmatmul.mubr.bf16.gmra.mrb[0].mxu0 %v2266
        %v2416 = vpop.f32.mrb[0].mxu0
        %v2417 = vadd.f32 %v2292, %v2416
        %v2418 = vpop.f32.mrb[0].mxu0
        %v2419 = vpop.f32.mrb[0].mxu0
        %v2420 = vadd.f32 %v2292, %v2419
        %v2421 = vpop.f32.mrb[0].mxu0
        %2422 = vmatprep.mubr.bf16.mxu0 0
        %2423 = vmatmul.mubr.bf16.gmra.mrb[0].mxu0 %v2267
        %v2424 = vpop.f32.mrb[0].mxu0
        %v2425 = vadd.f32 %v2292, %v2424
        %v2426 = vpop.f32.mrb[0].mxu0
        %v2427 = vpop.f32.mrb[0].mxu0
        %v2428 = vadd.f32 %v2292, %v2427
        %v2429 = vpop.f32.mrb[0].mxu0
        %2430 = vmatprep.mubr.bf16.mxu0 0
        %2431 = vmatmul.mubr.bf16.gmra.mrb[0].mxu0 %v2268
        %v2432 = vpop.f32.mrb[0].mxu0
        %v2433 = vadd.f32 %v2292, %v2432
        %v2434 = vpop.f32.mrb[0].mxu0
        %v2435 = vpop.f32.mrb[0].mxu0
        %v2436 = vadd.f32 %v2292, %v2435
        %v2437 = vpop.f32.mrb[0].mxu0
        %2438 = vmatprep.mubr.bf16.mxu0 0
        %2439 = vmatmul.mubr.bf16.gmra.mrb[0].mxu0 %v2269
        %v2440 = vpop.f32.mrb[0].mxu0
        %v2441 = vadd.f32 %v2292, %v2440
        %v2442 = vpop.f32.mrb[0].mxu0
        %v2443 = vpop.f32.mrb[0].mxu0
        %v2444 = vadd.f32 %v2292, %v2443
        %v2445 = vpop.f32.mrb[0].mxu0
        %2446 = vmatprep.mubr.bf16.mxu0 0
        %2447 = vmatmul.mubr.bf16.gmra.mrb[0].mxu0 %v2270
        %v2448 = vpop.f32.mrb[0].mxu0
        %v2449 = vadd.f32 %v2292, %v2448
        %v2450 = vpop.f32.mrb[0].mxu0
        %v2451 = vpop.f32.mrb[0].mxu0
        %v2452 = vadd.f32 %v2292, %v2451
        %v2453 = vpop.f32.mrb[0].mxu0
        %2454 = vdwg.mxu0
        %2455 = vst [vmem:[#allocation3] sm:$0xff] %v2377
        %2456 = vst [vmem:[#allocation3 + $0x8] sm:$0xff] %v2380
        %2457 = vst [vmem:[#allocation3 + $0x10] sm:$0xff] %v2385
        %2458 = vst [vmem:[#allocation3 + $0x18] sm:$0xff] %v2388
        %2459 = vst [vmem:[#allocation3 + $0x20] sm:$0xff] %v2393
        %2460 = vst [vmem:[#allocation3 + $0x28] sm:$0xff] %v2396
        %2461 = vst [vmem:[#allocation3 + $0x30] sm:$0xff] %v2401
        %2462 = vst [vmem:[#allocation3 + $0x38] sm:$0xff] %v2404
        %2463 = vst [vmem:[#allocation3 + $0x40] sm:$0xff] %v2409
        %2464 = vst [vmem:[#allocation3 + $0x48] sm:$0xff] %v2412
        %2465 = vst [vmem:[#allocation3 + $0x50] sm:$0xff] %v2417
        %2466 = vst [vmem:[#allocation3 + $0x58] sm:$0xff] %v2420
        %2467 = vst [vmem:[#allocation3 + $0x60] sm:$0xff] %v2425
        %2468 = vst [vmem:[#allocation3 + $0x68] sm:$0xff] %v2428
        %2469 = vst [vmem:[#allocation3 + $0x70] sm:$0xff] %v2433
        %2470 = vst [vmem:[#allocation3 + $0x78] sm:$0xff] %v2436
        %2471 = vst [vmem:[#allocation3 + $0x80] sm:$0xff] %v2441
        %2472 = vst [vmem:[#allocation3 + $0x88] sm:$0xff] %v2444
        %2473 = vst [vmem:[#allocation3 + $0x90] sm:$0xff] %v2449
        %2474 = vst [vmem:[#allocation3 + $0x98] sm:$0xf] %v2452
        %v2475 = vld [vmem:[#allocation3] ss:$40 sm:$0xf]
        %s2476 = scalar_lea.vmem [#allocation3], 1
        %v2477 = vld [vmem:[%s2476] ss:$40 sm:$0xf]
        %v2478 = vmax.f32 %v2475, %v2477
        %2479 = vst [vmem:[#allocation4] sm:$0xf] %v2478
        %s2480 = scalar_lea.vmem [#allocation3], 2
        %v2481 = vld [vmem:[%s2480] ss:$40 sm:$0xf]
        %s2482 = scalar_lea.vmem [#allocation3], 3
        %v2483 = vld [vmem:[%s2482] ss:$40 sm:$0xf]
        %v2484 = vmax.f32 %v2481, %v2483
        %2485 = vst [vmem:[#allocation4 + $0x4] sm:$0xf] %v2484
        %s2486 = scalar_lea.vmem [#allocation3], 4
        %v2487 = vld [vmem:[%s2486] ss:$40 sm:$0xf]
        %s2488 = scalar_lea.vmem [#allocation3], 5
        %v2489 = vld [vmem:[%s2488] ss:$40 sm:$0xf]
        %v2490 = vmax.f32 %v2487, %v2489
        %2491 = vst [vmem:[#allocation4 + $0x8] sm:$0xf] %v2490
        %s2492 = scalar_lea.vmem [#allocation3], 6
        %v2493 = vld [vmem:[%s2492] ss:$40 sm:$0xf]
        %s2494 = scalar_lea.vmem [#allocation3], 7
        %v2495 = vld [vmem:[%s2494] ss:$40 sm:$0xf]
        %v2496 = vmax.f32 %v2493, %v2495
        %2497 = vst [vmem:[#allocation4 + $0xc] sm:$0xf] %v2496
        %s2498 = scalar_lea.vmem [#allocation3], 8
        %v2499 = vld [vmem:[%s2498] ss:$40 sm:$0xf]
        %s2500 = scalar_lea.vmem [#allocation3], 9
        %v2501 = vld [vmem:[%s2500] ss:$40 sm:$0xf]
        %v2502 = vmax.f32 %v2499, %v2501
        %2503 = vst [vmem:[#allocation4 + $0x10] sm:$0xf] %v2502
        %s2504 = scalar_lea.vmem [#allocation3], 10
        %v2505 = vld [vmem:[%s2504] ss:$40 sm:$0xf]
        %s2506 = scalar_lea.vmem [#allocation3], 11
        %v2507 = vld [vmem:[%s2506] ss:$40 sm:$0xf]
        %v2508 = vmax.f32 %v2505, %v2507
        %2509 = vst [vmem:[#allocation4 + $0x14] sm:$0xf] %v2508
        %s2510 = scalar_lea.vmem [#allocation3], 12
        %v2511 = vld [vmem:[%s2510] ss:$40 sm:$0xf]
        %s2512 = scalar_lea.vmem [#allocation3], 13
        %v2513 = vld [vmem:[%s2512] ss:$40 sm:$0xf]
        %v2514 = vmax.f32 %v2511, %v2513
        %2515 = vst [vmem:[#allocation4 + $0x18] sm:$0xf] %v2514
        %s2516 = scalar_lea.vmem [#allocation3], 14
        %v2517 = vld [vmem:[%s2516] ss:$40 sm:$0xf]
        %s2518 = scalar_lea.vmem [#allocation3], 15
        %v2519 = vld [vmem:[%s2518] ss:$40 sm:$0xf]
        %v2520 = vmax.f32 %v2517, %v2519
        %2521 = vst [vmem:[#allocation4 + $0x1c] sm:$0xf] %v2520
        %s2522 = scalar_lea.vmem [#allocation3], 16
        %v2523 = vld [vmem:[%s2522] ss:$40 sm:$0xf]
        %s2524 = scalar_lea.vmem [#allocation3], 17
        %v2525 = vld [vmem:[%s2524] ss:$40 sm:$0xf]
        %v2526 = vmax.f32 %v2523, %v2525
        %2527 = vst [vmem:[#allocation4 + $0x20] sm:$0xf] %v2526
        %s2528 = scalar_lea.vmem [#allocation3], 18
        %v2529 = vld [vmem:[%s2528] ss:$40 sm:$0xf]
        %s2530 = scalar_lea.vmem [#allocation3], 19
        %v2531 = vld [vmem:[%s2530] ss:$40 sm:$0xf]
        %v2532 = vmax.f32 %v2529, %v2531
        %2533 = vst [vmem:[#allocation4 + $0x24] sm:$0xf] %v2532
        %s2534 = scalar_lea.vmem [#allocation3], 20
        %v2535 = vld [vmem:[%s2534] ss:$40 sm:$0xf]
        %s2536 = scalar_lea.vmem [#allocation3], 21
        %v2537 = vld [vmem:[%s2536] ss:$40 sm:$0xf]
        %v2538 = vmax.f32 %v2535, %v2537
        %2539 = vst [vmem:[#allocation4 + $0x28] sm:$0xf] %v2538
        %s2540 = scalar_lea.vmem [#allocation3], 22
        %v2541 = vld [vmem:[%s2540] ss:$40 sm:$0xf]
        %s2542 = scalar_lea.vmem [#allocation3], 23
        %v2543 = vld [vmem:[%s2542] ss:$40 sm:$0xf]
        %v2544 = vmax.f32 %v2541, %v2543
        %2545 = vst [vmem:[#allocation4 + $0x2c] sm:$0xf] %v2544
        %s2546 = scalar_lea.vmem [#allocation3], 24
        %v2547 = vld [vmem:[%s2546] ss:$40 sm:$0xf]
        %s2548 = scalar_lea.vmem [#allocation3], 25
        %v2549 = vld [vmem:[%s2548] ss:$40 sm:$0xf]
        %v2550 = vmax.f32 %v2547, %v2549
        %2551 = vst [vmem:[#allocation4 + $0x30] sm:$0xf] %v2550
        %s2552 = scalar_lea.vmem [#allocation3], 26
        %v2553 = vld [vmem:[%s2552] ss:$40 sm:$0xf]
        %s2554 = scalar_lea.vmem [#allocation3], 27
        %v2555 = vld [vmem:[%s2554] ss:$40 sm:$0xf]
        %v2556 = vmax.f32 %v2553, %v2555
        %2557 = vst [vmem:[#allocation4 + $0x34] sm:$0xf] %v2556
        %s2558 = scalar_lea.vmem [#allocation3], 28
        %v2559 = vld [vmem:[%s2558] ss:$40 sm:$0xf]
        %s2560 = scalar_lea.vmem [#allocation3], 29
        %v2561 = vld [vmem:[%s2560] ss:$40 sm:$0xf]
        %v2562 = vmax.f32 %v2559, %v2561
        %2563 = vst [vmem:[#allocation4 + $0x38] sm:$0xf] %v2562
        %s2564 = scalar_lea.vmem [#allocation3], 30
        %v2565 = vld [vmem:[%s2564] ss:$40 sm:$0xf]
        %s2566 = scalar_lea.vmem [#allocation3], 31
        %v2567 = vld [vmem:[%s2566] ss:$40 sm:$0xf]
        %v2568 = vmax.f32 %v2565, %v2567
        %2569 = vst [vmem:[#allocation4 + $0x3c] sm:$0xf] %v2568
        %s2570 = scalar_lea.vmem [#allocation3], 32
        %v2571 = vld [vmem:[%s2570] ss:$40 sm:$0xf]
        %s2572 = scalar_lea.vmem [#allocation3], 33
        %v2573 = vld [vmem:[%s2572] ss:$40 sm:$0xf]
        %v2574 = vmax.f32 %v2571, %v2573
        %2575 = vst [vmem:[#allocation4 + $0x40] sm:$0xf] %v2574
        %s2576 = scalar_lea.vmem [#allocation3], 34
        %v2577 = vld [vmem:[%s2576] ss:$40 sm:$0xf]
        %s2578 = scalar_lea.vmem [#allocation3], 35
        %v2579 = vld [vmem:[%s2578] ss:$40 sm:$0xf]
        %v2580 = vmax.f32 %v2577, %v2579
        %2581 = vst [vmem:[#allocation4 + $0x44] sm:$0xf] %v2580
        %s2582 = smul.u32 4, 288
        %s2583 = smul.u32 %s2582, 1
        %s2584 = sshll.u32 %s2583, 4
        %2585 = dma.done [#allocation6], %s2584
        %v2586 = vld [vmem:[#allocation4] sm:$0xff]
        %v2587 = vld [vmem:[#allocation4 + $0x8] sm:$0xff]
        %v2588 = vld [vmem:[#allocation4 + $0x10] sm:$0xff]
        %v2589 = vld [vmem:[#allocation4 + $0x18] sm:$0xff]
        %v2590 = vld [vmem:[#allocation4 + $0x20] sm:$0xff]
        %v2591 = vld [vmem:[#allocation4 + $0x28] sm:$0xff]
        %v2592 = vld [vmem:[#allocation4 + $0x30] sm:$0xff]
        %v2593 = vld [vmem:[#allocation4 + $0x38] sm:$0xff]
        %v2594 = vld [vmem:[#allocation4 + $0x40] sm:$0xff]
        %v2604 = vcombine.high %v2586, %v2586
        %v2605 = vcombine.high %v2587, %v2587
        %v2606 = vcombine.high %v2588, %v2588
        %v2607 = vcombine.high %v2589, %v2589
        %v2608 = vcombine.high %v2590, %v2590
        %v2609 = vcombine.high %v2591, %v2591
        %v2610 = vcombine.high %v2592, %v2592
        %v2611 = vcombine.high %v2593, %v2593
        %v2612 = vcombine.high %v2594, %v2594
        %v2622 = vpack.c.bf16 %v2586, %v2586
        %v2623 = vpack.c.bf16 %v2604, %v2604
        %v2624 = vpack.c.bf16 %v2587, %v2587
        %v2625 = vpack.c.bf16 %v2605, %v2605
        %v2626 = vpack.c.bf16 %v2588, %v2588
        %v2627 = vpack.c.bf16 %v2606, %v2606
        %v2628 = vpack.c.bf16 %v2589, %v2589
        %v2629 = vpack.c.bf16 %v2607, %v2607
        %v2630 = vpack.c.bf16 %v2590, %v2590
        %v2631 = vpack.c.bf16 %v2608, %v2608
        %v2632 = vpack.c.bf16 %v2591, %v2591
        %v2633 = vpack.c.bf16 %v2609, %v2609
        %v2634 = vpack.c.bf16 %v2592, %v2592
        %v2635 = vpack.c.bf16 %v2610, %v2610
        %v2636 = vpack.c.bf16 %v2593, %v2593
        %v2637 = vpack.c.bf16 %v2611, %v2611
        %v2638 = vpack.c.bf16 %v2594, %v2594
        %v2639 = vpack.c.bf16 %v2612, %v2612
        %v2640 = vld [vmem:[#allocation5] sm:$0xff]
        %v2641 = vld [vmem:[#allocation5 + $0x8] sm:$0xff]
        %v2642 = vld [vmem:[#allocation5 + $0x10] sm:$0xff]
        %v2643 = vld [vmem:[#allocation5 + $0x18] sm:$0xff]
        %v2644 = vld [vmem:[#allocation5 + $0x20] sm:$0xff]
        %v2645 = vld [vmem:[#allocation5 + $0x28] sm:$0xff]
        %v2646 = vld [vmem:[#allocation5 + $0x30] sm:$0xff]
        %v2647 = vld [vmem:[#allocation5 + $0x38] sm:$0xff]
        %v2648 = vld [vmem:[#allocation5 + $0x40] sm:$0xff]
        %v2649 = vld [vmem:[#allocation5 + $0x48] sm:$0xff]
        %v2650 = vld [vmem:[#allocation5 + $0x50] sm:$0xff]
        %v2651 = vld [vmem:[#allocation5 + $0x58] sm:$0xff]
        %v2652 = vld [vmem:[#allocation5 + $0x60] sm:$0xff]
        %v2653 = vld [vmem:[#allocation5 + $0x68] sm:$0xff]
        %v2654 = vld [vmem:[#allocation5 + $0x70] sm:$0xff]
        %v2655 = vld [vmem:[#allocation5 + $0x78] sm:$0xff]
        %v2656 = vld [vmem:[#allocation5 + $0x80] sm:$0xff]
        %v2657 = vld [vmem:[#allocation5 + $0x88] sm:$0xff]
        %v2658 = vld [vmem:[#allocation5 + $0x90] sm:$0xff]
        %v2659 = vld [vmem:[#allocation5 + $0x98] sm:$0xff]
        %v2660 = vld [vmem:[#allocation5 + $0xa0] sm:$0xff]
        %v2661 = vld [vmem:[#allocation5 + $0xa8] sm:$0xff]
        %v2662 = vld [vmem:[#allocation5 + $0xb0] sm:$0xff]
        %v2663 = vld [vmem:[#allocation5 + $0xb8] sm:$0xff]
        %v2664 = vld [vmem:[#allocation5 + $0xc0] sm:$0xff]
        %v2665 = vld [vmem:[#allocation5 + $0xc8] sm:$0xff]
        %v2666 = vld [vmem:[#allocation5 + $0xd0] sm:$0xff]
        %v2667 = vld [vmem:[#allocation5 + $0xd8] sm:$0xff]
        %v2668 = vld [vmem:[#allocation5 + $0xe0] sm:$0xff]
        %v2669 = vld [vmem:[#allocation5 + $0xe8] sm:$0xff]
        %v2670 = vld [vmem:[#allocation5 + $0xf0] sm:$0xff]
        %v2671 = vld [vmem:[#allocation5 + $0xf8] sm:$0xff]
        %v2672 = vld [vmem:[#allocation5 + $0x100] sm:$0xff]
        %v2673 = vld [vmem:[#allocation5 + $0x108] sm:$0xff]
        %v2674 = vld [vmem:[#allocation5 + $0x110] sm:$0xff]
        %v2675 = vld [vmem:[#allocation5 + $0x118] sm:$0xff]
        %v2676 = vld [vmem:[#allocation5 + $0x120] sm:$0xff]
        %v2677 = vld [vmem:[#allocation5 + $0x128] sm:$0xff]
        %v2678 = vld [vmem:[#allocation5 + $0x130] sm:$0xff]
        %v2679 = vld [vmem:[#allocation5 + $0x138] sm:$0xff]
        %v2680 = vld [vmem:[#allocation5 + $0x140] sm:$0xff]
        %v2681 = vld [vmem:[#allocation5 + $0x148] sm:$0xff]
        %v2682 = vld [vmem:[#allocation5 + $0x150] sm:$0xff]
        %v2683 = vld [vmem:[#allocation5 + $0x158] sm:$0xff]
        %v2684 = vld [vmem:[#allocation5 + $0x160] sm:$0xff]
        %v2685 = vld [vmem:[#allocation5 + $0x168] sm:$0xff]
        %v2686 = vld [vmem:[#allocation5 + $0x170] sm:$0xff]
        %v2687 = vld [vmem:[#allocation5 + $0x178] sm:$0xff]
        %v2688 = vld [vmem:[#allocation5 + $0x180] sm:$0xff]
        %v2689 = vld [vmem:[#allocation5 + $0x188] sm:$0xff]
        %v2690 = vld [vmem:[#allocation5 + $0x190] sm:$0xff]
        %v2691 = vld [vmem:[#allocation5 + $0x198] sm:$0xff]
        %v2692 = vld [vmem:[#allocation5 + $0x1a0] sm:$0xff]
        %v2693 = vld [vmem:[#allocation5 + $0x1a8] sm:$0xff]
        %v2694 = vld [vmem:[#allocation5 + $0x1b0] sm:$0xff]
        %v2695 = vld [vmem:[#allocation5 + $0x1b8] sm:$0xff]
        %v2696 = vld [vmem:[#allocation5 + $0x1c0] sm:$0xff]
        %v2697 = vld [vmem:[#allocation5 + $0x1c8] sm:$0xff]
        %v2698 = vld [vmem:[#allocation5 + $0x1d0] sm:$0xff]
        %v2699 = vld [vmem:[#allocation5 + $0x1d8] sm:$0xff]
        %v2700 = vld [vmem:[#allocation5 + $0x1e0] sm:$0xff]
        %v2701 = vld [vmem:[#allocation5 + $0x1e8] sm:$0xff]
        %v2702 = vld [vmem:[#allocation5 + $0x1f0] sm:$0xff]
        %v2703 = vld [vmem:[#allocation5 + $0x1f8] sm:$0xff]
        %v2704 = vld [vmem:[#allocation5 + $0x200] sm:$0xff]
        %v2705 = vld [vmem:[#allocation5 + $0x208] sm:$0xff]
        %v2706 = vld [vmem:[#allocation5 + $0x210] sm:$0xff]
        %v2707 = vld [vmem:[#allocation5 + $0x218] sm:$0xff]
        %v2708 = vld [vmem:[#allocation5 + $0x220] sm:$0xff]
        %v2709 = vld [vmem:[#allocation5 + $0x228] sm:$0xff]
        %v2710 = vld [vmem:[#allocation5 + $0x230] sm:$0xff]
        %v2711 = vld [vmem:[#allocation5 + $0x238] sm:$0xff]
        %v2712 = vld [vmem:[#allocation5 + $0x240] sm:$0xff]
        %v2713 = vld [vmem:[#allocation5 + $0x248] sm:$0xff]
        %v2714 = vld [vmem:[#allocation5 + $0x250] sm:$0xff]
        %v2715 = vld [vmem:[#allocation5 + $0x258] sm:$0xff]
        %v2716 = vld [vmem:[#allocation5 + $0x260] sm:$0xff]
        %v2717 = vld [vmem:[#allocation5 + $0x268] sm:$0xff]
        %v2718 = vld [vmem:[#allocation5 + $0x270] sm:$0xff]
        %v2719 = vld [vmem:[#allocation5 + $0x278] sm:$0xff]
        %v2720 = vld [vmem:[#allocation5 + $0x280] sm:$0xff]
        %v2721 = vld [vmem:[#allocation5 + $0x288] sm:$0xff]
        %v2722 = vld [vmem:[#allocation5 + $0x290] sm:$0xff]
        %v2723 = vld [vmem:[#allocation5 + $0x298] sm:$0xff]
        %v2724 = vld [vmem:[#allocation5 + $0x2a0] sm:$0xff]
        %v2725 = vld [vmem:[#allocation5 + $0x2a8] sm:$0xff]
        %v2726 = vld [vmem:[#allocation5 + $0x2b0] sm:$0xff]
        %v2727 = vld [vmem:[#allocation5 + $0x2b8] sm:$0xff]
        %v2728 = vld [vmem:[#allocation5 + $0x2c0] sm:$0xff]
        %v2729 = vld [vmem:[#allocation5 + $0x2c8] sm:$0xff]
        %v2730 = vld [vmem:[#allocation5 + $0x2d0] sm:$0xff]
        %v2731 = vld [vmem:[#allocation5 + $0x2d8] sm:$0xff]
        %v2732 = vld [vmem:[#allocation5 + $0x2e0] sm:$0xff]
        %v2733 = vld [vmem:[#allocation5 + $0x2e8] sm:$0xff]
        %v2734 = vld [vmem:[#allocation5 + $0x2f0] sm:$0xff]
        %v2735 = vld [vmem:[#allocation5 + $0x2f8] sm:$0xff]
        %v2736 = vld [vmem:[#allocation5 + $0x300] sm:$0xff]
        %v2737 = vld [vmem:[#allocation5 + $0x308] sm:$0xff]
        %v2738 = vld [vmem:[#allocation5 + $0x310] sm:$0xff]
        %v2739 = vld [vmem:[#allocation5 + $0x318] sm:$0xff]
        %v2740 = vld [vmem:[#allocation5 + $0x320] sm:$0xff]
        %v2741 = vld [vmem:[#allocation5 + $0x328] sm:$0xff]
        %v2742 = vld [vmem:[#allocation5 + $0x330] sm:$0xff]
        %v2743 = vld [vmem:[#allocation5 + $0x338] sm:$0xff]
        %v2744 = vld [vmem:[#allocation5 + $0x340] sm:$0xff]
        %v2745 = vld [vmem:[#allocation5 + $0x348] sm:$0xff]
        %v2746 = vld [vmem:[#allocation5 + $0x350] sm:$0xff]
        %v2747 = vld [vmem:[#allocation5 + $0x358] sm:$0xff]
        %v2748 = vld [vmem:[#allocation5 + $0x360] sm:$0xff]
        %v2749 = vld [vmem:[#allocation5 + $0x368] sm:$0xff]
        %v2750 = vld [vmem:[#allocation5 + $0x370] sm:$0xff]
        %v2751 = vld [vmem:[#allocation5 + $0x378] sm:$0xff]
        %v2752 = vld [vmem:[#allocation5 + $0x380] sm:$0xff]
        %v2753 = vld [vmem:[#allocation5 + $0x388] sm:$0xff]
        %v2754 = vld [vmem:[#allocation5 + $0x390] sm:$0xff]
        %v2755 = vld [vmem:[#allocation5 + $0x398] sm:$0xff]
        %v2756 = vld [vmem:[#allocation5 + $0x3a0] sm:$0xff]
        %v2757 = vld [vmem:[#allocation5 + $0x3a8] sm:$0xff]
        %v2758 = vld [vmem:[#allocation5 + $0x3b0] sm:$0xff]
        %v2759 = vld [vmem:[#allocation5 + $0x3b8] sm:$0xff]
        %v2760 = vld [vmem:[#allocation5 + $0x3c0] sm:$0xff]
        %v2761 = vld [vmem:[#allocation5 + $0x3c8] sm:$0xff]
        %v2762 = vld [vmem:[#allocation5 + $0x3d0] sm:$0xff]
        %v2763 = vld [vmem:[#allocation5 + $0x3d8] sm:$0xff]
        %v2764 = vld [vmem:[#allocation5 + $0x3e0] sm:$0xff]
        %v2765 = vld [vmem:[#allocation5 + $0x3e8] sm:$0xff]
        %v2766 = vld [vmem:[#allocation5 + $0x3f0] sm:$0xff]
        %v2767 = vld [vmem:[#allocation5 + $0x3f8] sm:$0xff]
        %v2768 = vld [vmem:[#allocation5 + $0x400] sm:$0xff]
        %v2769 = vld [vmem:[#allocation5 + $0x408] sm:$0xff]
        %v2770 = vld [vmem:[#allocation5 + $0x410] sm:$0xff]
        %v2771 = vld [vmem:[#allocation5 + $0x418] sm:$0xff]
        %v2772 = vld [vmem:[#allocation5 + $0x420] sm:$0xff]
        %v2773 = vld [vmem:[#allocation5 + $0x428] sm:$0xff]
        %v2774 = vld [vmem:[#allocation5 + $0x430] sm:$0xff]
        %v2775 = vld [vmem:[#allocation5 + $0x438] sm:$0xff]
        %v2776 = vld [vmem:[#allocation5 + $0x440] sm:$0xff]
        %v2777 = vld [vmem:[#allocation5 + $0x448] sm:$0xff]
        %v2778 = vld [vmem:[#allocation5 + $0x450] sm:$0xff]
        %v2779 = vld [vmem:[#allocation5 + $0x458] sm:$0xff]
        %v2780 = vld [vmem:[#allocation5 + $0x460] sm:$0xff]
        %v2781 = vld [vmem:[#allocation5 + $0x468] sm:$0xff]
        %v2782 = vld [vmem:[#allocation5 + $0x470] sm:$0xff]
        %v2783 = vld [vmem:[#allocation5 + $0x478] sm:$0xff]
        %v2784 = vld [vmem:[%s10] sm:$0x1]
        %v2786 = vlaneseq
        %v2787 = vshrl.u32 %v2786, 7
        %v2788 = vsub.s32 0, %v2787
        %v2789 = vrot.slane %v2784, %v2788
        %2791 = vmatprep.subr.bf16.mxu0 0
        %2792 = vmatpush1.bf16.msra.mxu0 %v2640
        %2793 = vmatprep.subr.bf16.mxu0 0
        %2794 = vmatpush1.bf16.msra.mxu0 %v2641
        %2795 = vmatprep.subr.bf16.mxu0 0
        %2796 = vmatpush1.bf16.msra.mxu0 %v2642
        %2797 = vmatprep.subr.bf16.mxu0 0
        %2798 = vmatpush1.bf16.msra.mxu0 %v2643
        %2799 = vmatprep.subr.bf16.mxu0 0
        %2800 = vmatpush1.bf16.msra.mxu0 %v2644
        %2801 = vmatprep.subr.bf16.mxu0 0
        %2802 = vmatpush1.bf16.msra.mxu0 %v2645
        %2803 = vmatprep.subr.bf16.mxu0 0
        %2804 = vmatpush1.bf16.msra.mxu0 %v2646
        %2805 = vmatprep.subr.bf16.mxu0 0
        %2806 = vmatpush1.bf16.msra.mxu0 %v2647
        %2807 = vmatprep.subr.bf16.mxu0 0
        %2808 = vmatpush1.bf16.msra.mxu0 %v2648
        %2809 = vmatprep.subr.bf16.mxu0 0
        %2810 = vmatpush1.bf16.msra.mxu0 %v2649
        %2811 = vmatprep.subr.bf16.mxu0 0
        %2812 = vmatpush1.bf16.msra.mxu0 %v2650
        %2813 = vmatprep.subr.bf16.mxu0 0
        %2814 = vmatpush1.bf16.msra.mxu0 %v2651
        %2815 = vmatprep.subr.bf16.mxu0 0
        %2816 = vmatpush1.bf16.msra.mxu0 %v2652
        %2817 = vmatprep.subr.bf16.mxu0 0
        %2818 = vmatpush1.bf16.msra.mxu0 %v2653
        %2819 = vmatprep.subr.bf16.mxu0 0
        %2820 = vmatpush1.bf16.msra.mxu0 %v2654
        %2821 = vmatprep.subr.bf16.mxu0 0
        %2822 = vmatpush1.bf16.msra.mxu0 %v2655
        %2823 = vmatprep.mubr.bf16.mxu0 %v2623
        %2824 = vmatmul.mubr.bf16.gmra.mrb[0].mxu0 %v2622
        %v2825 = vpop.f32.mrb[0].mxu0
        %v2826 = vadd.f32 %v2789, %v2825
        %v2827 = vpop.f32.mrb[0].mxu0
        %v2828 = vpop.f32.mrb[0].mxu0
        %v2829 = vpop.f32.mrb[0].mxu0
        %2830 = vdwg.mxu0
        %2831 = vmatprep.subr.bf16.mxu0 0
        %2832 = vmatpush1.bf16.msra.mxu0 %v2656
        %2833 = vmatprep.subr.bf16.mxu0 0
        %2834 = vmatpush1.bf16.msra.mxu0 %v2657
        %2835 = vmatprep.subr.bf16.mxu0 0
        %2836 = vmatpush1.bf16.msra.mxu0 %v2658
        %2837 = vmatprep.subr.bf16.mxu0 0
        %2838 = vmatpush1.bf16.msra.mxu0 %v2659
        %2839 = vmatprep.subr.bf16.mxu0 0
        %2840 = vmatpush1.bf16.msra.mxu0 %v2660
        %2841 = vmatprep.subr.bf16.mxu0 0
        %2842 = vmatpush1.bf16.msra.mxu0 %v2661
        %2843 = vmatprep.subr.bf16.mxu0 0
        %2844 = vmatpush1.bf16.msra.mxu0 %v2662
        %2845 = vmatprep.subr.bf16.mxu0 0
        %2846 = vmatpush1.bf16.msra.mxu0 %v2663
        %2847 = vmatprep.subr.bf16.mxu0 0
        %2848 = vmatpush1.bf16.msra.mxu0 %v2664
        %2849 = vmatprep.subr.bf16.mxu0 0
        %2850 = vmatpush1.bf16.msra.mxu0 %v2665
        %2851 = vmatprep.subr.bf16.mxu0 0
        %2852 = vmatpush1.bf16.msra.mxu0 %v2666
        %2853 = vmatprep.subr.bf16.mxu0 0
        %2854 = vmatpush1.bf16.msra.mxu0 %v2667
        %2855 = vmatprep.subr.bf16.mxu0 0
        %2856 = vmatpush1.bf16.msra.mxu0 %v2668
        %2857 = vmatprep.subr.bf16.mxu0 0
        %2858 = vmatpush1.bf16.msra.mxu0 %v2669
        %2859 = vmatprep.subr.bf16.mxu0 0
        %2860 = vmatpush1.bf16.msra.mxu0 %v2670
        %2861 = vmatprep.subr.bf16.mxu0 0
        %2862 = vmatpush1.bf16.msra.mxu0 %v2671
        %2863 = vmatprep.mubr.bf16.mxu0 %v2625
        %2864 = vmatmul.mubr.bf16.gmra.mrb[0].mxu0 %v2624
        %v2865 = vpop.f32.mrb[0].mxu0
        %v2866 = vadd.f32 %v2826, %v2865
        %v2867 = vpop.f32.mrb[0].mxu0
        %v2868 = vpop.f32.mrb[0].mxu0
        %v2869 = vpop.f32.mrb[0].mxu0
        %2870 = vdwg.mxu0
        %2871 = vmatprep.subr.bf16.mxu0 0
        %2872 = vmatpush1.bf16.msra.mxu0 %v2672
        %2873 = vmatprep.subr.bf16.mxu0 0
        %2874 = vmatpush1.bf16.msra.mxu0 %v2673
        %2875 = vmatprep.subr.bf16.mxu0 0
        %2876 = vmatpush1.bf16.msra.mxu0 %v2674
        %2877 = vmatprep.subr.bf16.mxu0 0
        %2878 = vmatpush1.bf16.msra.mxu0 %v2675
        %2879 = vmatprep.subr.bf16.mxu0 0
        %2880 = vmatpush1.bf16.msra.mxu0 %v2676
        %2881 = vmatprep.subr.bf16.mxu0 0
        %2882 = vmatpush1.bf16.msra.mxu0 %v2677
        %2883 = vmatprep.subr.bf16.mxu0 0
        %2884 = vmatpush1.bf16.msra.mxu0 %v2678
        %2885 = vmatprep.subr.bf16.mxu0 0
        %2886 = vmatpush1.bf16.msra.mxu0 %v2679
        %2887 = vmatprep.subr.bf16.mxu0 0
        %2888 = vmatpush1.bf16.msra.mxu0 %v2680
        %2889 = vmatprep.subr.bf16.mxu0 0
        %2890 = vmatpush1.bf16.msra.mxu0 %v2681
        %2891 = vmatprep.subr.bf16.mxu0 0
        %2892 = vmatpush1.bf16.msra.mxu0 %v2682
        %2893 = vmatprep.subr.bf16.mxu0 0
        %2894 = vmatpush1.bf16.msra.mxu0 %v2683
        %2895 = vmatprep.subr.bf16.mxu0 0
        %2896 = vmatpush1.bf16.msra.mxu0 %v2684
        %2897 = vmatprep.subr.bf16.mxu0 0
        %2898 = vmatpush1.bf16.msra.mxu0 %v2685
        %2899 = vmatprep.subr.bf16.mxu0 0
        %2900 = vmatpush1.bf16.msra.mxu0 %v2686
        %2901 = vmatprep.subr.bf16.mxu0 0
        %2902 = vmatpush1.bf16.msra.mxu0 %v2687
        %2903 = vmatprep.mubr.bf16.mxu0 %v2627
        %2904 = vmatmul.mubr.bf16.gmra.mrb[0].mxu0 %v2626
        %v2905 = vpop.f32.mrb[0].mxu0
        %v2906 = vadd.f32 %v2866, %v2905
        %v2907 = vpop.f32.mrb[0].mxu0
        %v2908 = vpop.f32.mrb[0].mxu0
        %v2909 = vpop.f32.mrb[0].mxu0
        %2910 = vdwg.mxu0
        %2911 = vmatprep.subr.bf16.mxu0 0
        %2912 = vmatpush1.bf16.msra.mxu0 %v2688
        %2913 = vmatprep.subr.bf16.mxu0 0
        %2914 = vmatpush1.bf16.msra.mxu0 %v2689
        %2915 = vmatprep.subr.bf16.mxu0 0
        %2916 = vmatpush1.bf16.msra.mxu0 %v2690
        %2917 = vmatprep.subr.bf16.mxu0 0
        %2918 = vmatpush1.bf16.msra.mxu0 %v2691
        %2919 = vmatprep.subr.bf16.mxu0 0
        %2920 = vmatpush1.bf16.msra.mxu0 %v2692
        %2921 = vmatprep.subr.bf16.mxu0 0
        %2922 = vmatpush1.bf16.msra.mxu0 %v2693
        %2923 = vmatprep.subr.bf16.mxu0 0
        %2924 = vmatpush1.bf16.msra.mxu0 %v2694
        %2925 = vmatprep.subr.bf16.mxu0 0
        %2926 = vmatpush1.bf16.msra.mxu0 %v2695
        %2927 = vmatprep.subr.bf16.mxu0 0
        %2928 = vmatpush1.bf16.msra.mxu0 %v2696
        %2929 = vmatprep.subr.bf16.mxu0 0
        %2930 = vmatpush1.bf16.msra.mxu0 %v2697
        %2931 = vmatprep.subr.bf16.mxu0 0
        %2932 = vmatpush1.bf16.msra.mxu0 %v2698
        %2933 = vmatprep.subr.bf16.mxu0 0
        %2934 = vmatpush1.bf16.msra.mxu0 %v2699
        %2935 = vmatprep.subr.bf16.mxu0 0
        %2936 = vmatpush1.bf16.msra.mxu0 %v2700
        %2937 = vmatprep.subr.bf16.mxu0 0
        %2938 = vmatpush1.bf16.msra.mxu0 %v2701
        %2939 = vmatprep.subr.bf16.mxu0 0
        %2940 = vmatpush1.bf16.msra.mxu0 %v2702
        %2941 = vmatprep.subr.bf16.mxu0 0
        %2942 = vmatpush1.bf16.msra.mxu0 %v2703
        %2943 = vmatprep.mubr.bf16.mxu0 %v2629
        %2944 = vmatmul.mubr.bf16.gmra.mrb[0].mxu0 %v2628
        %v2945 = vpop.f32.mrb[0].mxu0
        %v2946 = vadd.f32 %v2906, %v2945
        %v2947 = vpop.f32.mrb[0].mxu0
        %v2948 = vpop.f32.mrb[0].mxu0
        %v2949 = vpop.f32.mrb[0].mxu0
        %2950 = vdwg.mxu0
        %2951 = vmatprep.subr.bf16.mxu0 0
        %2952 = vmatpush1.bf16.msra.mxu0 %v2704
        %2953 = vmatprep.subr.bf16.mxu0 0
        %2954 = vmatpush1.bf16.msra.mxu0 %v2705
        %2955 = vmatprep.subr.bf16.mxu0 0
        %2956 = vmatpush1.bf16.msra.mxu0 %v2706
        %2957 = vmatprep.subr.bf16.mxu0 0
        %2958 = vmatpush1.bf16.msra.mxu0 %v2707
        %2959 = vmatprep.subr.bf16.mxu0 0
        %2960 = vmatpush1.bf16.msra.mxu0 %v2708
        %2961 = vmatprep.subr.bf16.mxu0 0
        %2962 = vmatpush1.bf16.msra.mxu0 %v2709
        %2963 = vmatprep.subr.bf16.mxu0 0
        %2964 = vmatpush1.bf16.msra.mxu0 %v2710
        %2965 = vmatprep.subr.bf16.mxu0 0
        %2966 = vmatpush1.bf16.msra.mxu0 %v2711
        %2967 = vmatprep.subr.bf16.mxu0 0
        %2968 = vmatpush1.bf16.msra.mxu0 %v2712
        %2969 = vmatprep.subr.bf16.mxu0 0
        %2970 = vmatpush1.bf16.msra.mxu0 %v2713
        %2971 = vmatprep.subr.bf16.mxu0 0
        %2972 = vmatpush1.bf16.msra.mxu0 %v2714
        %2973 = vmatprep.subr.bf16.mxu0 0
        %2974 = vmatpush1.bf16.msra.mxu0 %v2715
        %2975 = vmatprep.subr.bf16.mxu0 0
        %2976 = vmatpush1.bf16.msra.mxu0 %v2716
        %2977 = vmatprep.subr.bf16.mxu0 0
        %2978 = vmatpush1.bf16.msra.mxu0 %v2717
        %2979 = vmatprep.subr.bf16.mxu0 0
        %2980 = vmatpush1.bf16.msra.mxu0 %v2718
        %2981 = vmatprep.subr.bf16.mxu0 0
        %2982 = vmatpush1.bf16.msra.mxu0 %v2719
        %2983 = vmatprep.mubr.bf16.mxu0 %v2631
        %2984 = vmatmul.mubr.bf16.gmra.mrb[0].mxu0 %v2630
        %v2985 = vpop.f32.mrb[0].mxu0
        %v2986 = vadd.f32 %v2946, %v2985
        %v2987 = vpop.f32.mrb[0].mxu0
        %v2988 = vpop.f32.mrb[0].mxu0
        %v2989 = vpop.f32.mrb[0].mxu0
        %2990 = vdwg.mxu0
        %2991 = vmatprep.subr.bf16.mxu0 0
        %2992 = vmatpush1.bf16.msra.mxu0 %v2720
        %2993 = vmatprep.subr.bf16.mxu0 0
        %2994 = vmatpush1.bf16.msra.mxu0 %v2721
        %2995 = vmatprep.subr.bf16.mxu0 0
        %2996 = vmatpush1.bf16.msra.mxu0 %v2722
        %2997 = vmatprep.subr.bf16.mxu0 0
        %2998 = vmatpush1.bf16.msra.mxu0 %v2723
        %2999 = vmatprep.subr.bf16.mxu0 0
        %3000 = vmatpush1.bf16.msra.mxu0 %v2724
        %3001 = vmatprep.subr.bf16.mxu0 0
        %3002 = vmatpush1.bf16.msra.mxu0 %v2725
        %3003 = vmatprep.subr.bf16.mxu0 0
        %3004 = vmatpush1.bf16.msra.mxu0 %v2726
        %3005 = vmatprep.subr.bf16.mxu0 0
        %3006 = vmatpush1.bf16.msra.mxu0 %v2727
        %3007 = vmatprep.subr.bf16.mxu0 0
        %3008 = vmatpush1.bf16.msra.mxu0 %v2728
        %3009 = vmatprep.subr.bf16.mxu0 0
        %3010 = vmatpush1.bf16.msra.mxu0 %v2729
        %3011 = vmatprep.subr.bf16.mxu0 0
        %3012 = vmatpush1.bf16.msra.mxu0 %v2730
        %3013 = vmatprep.subr.bf16.mxu0 0
        %3014 = vmatpush1.bf16.msra.mxu0 %v2731
        %3015 = vmatprep.subr.bf16.mxu0 0
        %3016 = vmatpush1.bf16.msra.mxu0 %v2732
        %3017 = vmatprep.subr.bf16.mxu0 0
        %3018 = vmatpush1.bf16.msra.mxu0 %v2733
        %3019 = vmatprep.subr.bf16.mxu0 0
        %3020 = vmatpush1.bf16.msra.mxu0 %v2734
        %3021 = vmatprep.subr.bf16.mxu0 0
        %3022 = vmatpush1.bf16.msra.mxu0 %v2735
        %3023 = vmatprep.mubr.bf16.mxu0 %v2633
        %3024 = vmatmul.mubr.bf16.gmra.mrb[0].mxu0 %v2632
        %v3025 = vpop.f32.mrb[0].mxu0
        %v3026 = vadd.f32 %v2986, %v3025
        %v3027 = vpop.f32.mrb[0].mxu0
        %v3028 = vpop.f32.mrb[0].mxu0
        %v3029 = vpop.f32.mrb[0].mxu0
        %3030 = vdwg.mxu0
        %3031 = vmatprep.subr.bf16.mxu0 0
        %3032 = vmatpush1.bf16.msra.mxu0 %v2736
        %3033 = vmatprep.subr.bf16.mxu0 0
        %3034 = vmatpush1.bf16.msra.mxu0 %v2737
        %3035 = vmatprep.subr.bf16.mxu0 0
        %3036 = vmatpush1.bf16.msra.mxu0 %v2738
        %3037 = vmatprep.subr.bf16.mxu0 0
        %3038 = vmatpush1.bf16.msra.mxu0 %v2739
        %3039 = vmatprep.subr.bf16.mxu0 0
        %3040 = vmatpush1.bf16.msra.mxu0 %v2740
        %3041 = vmatprep.subr.bf16.mxu0 0
        %3042 = vmatpush1.bf16.msra.mxu0 %v2741
        %3043 = vmatprep.subr.bf16.mxu0 0
        %3044 = vmatpush1.bf16.msra.mxu0 %v2742
        %3045 = vmatprep.subr.bf16.mxu0 0
        %3046 = vmatpush1.bf16.msra.mxu0 %v2743
        %3047 = vmatprep.subr.bf16.mxu0 0
        %3048 = vmatpush1.bf16.msra.mxu0 %v2744
        %3049 = vmatprep.subr.bf16.mxu0 0
        %3050 = vmatpush1.bf16.msra.mxu0 %v2745
        %3051 = vmatprep.subr.bf16.mxu0 0
        %3052 = vmatpush1.bf16.msra.mxu0 %v2746
        %3053 = vmatprep.subr.bf16.mxu0 0
        %3054 = vmatpush1.bf16.msra.mxu0 %v2747
        %3055 = vmatprep.subr.bf16.mxu0 0
        %3056 = vmatpush1.bf16.msra.mxu0 %v2748
        %3057 = vmatprep.subr.bf16.mxu0 0
        %3058 = vmatpush1.bf16.msra.mxu0 %v2749
        %3059 = vmatprep.subr.bf16.mxu0 0
        %3060 = vmatpush1.bf16.msra.mxu0 %v2750
        %3061 = vmatprep.subr.bf16.mxu0 0
        %3062 = vmatpush1.bf16.msra.mxu0 %v2751
        %3063 = vmatprep.mubr.bf16.mxu0 %v2635
        %3064 = vmatmul.mubr.bf16.gmra.mrb[0].mxu0 %v2634
        %v3065 = vpop.f32.mrb[0].mxu0
        %v3066 = vadd.f32 %v3026, %v3065
        %v3067 = vpop.f32.mrb[0].mxu0
        %v3068 = vpop.f32.mrb[0].mxu0
        %v3069 = vpop.f32.mrb[0].mxu0
        %3070 = vdwg.mxu0
        %3071 = vmatprep.subr.bf16.mxu0 0
        %3072 = vmatpush1.bf16.msra.mxu0 %v2752
        %3073 = vmatprep.subr.bf16.mxu0 0
        %3074 = vmatpush1.bf16.msra.mxu0 %v2753
        %3075 = vmatprep.subr.bf16.mxu0 0
        %3076 = vmatpush1.bf16.msra.mxu0 %v2754
        %3077 = vmatprep.subr.bf16.mxu0 0
        %3078 = vmatpush1.bf16.msra.mxu0 %v2755
        %3079 = vmatprep.subr.bf16.mxu0 0
        %3080 = vmatpush1.bf16.msra.mxu0 %v2756
        %3081 = vmatprep.subr.bf16.mxu0 0
        %3082 = vmatpush1.bf16.msra.mxu0 %v2757
        %3083 = vmatprep.subr.bf16.mxu0 0
        %3084 = vmatpush1.bf16.msra.mxu0 %v2758
        %3085 = vmatprep.subr.bf16.mxu0 0
        %3086 = vmatpush1.bf16.msra.mxu0 %v2759
        %3087 = vmatprep.subr.bf16.mxu0 0
        %3088 = vmatpush1.bf16.msra.mxu0 %v2760
        %3089 = vmatprep.subr.bf16.mxu0 0
        %3090 = vmatpush1.bf16.msra.mxu0 %v2761
        %3091 = vmatprep.subr.bf16.mxu0 0
        %3092 = vmatpush1.bf16.msra.mxu0 %v2762
        %3093 = vmatprep.subr.bf16.mxu0 0
        %3094 = vmatpush1.bf16.msra.mxu0 %v2763
        %3095 = vmatprep.subr.bf16.mxu0 0
        %3096 = vmatpush1.bf16.msra.mxu0 %v2764
        %3097 = vmatprep.subr.bf16.mxu0 0
        %3098 = vmatpush1.bf16.msra.mxu0 %v2765
        %3099 = vmatprep.subr.bf16.mxu0 0
        %3100 = vmatpush1.bf16.msra.mxu0 %v2766
        %3101 = vmatprep.subr.bf16.mxu0 0
        %3102 = vmatpush1.bf16.msra.mxu0 %v2767
        %3103 = vmatprep.mubr.bf16.mxu0 %v2637
        %3104 = vmatmul.mubr.bf16.gmra.mrb[0].mxu0 %v2636
        %v3105 = vpop.f32.mrb[0].mxu0
        %v3106 = vadd.f32 %v3066, %v3105
        %v3107 = vpop.f32.mrb[0].mxu0
        %v3108 = vpop.f32.mrb[0].mxu0
        %v3109 = vpop.f32.mrb[0].mxu0
        %3110 = vdwg.mxu0
        %3111 = vmatprep.subr.bf16.mxu0 0
        %3112 = vmatpush1.bf16.msra.mxu0 %v2768
        %3113 = vmatprep.subr.bf16.mxu0 0
        %3114 = vmatpush1.bf16.msra.mxu0 %v2769
        %3115 = vmatprep.subr.bf16.mxu0 0
        %3116 = vmatpush1.bf16.msra.mxu0 %v2770
        %3117 = vmatprep.subr.bf16.mxu0 0
        %3118 = vmatpush1.bf16.msra.mxu0 %v2771
        %3119 = vmatprep.subr.bf16.mxu0 0
        %3120 = vmatpush1.bf16.msra.mxu0 %v2772
        %3121 = vmatprep.subr.bf16.mxu0 0
        %3122 = vmatpush1.bf16.msra.mxu0 %v2773
        %3123 = vmatprep.subr.bf16.mxu0 0
        %3124 = vmatpush1.bf16.msra.mxu0 %v2774
        %3125 = vmatprep.subr.bf16.mxu0 0
        %3126 = vmatpush1.bf16.msra.mxu0 %v2775
        %3127 = vmatprep.subr.bf16.mxu0 0
        %3128 = vmatpush1.bf16.msra.mxu0 %v2776
        %3129 = vmatprep.subr.bf16.mxu0 0
        %3130 = vmatpush1.bf16.msra.mxu0 %v2777
        %3131 = vmatprep.subr.bf16.mxu0 0
        %3132 = vmatpush1.bf16.msra.mxu0 %v2778
        %3133 = vmatprep.subr.bf16.mxu0 0
        %3134 = vmatpush1.bf16.msra.mxu0 %v2779
        %3135 = vmatprep.subr.bf16.mxu0 0
        %3136 = vmatpush1.bf16.msra.mxu0 %v2780
        %3137 = vmatprep.subr.bf16.mxu0 0
        %3138 = vmatpush1.bf16.msra.mxu0 %v2781
        %3139 = vmatprep.subr.bf16.mxu0 0
        %3140 = vmatpush1.bf16.msra.mxu0 %v2782
        %3141 = vmatprep.subr.bf16.mxu0 0
        %3142 = vmatpush1.bf16.msra.mxu0 %v2783
        %3143 = vmatprep.mubr.bf16.mxu0 %v2639
        %3144 = vmatmul.mubr.bf16.gmra.mrb[0].mxu0 %v2638
        %v3145 = vpop.f32.mrb[0].mxu0
        %v3146 = vadd.f32 %v3106, %v3145
        %v3147 = vpop.f32.mrb[0].mxu0
        %v3148 = vpop.f32.mrb[0].mxu0
        %v3149 = vpop.f32.mrb[0].mxu0
        %3150 = vdwg.mxu0
        %v3151 = vmax.f32 %v3146, 0.0
        %v3152 = vpack.c.bf16 %v3151, %v3151
        %v3153 = vld [vmem:[%s11] sm:$0xf]
        %v3154 = vld [vmem:[%s11 + $0x4] sm:$0xf]
        %v3155 = vld [vmem:[%s11 + $0x8] sm:$0xf]
        %v3156 = vld [vmem:[%s11 + $0xc] sm:$0xf]
        %v3157 = vld [vmem:[%s11 + $0x10] sm:$0xf]
        %v3158 = vld [vmem:[%s11 + $0x14] sm:$0xf]
        %v3159 = vld [vmem:[%s11 + $0x18] sm:$0xf]
        %v3160 = vld [vmem:[%s11 + $0x1c] sm:$0xf]
        %v3161 = vld [vmem:[%s12] sm:$0x1]
        %v3163 = vlaneseq
        %v3164 = vshrl.u32 %v3163, 7
        %v3165 = vsub.s32 0, %v3164
        %v3166 = vrot.slane %v3161, %v3165
        %v3176 = vunpack.c.l.b16 %v3153
        %v3177 = vunpack.c.l.b16 %v3154
        %v3178 = vunpack.c.l.b16 %v3155
        %v3179 = vunpack.c.l.b16 %v3156
        %v3180 = vunpack.c.l.b16 %v3157
        %v3181 = vunpack.c.l.b16 %v3158
        %v3182 = vunpack.c.l.b16 %v3159
        %v3183 = vunpack.c.l.b16 %v3160
        %v3184 = vpack.c.b16 %v3177, %v3176
        %v3185 = vpack.c.b16 %v3179, %v3178
        %v3186 = vpack.c.b16 %v3181, %v3180
        %v3187 = vpack.c.b16 %v3183, %v3182
        %v3193 = vsel %vm1395, %v3152, 0
        %3195 = vmatprep.subr.bf16.mxu0 0
        %3196 = vmatpush1.bf16.msra.mxu0 %v3184
        %3197 = vmatprep.subr.bf16.mxu0 0
        %3198 = vmatpush1.bf16.msra.mxu0 %v3185
        %3199 = vmatprep.subr.bf16.mxu0 0
        %3200 = vmatpush1.bf16.msra.mxu0 %v3186
        %3201 = vmatprep.subr.bf16.mxu0 0
        %3202 = vmatpush1.bf16.msra.mxu0 %v3187
        %3203 = vmatprep.subr.bf16.mxu0 0
        %3204 = vmatpush1.bf16.msra.mxu0 0
        %3205 = vmatprep.subr.bf16.mxu0 0
        %3206 = vmatpush1.bf16.msra.mxu0 0
        %3207 = vmatprep.subr.bf16.mxu0 0
        %3208 = vmatpush1.bf16.msra.mxu0 0
        %3209 = vmatprep.subr.bf16.mxu0 0
        %3210 = vmatpush1.bf16.msra.mxu0 0
        %3211 = vmatprep.subr.bf16.mxu0 0
        %3212 = vmatpush1.bf16.msra.mxu0 0
        %3213 = vmatprep.subr.bf16.mxu0 0
        %3214 = vmatpush1.bf16.msra.mxu0 0
        %3215 = vmatprep.subr.bf16.mxu0 0
        %3216 = vmatpush1.bf16.msra.mxu0 0
        %3217 = vmatprep.subr.bf16.mxu0 0
        %3218 = vmatpush1.bf16.msra.mxu0 0
        %3219 = vmatprep.subr.bf16.mxu0 0
        %3220 = vmatpush1.bf16.msra.mxu0 0
        %3221 = vmatprep.subr.bf16.mxu0 0
        %3222 = vmatpush1.bf16.msra.mxu0 0
        %3223 = vmatprep.subr.bf16.mxu0 0
        %3224 = vmatpush1.bf16.msra.mxu0 0
        %3225 = vmatprep.subr.bf16.mxu0 0
        %3226 = vmatpush1.bf16.msra.mxu0 0
        %3227 = vmatprep.mubr.bf16.mxu0 0
        %3228 = vmatmul.mubr.bf16.gmra.mrb[0].mxu0 %v3193
        %v3229 = vpop.f32.mrb[0].mxu0
        %v3230 = vadd.f32 %v3166, %v3229
        %v3231 = vpop.f32.mrb[0].mxu0
        %v3232 = vpop.f32.mrb[0].mxu0
        %v3233 = vpop.f32.mrb[0].mxu0
        %3234 = vdwg.mxu0
        %v3235 = vmax.f32 %v3230, 0.0
        %v3236 = vpack.c.bf16 %v3235, %v3235
        %v3237 = vld [vmem:[%s13] sm:$0xf]
        %v3238 = vld [vmem:[%s13 + $0x4] sm:$0xf]
        %v3239 = vld [vmem:[%s13 + $0x8] sm:$0xf]
        %v3240 = vld [vmem:[%s13 + $0xc] sm:$0xf]
        %v3241 = vld [vmem:[%s13 + $0x10] sm:$0xf]
        %v3242 = vld [vmem:[%s13 + $0x14] sm:$0xf]
        %v3243 = vld [vmem:[%s13 + $0x18] sm:$0xf]
        %v3244 = vld [vmem:[%s13 + $0x1c] sm:$0xf]
        %v3245 = vld [vmem:[%s14] sm:$0x1]
        %v3247 = vlaneseq
        %v3248 = vshrl.u32 %v3247, 7
        %v3249 = vsub.s32 0, %v3248
        %v3250 = vrot.slane %v3245, %v3249
        %v3260 = vunpack.c.l.b16 %v3237
        %v3261 = vunpack.c.l.b16 %v3238
        %v3262 = vunpack.c.l.b16 %v3239
        %v3263 = vunpack.c.l.b16 %v3240
        %v3264 = vunpack.c.l.b16 %v3241
        %v3265 = vunpack.c.l.b16 %v3242
        %v3266 = vunpack.c.l.b16 %v3243
        %v3267 = vunpack.c.l.b16 %v3244
        %v3268 = vpack.c.b16 %v3261, %v3260
        %v3269 = vpack.c.b16 %v3263, %v3262
        %v3270 = vpack.c.b16 %v3265, %v3264
        %v3271 = vpack.c.b16 %v3267, %v3266
        %v3277 = vsel %vm1395, %v3236, 0
        %3279 = vmatprep.subr.bf16.mxu0 0
        %3280 = vmatpush1.bf16.msra.mxu0 %v3268
        %3281 = vmatprep.subr.bf16.mxu0 0
        %3282 = vmatpush1.bf16.msra.mxu0 %v3269
        %3283 = vmatprep.subr.bf16.mxu0 0
        %3284 = vmatpush1.bf16.msra.mxu0 %v3270
        %3285 = vmatprep.subr.bf16.mxu0 0
        %3286 = vmatpush1.bf16.msra.mxu0 %v3271
        %3287 = vmatprep.subr.bf16.mxu0 0
        %3288 = vmatpush1.bf16.msra.mxu0 0
        %3289 = vmatprep.subr.bf16.mxu0 0
        %3290 = vmatpush1.bf16.msra.mxu0 0
        %3291 = vmatprep.subr.bf16.mxu0 0
        %3292 = vmatpush1.bf16.msra.mxu0 0
        %3293 = vmatprep.subr.bf16.mxu0 0
        %3294 = vmatpush1.bf16.msra.mxu0 0
        %3295 = vmatprep.subr.bf16.mxu0 0
        %3296 = vmatpush1.bf16.msra.mxu0 0
        %3297 = vmatprep.subr.bf16.mxu0 0
        %3298 = vmatpush1.bf16.msra.mxu0 0
        %3299 = vmatprep.subr.bf16.mxu0 0
        %3300 = vmatpush1.bf16.msra.mxu0 0
        %3301 = vmatprep.subr.bf16.mxu0 0
        %3302 = vmatpush1.bf16.msra.mxu0 0
        %3303 = vmatprep.subr.bf16.mxu0 0
        %3304 = vmatpush1.bf16.msra.mxu0 0
        %3305 = vmatprep.subr.bf16.mxu0 0
        %3306 = vmatpush1.bf16.msra.mxu0 0
        %3307 = vmatprep.subr.bf16.mxu0 0
        %3308 = vmatpush1.bf16.msra.mxu0 0
        %3309 = vmatprep.subr.bf16.mxu0 0
        %3310 = vmatpush1.bf16.msra.mxu0 0
        %3311 = vmatprep.mubr.bf16.mxu0 0
        %3312 = vmatmul.mubr.bf16.gmra.mrb[0].mxu0 %v3277
        %v3313 = vpop.f32.mrb[0].mxu0
        %v3314 = vadd.f32 %v3250, %v3313
        %v3315 = vpop.f32.mrb[0].mxu0
        %v3316 = vpop.f32.mrb[0].mxu0
        %v3317 = vpop.f32.mrb[0].mxu0
        %3318 = vdwg.mxu0
        %vm3319 = vcmask 60416
        %3320 = vst.msk [vmem:[%s462] sm:$0xf] %vm3319, %v3314
        %s3321 = sand.u32 %s336, 1
        %s3322 = scalar_lea.sflag [#allocation8], %s3321
        %s3323 = sand.u32 %s336, 1
        %s3324 = smul.addr %s3323, 4
        %s3325 = scalar_lea.vmem [#allocation7], %s3324
        // Predicated region
        $region111: #{cnn_forward.1} parent=75 // pred_check
          %p3326 = pneg %p346
        $region112: #{cnn_forward.1} parent=75 // pred_check_branch
          %3328 = sbr.rel (%p3326) target = $region114
        $region113: #{cnn_forward.1} parent=75 // pred_region
          %s3330 = ssub.s32 64, 64
          %3331 = vsyncadd %s3322, %s3330
          %s3332 = smul.addr %s29, 64
          %s3333 = scalar_lea.hbm %s15, %s3332
          %s3335 = sshll.u32 %s3325, 4
          %s3336 = int_to_ptr.vmem [resolvable:$true] %s3335
          %3338 = dma.vmem_to_hbm [thread:$0]  %s3336, 64, %s3333, %s3322
        $region114: #{cnn_forward.1} parent=75 // pred_fallthru
          _
      $region76: #{cnn_forward.1} parent=5 // pred_fallthru
        _
      %p3339 = scmp.le.s32.totalorder 2, %s24
      // Predicated region
      $region115: #{cnn_forward.1} parent=5 // pred_check
        %p3340 = pneg %p3339
      $region116: #{cnn_forward.1} parent=5 // pred_check_branch
        %3342 = sbr.rel (%p3340) target = $region118
      $region117: #{cnn_forward.1} parent=5 // pred_region
        %s3343 = ssub.s32 %s24, 2
        // Predicated region
        $region119: #{cnn_forward.1} parent=117 // pred_check
          %p3344 = pneg %p352
        $region120: #{cnn_forward.1} parent=117 // pred_check_branch
          %3346 = sbr.rel (%p3344) target = $region122
        $region121: #{cnn_forward.1} parent=117 // pred_region
          %s3347 = sand.u32 %s337, 1
          %s3348 = scalar_lea.sflag [#allocation8], %s3347
          %s3349 = sand.u32 %s337, 1
          %s3350 = smul.addr %s3349, 4
          %s3351 = scalar_lea.vmem [#allocation7], %s3350
          %3352 = dma.done %s3348, 64
        $region122: #{cnn_forward.1} parent=117 // pred_fallthru
          _
      $region118: #{cnn_forward.1} parent=5 // pred_fallthru
        _
    $region6: #{cnn_forward.1} parent=1 // loop_footer
      %s28 = sadd.s32 1, %s24
    $region7: #{cnn_forward.1} parent=1 // loop_footer_branch
      %23 = sbr.rel target = $region3
    $region8: #{cnn_forward.1} parent=1 // loop_exit
      _
    %3353 = vsyncpa [#allocation8], 1
    %s3354 = scalar_lea.sflag [#allocation8], 1
    %3355 = vsyncpa %s3354, 1
  %3356 = vsyncmov [#allocation6]
  %s3357 = vpop.sfrf %3356
  %p3358 = scmp.eq.s32.totalorder %s3357, 0
  %p3359 = pneg %p3358
  %3361 = shalt.err (%p3359)

</llo_original>
